<compile_context>
chip_gen: v6e
topology: v6e:2x2x1
jax: 0.10.0
libtpu: 0.0.40
codegen_flags: <defaults>
</compile_context>

<pallas_src>
import functools

import jax
import jax.numpy as jnp
from jax.experimental import pallas as pl
from jax.experimental.pallas import tpu as pltpu


# ----------------------------------------------------------------------------
# Fused GPSA kernel: qkv proj -> gated attention (all heads) -> output proj
# ----------------------------------------------------------------------------
def _gpsa_fused_kernel(x_ref, w_qkv_ref, pos_ref, oms_ref, w_proj_ref, b_proj_ref,
                       o_ref, *, num_heads, head_dim, dim):
    # x_ref:      (1, N, C)  input dtype (f32 here)
    # w_qkv_ref:  (C, 3C)    bf16, q columns pre-scaled by head_dim**-0.5
    # pos_ref:    (H, N, N)  bf16 = sigmoid(g) * softmax(pos_proj(rel))   (resident)
    # oms_ref:    (H,)       f32 in SMEM = 1 - sigmoid(g)
    # w_proj_ref: (C, C)     bf16 (resident)
    # b_proj_ref: (1, C)     f32  (resident)
    n = x_ref.shape[1]

    x = x_ref[0].astype(jnp.bfloat16)                                     # (N, C)
    qkv = jnp.dot(x, w_qkv_ref[...], preferred_element_type=jnp.float32)  # (N, 3C) f32

    acc = jnp.zeros((n, dim), jnp.float32)           # single (N, C) output accumulator
    for h in range(num_heads):                       # static unrolled loop over heads
        lo = h * head_dim
        q = qkv[:, lo:lo + head_dim].astype(jnp.bfloat16)                 # (N, hd)
        k = qkv[:, dim + lo:dim + lo + head_dim].astype(jnp.bfloat16)     # (N, hd)
        v = qkv[:, 2 * dim + lo:2 * dim + lo + head_dim].astype(jnp.bfloat16)

        # patch scores: q already carries the 1/sqrt(hd) scale; contract the last
        # dims so k is consumed untransposed (no per-head transpose).
        s = jax.lax.dot_general(q, k, dimension_numbers=(((1,), (1,)), ((), ())),
                                preferred_element_type=jnp.float32)       # (N, N)
        s = s - jnp.max(s, axis=-1, keepdims=True)
        e = jnp.exp(s)
        # (1 - sig) folded into the (N,1) reciprocal (EUP slot). Rows of the mixed
        # attention sum to exactly (1 - sig) + sig = 1, so no renormalization needed.
        r = oms_ref[h] * pl.reciprocal(jnp.sum(e, axis=-1, keepdims=True),
                                       approx=True)
        attn = (e * r + pos_ref[h]).astype(jnp.bfloat16)                  # (N, N)

        # TODO(synk): attn_drop / proj_drop are identity (p=0.0 / eval) and omitted.
        head_out = jnp.dot(attn, v, preferred_element_type=jnp.float32)   # (N, hd)
        # concat(head_outs) @ W_proj == sum_h head_out_h @ W_proj[h*hd:(h+1)*hd, :]
        acc = acc + jnp.dot(head_out.astype(jnp.bfloat16),
                            w_proj_ref[lo:lo + head_dim, :],
                            preferred_element_type=jnp.float32)

    o_ref[0] = (acc + b_proj_ref[...]).astype(o_ref.dtype)


def _vmem_limit_bytes(resident_bytes, per_step_bytes):
    """Size the VMEM limit from the actual resident set, capped per chip generation."""
    try:
        phys = int(pltpu.get_tpu_info().vmem_capacity_bytes)
    except Exception:
        phys = 64 * 1024 * 1024  # assume the smallest generation (v7x per-TC VMEM)
    need = resident_bytes + 2 * per_step_bytes + (8 << 20)  # dbl-buffered IO + scratch
    cap = (phys * 7) // 8                                   # headroom for internal scratch
    return int(max(min(need, cap), 16 << 20))


def pallas_gpsa(x, w_qkv, pos_gated, oms, w_proj, b_proj, *, num_heads,
                single_buffer_consts=True):
    B, N, C = x.shape
    H = num_heads
    hd = C // num_heads

    def const_spec(shape):
        # Grid-invariant block: constant index_map; single-buffer to save VMEM.
        idx = lambda b: (0,) * len(shape)
        if single_buffer_consts:
            return pl.BlockSpec(shape, idx, pipeline_mode=pl.Buffered(1))
        return pl.BlockSpec(shape, idx)

    resident_bytes = (w_qkv.size * w_qkv.dtype.itemsize
                      + pos_gated.size * pos_gated.dtype.itemsize
                      + w_proj.size * w_proj.dtype.itemsize
                      + b_proj.size * b_proj.dtype.itemsize)
    if not single_buffer_consts:
        resident_bytes *= 2
    per_step_bytes = 2 * N * C * x.dtype.itemsize  # x block + out block per grid step
    vmem_limit = _vmem_limit_bytes(resident_bytes, per_step_bytes)

    kernel = functools.partial(_gpsa_fused_kernel,
                               num_heads=H, head_dim=hd, dim=C)
    return pl.pallas_call(
        kernel,
        out_shape=jax.ShapeDtypeStruct((B, N, C), x.dtype),
        grid=(B,),
        in_specs=[
            pl.BlockSpec((1, N, C), lambda b: (b, 0, 0)),        # x (per batch)
            const_spec((C, 3 * C)),                              # W_qkv  (bf16, resident)
            const_spec((H, N, N)),                               # gated pos (bf16, resident)
            pl.BlockSpec(memory_space=pltpu.MemorySpace.SMEM),   # (1 - sig) per head
            const_spec((C, C)),                                  # W_proj (bf16, resident)
            const_spec((1, C)),                                  # b_proj (resident)
        ],
        out_specs=pl.BlockSpec((1, N, C), lambda b: (b, 0, 0)),  # lane-dense slab
        compiler_params=pltpu.CompilerParams(
            dimension_semantics=("parallel",),
            vmem_limit_bytes=vmem_limit,
        ),
    )(x, w_qkv, pos_gated, oms, w_proj, b_proj)


# ----------------------------------------------------------------------------
# GPSA forward (glue in plain JAX, hot path in the fused Pallas kernel)
# ----------------------------------------------------------------------------
def get_rel_indices(num_patches):
    img_size = int(num_patches ** 0.5)
    ind = jnp.arange(img_size)[None, :] - jnp.arange(img_size)[:, None]  # (s, s)
    indx = jnp.tile(ind, (img_size, img_size))                           # (N, N)
    indy = jnp.repeat(jnp.repeat(ind, img_size, axis=0), img_size, axis=1)
    indd = indx ** 2 + indy ** 2
    rel = jnp.stack([indx, indy, indd], axis=-1).astype(jnp.float32)     # (N, N, 3)
    return rel[None]                                                     # (1, N, N, 3)


def gpsa_forward(x, params, num_heads):
    B, N, C = x.shape
    hd = C // num_heads
    scale = hd ** (-0.5)

    # Batch-invariant positional branch precomputed once (hoisted out of kernel):
    #   pos_gated = sigmoid(g) * softmax(pos_proj(rel)),  oms = 1 - sigmoid(g)
    rel = get_rel_indices(N)                                        # (1, N, N, 3)
    pos_logits = (rel @ params["w_pos"].T + params["b_pos"])[0]     # (N, N, H)
    pos_logits = pos_logits.transpose(2, 0, 1)                      # (H, N, N)
    sig = jax.nn.sigmoid(params["gating"]).astype(jnp.float32)      # (H,)
    pos_gated = (sig[:, None, None]
                 * jax.nn.softmax(pos_logits, axis=-1)).astype(jnp.bfloat16)
    oms = (1.0 - sig).astype(jnp.float32)

    # Fused QKV weight: attention scale folded into the q columns, shipped as bf16
    # (native MXU dtype; halves resident VMEM / DMA bytes).
    w_qk = params["w_qk"]
    w_qkv = jnp.concatenate([w_qk[:, :C] * scale, w_qk[:, C:], params["w_v"]],
                            axis=1).astype(jnp.bfloat16)            # (C, 3C)
    w_proj = params["w_proj"].astype(jnp.bfloat16)
    b_proj = params["b_proj"].astype(jnp.float32)

    try:
        out = pallas_gpsa(x, w_qkv, pos_gated, oms, w_proj, b_proj,
                          num_heads=num_heads, single_buffer_consts=True)
        return jax.block_until_ready(out)
    except Exception:
        # Fallback if pl.Buffered(1) single-buffering is rejected by this jax build.
        out = pallas_gpsa(x, w_qkv, pos_gated, oms, w_proj, b_proj,
                          num_heads=num_heads, single_buffer_consts=False)
        return jax.block_until_ready(out)


# ----------------------------------------------------------------------------
# Pure-JAX f32 reference for verification
# ----------------------------------------------------------------------------
def gpsa_reference(x, params, num_heads):
    B, N, C = x.shape
    hd = C // num_heads
    scale = hd ** (-0.5)

    qk = x @ params["w_qk"]
    q = qk[..., :C].reshape(B, N, num_heads, hd).transpose(0, 2, 1, 3)
    k = qk[..., C:].reshape(B, N, num_heads, hd).transpose(0, 2, 1, 3)
    v = (x @ params["w_v"]).reshape(B, N, num_heads, hd).transpose(0, 2, 1, 3)

    rel = get_rel_indices(N)
    pos = (rel @ params["w_pos"].T + params["b_pos"]).transpose(0, 3, 1, 2)  # (1,H,N,N)
    pos = jnp.broadcast_to(pos, (B, num_heads, N, N))

    patch = jax.nn.softmax(q @ jnp.swapaxes(k, -2, -1) * scale, axis=-1)
    possm = jax.nn.softmax(pos, axis=-1)
    sig = jax.nn.sigmoid(params["gating"]).reshape(1, num_heads, 1, 1)
    attn = (1.0 - sig) * patch + sig * possm
    attn = attn / jnp.sum(attn, axis=-1, keepdims=True)

    out = (attn @ v).transpose(0, 2, 1, 3).reshape(B, N, C)
    return out @ params["w_proj"] + params["b_proj"]


# ----------------------------------------------------------------------------
# Main
# ----------------------------------------------------------------------------
if __name__ == "__main__":
    # Demo shapes (N = 16 -> 4x4 patch grid). NOTE: last dims 16/32 are lane-sparse;
    # do not benchmark at this shape -- use real ConViT shapes for perf conclusions.
    B, N, C, H = 2, 16, 32, 8

    key = jax.random.PRNGKey(0)
    kx, k1, k2, k3, k4, k5, k6 = jax.random.split(key, 7)

    x = jax.random.normal(kx, (B, N, C), jnp.float32)

    # Deterministic synthetic parameters (weights stored pre-transposed: (Cin, Cout)).
    params = {
        "w_qk":   0.05 * jax.random.normal(k1, (C, 2 * C), jnp.float32),
        "w_v":    0.05 * jax.random.normal(k2, (C, C), jnp.float32),
        "w_proj": 0.05 * jax.random.normal(k3, (C, C), jnp.float32),
        "b_proj": 0.05 * jax.random.normal(k4, (1, C), jnp.float32),
        "w_pos":  0.05 * jax.random.normal(k5, (H, 3), jnp.float32),
        "b_pos":  0.05 * jax.random.normal(k6, (H,), jnp.float32),
        "gating": jnp.ones((H,), jnp.float32),
    }

    out = gpsa_forward(x, params, num_heads=H)
    ref = jax.block_until_ready(gpsa_reference(x, params, num_heads=H))

    assert out.shape == (B, N, C)
    # Kernel uses bf16 matmul operands with f32 accumulation; compare against the
    # pure-f32 reference with a bf16-level tolerance.
    err = float(jnp.max(jnp.abs(out - ref)))
    assert err < 2e-2, f"mismatch: max abs err = {err}"
    print("KERNEL_OK")
</pallas_src>

<mosaic_0001>
module attributes {stable_mosaic.version = 11 : i64} {
  func.func @_gpsa_fused_kernel(%arg0: i32, %arg1: memref<1x16x32xf32, #tpu.memory_space<vmem>>, %arg2: memref<32x96xbf16, #tpu.memory_space<vmem>>, %arg3: memref<8x16x16xbf16, #tpu.memory_space<vmem>>, %arg4: memref<8xf32, #tpu.memory_space<smem>>, %arg5: memref<32x32xbf16, #tpu.memory_space<vmem>>, %arg6: memref<1x32xf32, #tpu.memory_space<vmem>>, %arg7: memref<1x16x32xf32, #tpu.memory_space<vmem>>) attributes {dimension_semantics = [#tpu.dimension_semantics<parallel>], iteration_bounds = array<i64: 2>, scalar_prefetch = 0 : i64, scratch_operands = 0 : i64, tpu.core_type = #tpu.core_type<tc>, window_params = [{transform_indices = @transform_0, window_bounds = array<i64: 1, 16, 32>}, {pipeline_mode = #tpu.pipeline_mode<synchronous>, transform_indices = @transform_1, window_bounds = array<i64: 32, 96>}, {pipeline_mode = #tpu.pipeline_mode<synchronous>, transform_indices = @transform_2, window_bounds = array<i64: 8, 16, 16>}, {transform_indices = @transform_3, window_bounds = array<i64: 8>}, {pipeline_mode = #tpu.pipeline_mode<synchronous>, transform_indices = @transform_4, window_bounds = array<i64: 32, 32>}, {pipeline_mode = #tpu.pipeline_mode<synchronous>, transform_indices = @transform_5, window_bounds = array<i64: 1, 32>}, {transform_indices = @transform_6, window_bounds = array<i64: 1, 16, 32>}]} {
    %c0 = arith.constant 0 : index
    %c0_0 = arith.constant 0 : index
    %c0_1 = arith.constant 0 : index
    %0 = vector.load %arg1[%c0, %c0_0, %c0_1] : memref<1x16x32xf32, #tpu.memory_space<vmem>>, vector<1x16x32xf32>
    %1 = vector.shape_cast %0 : vector<1x16x32xf32> to vector<16x32xf32>
    %2 = arith.truncf %1 : vector<16x32xf32> to vector<16x32xbf16>
    %c0_2 = arith.constant 0 : index
    %c0_3 = arith.constant 0 : index
    %3 = vector.load %arg2[%c0_2, %c0_3] : memref<32x96xbf16, #tpu.memory_space<vmem>>, vector<32x96xbf16>
    %cst = arith.constant dense<0.000000e+00> : vector<16x96xf32>
    %4 = tpu.matmul %2, %3, %cst {dimension_numbers = #tpu.dot_dimension_numbers<[1], [0], [0], [1], [0, 0, 1, 1], [], []>} : vector<16x32xbf16>, vector<32x96xbf16>, vector<16x96xf32> -> vector<16x96xf32>
    %cst_4 = arith.constant 0.000000e+00 : f32
    %5 = vector.broadcast %cst_4 : f32 to vector<16x32xf32>
    %6 = vector.extract_strided_slice %4 {offsets = [0, 0], sizes = [16, 4], strides = [1, 1]} : vector<16x96xf32> to vector<16x4xf32>
    %7 = arith.truncf %6 : vector<16x4xf32> to vector<16x4xbf16>
    %8 = vector.extract_strided_slice %4 {offsets = [0, 32], sizes = [16, 4], strides = [1, 1]} : vector<16x96xf32> to vector<16x4xf32>
    %9 = arith.truncf %8 : vector<16x4xf32> to vector<16x4xbf16>
    %10 = vector.extract_strided_slice %4 {offsets = [0, 64], sizes = [16, 4], strides = [1, 1]} : vector<16x96xf32> to vector<16x4xf32>
    %11 = arith.truncf %10 : vector<16x4xf32> to vector<16x4xbf16>
    %cst_5 = arith.constant dense<0.000000e+00> : vector<16x16xf32>
    %12 = tpu.matmul %7, %9, %cst_5 {dimension_numbers = #tpu.dot_dimension_numbers<[1], [1], [0], [0], [0, 0, 1, 0], [], []>} : vector<16x4xbf16>, vector<16x4xbf16>, vector<16x16xf32> -> vector<16x16xf32>
    %cst_6 = arith.constant dense<0xFF800000> : vector<16xf32>
    %13 = vector.multi_reduction <maximumf>, %12, %cst_6 [1] : vector<16x16xf32> to vector<16xf32>
    %14 = vector.shape_cast %13 : vector<16xf32> to vector<16x1xf32>
    %15 = vector.broadcast %14 : vector<16x1xf32> to vector<16x16xf32>
    %16 = arith.subf %12, %15 : vector<16x16xf32>
    %17 = math.exp %16 : vector<16x16xf32>
    %c0_7 = arith.constant 0 : index
    %18 = memref.load %arg4[%c0_7] : memref<8xf32, #tpu.memory_space<smem>>
    %cst_8 = arith.constant dense<0.000000e+00> : vector<16xf32>
    %19 = vector.multi_reduction <add>, %17, %cst_8 [1] : vector<16x16xf32> to vector<16xf32>
    %20 = vector.shape_cast %19 : vector<16xf32> to vector<16x1xf32>
    %21 = tpu.reciprocal %20 {approx = true} : vector<16x1xf32> -> vector<16x1xf32>
    %22 = vector.broadcast %18 : f32 to vector<16x1xf32>
    %23 = arith.mulf %22, %21 : vector<16x1xf32>
    %24 = vector.broadcast %23 : vector<16x1xf32> to vector<16x16xf32>
    %25 = arith.mulf %17, %24 : vector<16x16xf32>
    %c0_9 = arith.constant 0 : index
    %c0_10 = arith.constant 0 : index
    %c0_11 = arith.constant 0 : index
    %26 = vector.load %arg3[%c0_9, %c0_10, %c0_11] : memref<8x16x16xbf16, #tpu.memory_space<vmem>>, vector<1x16x16xbf16>
    %27 = vector.shape_cast %26 : vector<1x16x16xbf16> to vector<16x16xbf16>
    %28 = arith.extf %27 : vector<16x16xbf16> to vector<16x16xf32>
    %29 = arith.addf %25, %28 : vector<16x16xf32>
    %30 = arith.truncf %29 : vector<16x16xf32> to vector<16x16xbf16>
    %cst_12 = arith.constant dense<0.000000e+00> : vector<16x4xf32>
    %31 = tpu.matmul %30, %11, %cst_12 {dimension_numbers = #tpu.dot_dimension_numbers<[1], [0], [0], [1], [0, 0, 1, 1], [], []>} : vector<16x16xbf16>, vector<16x4xbf16>, vector<16x4xf32> -> vector<16x4xf32>
    %32 = arith.truncf %31 : vector<16x4xf32> to vector<16x4xbf16>
    %c0_13 = arith.constant 0 : index
    %c0_14 = arith.constant 0 : index
    %33 = vector.load %arg5[%c0_13, %c0_14] : memref<32x32xbf16, #tpu.memory_space<vmem>>, vector<4x32xbf16>
    %cst_15 = arith.constant dense<0.000000e+00> : vector<16x32xf32>
    %34 = tpu.matmul %32, %33, %cst_15 {dimension_numbers = #tpu.dot_dimension_numbers<[1], [0], [0], [1], [0, 0, 1, 1], [], []>} : vector<16x4xbf16>, vector<4x32xbf16>, vector<16x32xf32> -> vector<16x32xf32>
    %35 = arith.addf %5, %34 : vector<16x32xf32>
    %36 = vector.extract_strided_slice %4 {offsets = [0, 4], sizes = [16, 4], strides = [1, 1]} : vector<16x96xf32> to vector<16x4xf32>
    %37 = arith.truncf %36 : vector<16x4xf32> to vector<16x4xbf16>
    %38 = vector.extract_strided_slice %4 {offsets = [0, 36], sizes = [16, 4], strides = [1, 1]} : vector<16x96xf32> to vector<16x4xf32>
    %39 = arith.truncf %38 : vector<16x4xf32> to vector<16x4xbf16>
    %40 = vector.extract_strided_slice %4 {offsets = [0, 68], sizes = [16, 4], strides = [1, 1]} : vector<16x96xf32> to vector<16x4xf32>
    %41 = arith.truncf %40 : vector<16x4xf32> to vector<16x4xbf16>
    %cst_16 = arith.constant dense<0.000000e+00> : vector<16x16xf32>
    %42 = tpu.matmul %37, %39, %cst_16 {dimension_numbers = #tpu.dot_dimension_numbers<[1], [1], [0], [0], [0, 0, 1, 0], [], []>} : vector<16x4xbf16>, vector<16x4xbf16>, vector<16x16xf32> -> vector<16x16xf32>
    %cst_17 = arith.constant dense<0xFF800000> : vector<16xf32>
    %43 = vector.multi_reduction <maximumf>, %42, %cst_17 [1] : vector<16x16xf32> to vector<16xf32>
    %44 = vector.shape_cast %43 : vector<16xf32> to vector<16x1xf32>
    %45 = vector.broadcast %44 : vector<16x1xf32> to vector<16x16xf32>
    %46 = arith.subf %42, %45 : vector<16x16xf32>
    %47 = math.exp %46 : vector<16x16xf32>
    %c1 = arith.constant 1 : index
    %48 = memref.load %arg4[%c1] : memref<8xf32, #tpu.memory_space<smem>>
    %cst_18 = arith.constant dense<0.000000e+00> : vector<16xf32>
    %49 = vector.multi_reduction <add>, %47, %cst_18 [1] : vector<16x16xf32> to vector<16xf32>
    %50 = vector.shape_cast %49 : vector<16xf32> to vector<16x1xf32>
    %51 = tpu.reciprocal %50 {approx = true} : vector<16x1xf32> -> vector<16x1xf32>
    %52 = vector.broadcast %48 : f32 to vector<16x1xf32>
    %53 = arith.mulf %52, %51 : vector<16x1xf32>
    %54 = vector.broadcast %53 : vector<16x1xf32> to vector<16x16xf32>
    %55 = arith.mulf %47, %54 : vector<16x16xf32>
    %c1_19 = arith.constant 1 : index
    %c0_20 = arith.constant 0 : index
    %c0_21 = arith.constant 0 : index
    %56 = vector.load %arg3[%c1_19, %c0_20, %c0_21] : memref<8x16x16xbf16, #tpu.memory_space<vmem>>, vector<1x16x16xbf16>
    %57 = vector.shape_cast %56 : vector<1x16x16xbf16> to vector<16x16xbf16>
    %58 = arith.extf %57 : vector<16x16xbf16> to vector<16x16xf32>
    %59 = arith.addf %55, %58 : vector<16x16xf32>
    %60 = arith.truncf %59 : vector<16x16xf32> to vector<16x16xbf16>
    %cst_22 = arith.constant dense<0.000000e+00> : vector<16x4xf32>
    %61 = tpu.matmul %60, %41, %cst_22 {dimension_numbers = #tpu.dot_dimension_numbers<[1], [0], [0], [1], [0, 0, 1, 1], [], []>} : vector<16x16xbf16>, vector<16x4xbf16>, vector<16x4xf32> -> vector<16x4xf32>
    %62 = arith.truncf %61 : vector<16x4xf32> to vector<16x4xbf16>
    %c4 = arith.constant 4 : index
    %c0_23 = arith.constant 0 : index
    %63 = vector.load %arg5[%c4, %c0_23] : memref<32x32xbf16, #tpu.memory_space<vmem>>, vector<4x32xbf16>
    %cst_24 = arith.constant dense<0.000000e+00> : vector<16x32xf32>
    %64 = tpu.matmul %62, %63, %cst_24 {dimension_numbers = #tpu.dot_dimension_numbers<[1], [0], [0], [1], [0, 0, 1, 1], [], []>} : vector<16x4xbf16>, vector<4x32xbf16>, vector<16x32xf32> -> vector<16x32xf32>
    %65 = arith.addf %35, %64 : vector<16x32xf32>
    %66 = vector.extract_strided_slice %4 {offsets = [0, 8], sizes = [16, 4], strides = [1, 1]} : vector<16x96xf32> to vector<16x4xf32>
    %67 = arith.truncf %66 : vector<16x4xf32> to vector<16x4xbf16>
    %68 = vector.extract_strided_slice %4 {offsets = [0, 40], sizes = [16, 4], strides = [1, 1]} : vector<16x96xf32> to vector<16x4xf32>
    %69 = arith.truncf %68 : vector<16x4xf32> to vector<16x4xbf16>
    %70 = vector.extract_strided_slice %4 {offsets = [0, 72], sizes = [16, 4], strides = [1, 1]} : vector<16x96xf32> to vector<16x4xf32>
    %71 = arith.truncf %70 : vector<16x4xf32> to vector<16x4xbf16>
    %cst_25 = arith.constant dense<0.000000e+00> : vector<16x16xf32>
    %72 = tpu.matmul %67, %69, %cst_25 {dimension_numbers = #tpu.dot_dimension_numbers<[1], [1], [0], [0], [0, 0, 1, 0], [], []>} : vector<16x4xbf16>, vector<16x4xbf16>, vector<16x16xf32> -> vector<16x16xf32>
    %cst_26 = arith.constant dense<0xFF800000> : vector<16xf32>
    %73 = vector.multi_reduction <maximumf>, %72, %cst_26 [1] : vector<16x16xf32> to vector<16xf32>
    %74 = vector.shape_cast %73 : vector<16xf32> to vector<16x1xf32>
    %75 = vector.broadcast %74 : vector<16x1xf32> to vector<16x16xf32>
    %76 = arith.subf %72, %75 : vector<16x16xf32>
    %77 = math.exp %76 : vector<16x16xf32>
    %c2 = arith.constant 2 : index
    %78 = memref.load %arg4[%c2] : memref<8xf32, #tpu.memory_space<smem>>
    %cst_27 = arith.constant dense<0.000000e+00> : vector<16xf32>
    %79 = vector.multi_reduction <add>, %77, %cst_27 [1] : vector<16x16xf32> to vector<16xf32>
    %80 = vector.shape_cast %79 : vector<16xf32> to vector<16x1xf32>
    %81 = tpu.reciprocal %80 {approx = true} : vector<16x1xf32> -> vector<16x1xf32>
    %82 = vector.broadcast %78 : f32 to vector<16x1xf32>
    %83 = arith.mulf %82, %81 : vector<16x1xf32>
    %84 = vector.broadcast %83 : vector<16x1xf32> to vector<16x16xf32>
    %85 = arith.mulf %77, %84 : vector<16x16xf32>
    %c2_28 = arith.constant 2 : index
    %c0_29 = arith.constant 0 : index
    %c0_30 = arith.constant 0 : index
    %86 = vector.load %arg3[%c2_28, %c0_29, %c0_30] : memref<8x16x16xbf16, #tpu.memory_space<vmem>>, vector<1x16x16xbf16>
    %87 = vector.shape_cast %86 : vector<1x16x16xbf16> to vector<16x16xbf16>
    %88 = arith.extf %87 : vector<16x16xbf16> to vector<16x16xf32>
    %89 = arith.addf %85, %88 : vector<16x16xf32>
    %90 = arith.truncf %89 : vector<16x16xf32> to vector<16x16xbf16>
    %cst_31 = arith.constant dense<0.000000e+00> : vector<16x4xf32>
    %91 = tpu.matmul %90, %71, %cst_31 {dimension_numbers = #tpu.dot_dimension_numbers<[1], [0], [0], [1], [0, 0, 1, 1], [], []>} : vector<16x16xbf16>, vector<16x4xbf16>, vector<16x4xf32> -> vector<16x4xf32>
    %92 = arith.truncf %91 : vector<16x4xf32> to vector<16x4xbf16>
    %c8 = arith.constant 8 : index
    %c0_32 = arith.constant 0 : index
    %93 = vector.load %arg5[%c8, %c0_32] : memref<32x32xbf16, #tpu.memory_space<vmem>>, vector<4x32xbf16>
    %cst_33 = arith.constant dense<0.000000e+00> : vector<16x32xf32>
    %94 = tpu.matmul %92, %93, %cst_33 {dimension_numbers = #tpu.dot_dimension_numbers<[1], [0], [0], [1], [0, 0, 1, 1], [], []>} : vector<16x4xbf16>, vector<4x32xbf16>, vector<16x32xf32> -> vector<16x32xf32>
    %95 = arith.addf %65, %94 : vector<16x32xf32>
    %96 = vector.extract_strided_slice %4 {offsets = [0, 12], sizes = [16, 4], strides = [1, 1]} : vector<16x96xf32> to vector<16x4xf32>
    %97 = arith.truncf %96 : vector<16x4xf32> to vector<16x4xbf16>
    %98 = vector.extract_strided_slice %4 {offsets = [0, 44], sizes = [16, 4], strides = [1, 1]} : vector<16x96xf32> to vector<16x4xf32>
    %99 = arith.truncf %98 : vector<16x4xf32> to vector<16x4xbf16>
    %100 = vector.extract_strided_slice %4 {offsets = [0, 76], sizes = [16, 4], strides = [1, 1]} : vector<16x96xf32> to vector<16x4xf32>
    %101 = arith.truncf %100 : vector<16x4xf32> to vector<16x4xbf16>
    %cst_34 = arith.constant dense<0.000000e+00> : vector<16x16xf32>
    %102 = tpu.matmul %97, %99, %cst_34 {dimension_numbers = #tpu.dot_dimension_numbers<[1], [1], [0], [0], [0, 0, 1, 0], [], []>} : vector<16x4xbf16>, vector<16x4xbf16>, vector<16x16xf32> -> vector<16x16xf32>
    %cst_35 = arith.constant dense<0xFF800000> : vector<16xf32>
    %103 = vector.multi_reduction <maximumf>, %102, %cst_35 [1] : vector<16x16xf32> to vector<16xf32>
    %104 = vector.shape_cast %103 : vector<16xf32> to vector<16x1xf32>
    %105 = vector.broadcast %104 : vector<16x1xf32> to vector<16x16xf32>
    %106 = arith.subf %102, %105 : vector<16x16xf32>
    %107 = math.exp %106 : vector<16x16xf32>
    %c3 = arith.constant 3 : index
    %108 = memref.load %arg4[%c3] : memref<8xf32, #tpu.memory_space<smem>>
    %cst_36 = arith.constant dense<0.000000e+00> : vector<16xf32>
    %109 = vector.multi_reduction <add>, %107, %cst_36 [1] : vector<16x16xf32> to vector<16xf32>
    %110 = vector.shape_cast %109 : vector<16xf32> to vector<16x1xf32>
    %111 = tpu.reciprocal %110 {approx = true} : vector<16x1xf32> -> vector<16x1xf32>
    %112 = vector.broadcast %108 : f32 to vector<16x1xf32>
    %113 = arith.mulf %112, %111 : vector<16x1xf32>
    %114 = vector.broadcast %113 : vector<16x1xf32> to vector<16x16xf32>
    %115 = arith.mulf %107, %114 : vector<16x16xf32>
    %c3_37 = arith.constant 3 : index
    %c0_38 = arith.constant 0 : index
    %c0_39 = arith.constant 0 : index
    %116 = vector.load %arg3[%c3_37, %c0_38, %c0_39] : memref<8x16x16xbf16, #tpu.memory_space<vmem>>, vector<1x16x16xbf16>
    %117 = vector.shape_cast %116 : vector<1x16x16xbf16> to vector<16x16xbf16>
    %118 = arith.extf %117 : vector<16x16xbf16> to vector<16x16xf32>
    %119 = arith.addf %115, %118 : vector<16x16xf32>
    %120 = arith.truncf %119 : vector<16x16xf32> to vector<16x16xbf16>
    %cst_40 = arith.constant dense<0.000000e+00> : vector<16x4xf32>
    %121 = tpu.matmul %120, %101, %cst_40 {dimension_numbers = #tpu.dot_dimension_numbers<[1], [0], [0], [1], [0, 0, 1, 1], [], []>} : vector<16x16xbf16>, vector<16x4xbf16>, vector<16x4xf32> -> vector<16x4xf32>
    %122 = arith.truncf %121 : vector<16x4xf32> to vector<16x4xbf16>
    %c12 = arith.constant 12 : index
    %c0_41 = arith.constant 0 : index
    %123 = vector.load %arg5[%c12, %c0_41] : memref<32x32xbf16, #tpu.memory_space<vmem>>, vector<4x32xbf16>
    %cst_42 = arith.constant dense<0.000000e+00> : vector<16x32xf32>
    %124 = tpu.matmul %122, %123, %cst_42 {dimension_numbers = #tpu.dot_dimension_numbers<[1], [0], [0], [1], [0, 0, 1, 1], [], []>} : vector<16x4xbf16>, vector<4x32xbf16>, vector<16x32xf32> -> vector<16x32xf32>
    %125 = arith.addf %95, %124 : vector<16x32xf32>
    %126 = vector.extract_strided_slice %4 {offsets = [0, 16], sizes = [16, 4], strides = [1, 1]} : vector<16x96xf32> to vector<16x4xf32>
    %127 = arith.truncf %126 : vector<16x4xf32> to vector<16x4xbf16>
    %128 = vector.extract_strided_slice %4 {offsets = [0, 48], sizes = [16, 4], strides = [1, 1]} : vector<16x96xf32> to vector<16x4xf32>
    %129 = arith.truncf %128 : vector<16x4xf32> to vector<16x4xbf16>
    %130 = vector.extract_strided_slice %4 {offsets = [0, 80], sizes = [16, 4], strides = [1, 1]} : vector<16x96xf32> to vector<16x4xf32>
    %131 = arith.truncf %130 : vector<16x4xf32> to vector<16x4xbf16>
    %cst_43 = arith.constant dense<0.000000e+00> : vector<16x16xf32>
    %132 = tpu.matmul %127, %129, %cst_43 {dimension_numbers = #tpu.dot_dimension_numbers<[1], [1], [0], [0], [0, 0, 1, 0], [], []>} : vector<16x4xbf16>, vector<16x4xbf16>, vector<16x16xf32> -> vector<16x16xf32>
    %cst_44 = arith.constant dense<0xFF800000> : vector<16xf32>
    %133 = vector.multi_reduction <maximumf>, %132, %cst_44 [1] : vector<16x16xf32> to vector<16xf32>
    %134 = vector.shape_cast %133 : vector<16xf32> to vector<16x1xf32>
    %135 = vector.broadcast %134 : vector<16x1xf32> to vector<16x16xf32>
    %136 = arith.subf %132, %135 : vector<16x16xf32>
    %137 = math.exp %136 : vector<16x16xf32>
    %c4_45 = arith.constant 4 : index
    %138 = memref.load %arg4[%c4_45] : memref<8xf32, #tpu.memory_space<smem>>
    %cst_46 = arith.constant dense<0.000000e+00> : vector<16xf32>
    %139 = vector.multi_reduction <add>, %137, %cst_46 [1] : vector<16x16xf32> to vector<16xf32>
    %140 = vector.shape_cast %139 : vector<16xf32> to vector<16x1xf32>
    %141 = tpu.reciprocal %140 {approx = true} : vector<16x1xf32> -> vector<16x1xf32>
    %142 = vector.broadcast %138 : f32 to vector<16x1xf32>
    %143 = arith.mulf %142, %141 : vector<16x1xf32>
    %144 = vector.broadcast %143 : vector<16x1xf32> to vector<16x16xf32>
    %145 = arith.mulf %137, %144 : vector<16x16xf32>
    %c4_47 = arith.constant 4 : index
    %c0_48 = arith.constant 0 : index
    %c0_49 = arith.constant 0 : index
    %146 = vector.load %arg3[%c4_47, %c0_48, %c0_49] : memref<8x16x16xbf16, #tpu.memory_space<vmem>>, vector<1x16x16xbf16>
    %147 = vector.shape_cast %146 : vector<1x16x16xbf16> to vector<16x16xbf16>
    %148 = arith.extf %147 : vector<16x16xbf16> to vector<16x16xf32>
    %149 = arith.addf %145, %148 : vector<16x16xf32>
    %150 = arith.truncf %149 : vector<16x16xf32> to vector<16x16xbf16>
    %cst_50 = arith.constant dense<0.000000e+00> : vector<16x4xf32>
    %151 = tpu.matmul %150, %131, %cst_50 {dimension_numbers = #tpu.dot_dimension_numbers<[1], [0], [0], [1], [0, 0, 1, 1], [], []>} : vector<16x16xbf16>, vector<16x4xbf16>, vector<16x4xf32> -> vector<16x4xf32>
    %152 = arith.truncf %151 : vector<16x4xf32> to vector<16x4xbf16>
    %c16 = arith.constant 16 : index
    %c0_51 = arith.constant 0 : index
    %153 = vector.load %arg5[%c16, %c0_51] : memref<32x32xbf16, #tpu.memory_space<vmem>>, vector<4x32xbf16>
    %cst_52 = arith.constant dense<0.000000e+00> : vector<16x32xf32>
    %154 = tpu.matmul %152, %153, %cst_52 {dimension_numbers = #tpu.dot_dimension_numbers<[1], [0], [0], [1], [0, 0, 1, 1], [], []>} : vector<16x4xbf16>, vector<4x32xbf16>, vector<16x32xf32> -> vector<16x32xf32>
    %155 = arith.addf %125, %154 : vector<16x32xf32>
    %156 = vector.extract_strided_slice %4 {offsets = [0, 20], sizes = [16, 4], strides = [1, 1]} : vector<16x96xf32> to vector<16x4xf32>
    %157 = arith.truncf %156 : vector<16x4xf32> to vector<16x4xbf16>
    %158 = vector.extract_strided_slice %4 {offsets = [0, 52], sizes = [16, 4], strides = [1, 1]} : vector<16x96xf32> to vector<16x4xf32>
    %159 = arith.truncf %158 : vector<16x4xf32> to vector<16x4xbf16>
    %160 = vector.extract_strided_slice %4 {offsets = [0, 84], sizes = [16, 4], strides = [1, 1]} : vector<16x96xf32> to vector<16x4xf32>
    %161 = arith.truncf %160 : vector<16x4xf32> to vector<16x4xbf16>
    %cst_53 = arith.constant dense<0.000000e+00> : vector<16x16xf32>
    %162 = tpu.matmul %157, %159, %cst_53 {dimension_numbers = #tpu.dot_dimension_numbers<[1], [1], [0], [0], [0, 0, 1, 0], [], []>} : vector<16x4xbf16>, vector<16x4xbf16>, vector<16x16xf32> -> vector<16x16xf32>
    %cst_54 = arith.constant dense<0xFF800000> : vector<16xf32>
    %163 = vector.multi_reduction <maximumf>, %162, %cst_54 [1] : vector<16x16xf32> to vector<16xf32>
    %164 = vector.shape_cast %163 : vector<16xf32> to vector<16x1xf32>
    %165 = vector.broadcast %164 : vector<16x1xf32> to vector<16x16xf32>
    %166 = arith.subf %162, %165 : vector<16x16xf32>
    %167 = math.exp %166 : vector<16x16xf32>
    %c5 = arith.constant 5 : index
    %168 = memref.load %arg4[%c5] : memref<8xf32, #tpu.memory_space<smem>>
    %cst_55 = arith.constant dense<0.000000e+00> : vector<16xf32>
    %169 = vector.multi_reduction <add>, %167, %cst_55 [1] : vector<16x16xf32> to vector<16xf32>
    %170 = vector.shape_cast %169 : vector<16xf32> to vector<16x1xf32>
    %171 = tpu.reciprocal %170 {approx = true} : vector<16x1xf32> -> vector<16x1xf32>
    %172 = vector.broadcast %168 : f32 to vector<16x1xf32>
    %173 = arith.mulf %172, %171 : vector<16x1xf32>
    %174 = vector.broadcast %173 : vector<16x1xf32> to vector<16x16xf32>
    %175 = arith.mulf %167, %174 : vector<16x16xf32>
    %c5_56 = arith.constant 5 : index
    %c0_57 = arith.constant 0 : index
    %c0_58 = arith.constant 0 : index
    %176 = vector.load %arg3[%c5_56, %c0_57, %c0_58] : memref<8x16x16xbf16, #tpu.memory_space<vmem>>, vector<1x16x16xbf16>
    %177 = vector.shape_cast %176 : vector<1x16x16xbf16> to vector<16x16xbf16>
    %178 = arith.extf %177 : vector<16x16xbf16> to vector<16x16xf32>
    %179 = arith.addf %175, %178 : vector<16x16xf32>
    %180 = arith.truncf %179 : vector<16x16xf32> to vector<16x16xbf16>
    %cst_59 = arith.constant dense<0.000000e+00> : vector<16x4xf32>
    %181 = tpu.matmul %180, %161, %cst_59 {dimension_numbers = #tpu.dot_dimension_numbers<[1], [0], [0], [1], [0, 0, 1, 1], [], []>} : vector<16x16xbf16>, vector<16x4xbf16>, vector<16x4xf32> -> vector<16x4xf32>
    %182 = arith.truncf %181 : vector<16x4xf32> to vector<16x4xbf16>
    %c20 = arith.constant 20 : index
    %c0_60 = arith.constant 0 : index
    %183 = vector.load %arg5[%c20, %c0_60] : memref<32x32xbf16, #tpu.memory_space<vmem>>, vector<4x32xbf16>
    %cst_61 = arith.constant dense<0.000000e+00> : vector<16x32xf32>
    %184 = tpu.matmul %182, %183, %cst_61 {dimension_numbers = #tpu.dot_dimension_numbers<[1], [0], [0], [1], [0, 0, 1, 1], [], []>} : vector<16x4xbf16>, vector<4x32xbf16>, vector<16x32xf32> -> vector<16x32xf32>
    %185 = arith.addf %155, %184 : vector<16x32xf32>
    %186 = vector.extract_strided_slice %4 {offsets = [0, 24], sizes = [16, 4], strides = [1, 1]} : vector<16x96xf32> to vector<16x4xf32>
    %187 = arith.truncf %186 : vector<16x4xf32> to vector<16x4xbf16>
    %188 = vector.extract_strided_slice %4 {offsets = [0, 56], sizes = [16, 4], strides = [1, 1]} : vector<16x96xf32> to vector<16x4xf32>
    %189 = arith.truncf %188 : vector<16x4xf32> to vector<16x4xbf16>
    %190 = vector.extract_strided_slice %4 {offsets = [0, 88], sizes = [16, 4], strides = [1, 1]} : vector<16x96xf32> to vector<16x4xf32>
    %191 = arith.truncf %190 : vector<16x4xf32> to vector<16x4xbf16>
    %cst_62 = arith.constant dense<0.000000e+00> : vector<16x16xf32>
    %192 = tpu.matmul %187, %189, %cst_62 {dimension_numbers = #tpu.dot_dimension_numbers<[1], [1], [0], [0], [0, 0, 1, 0], [], []>} : vector<16x4xbf16>, vector<16x4xbf16>, vector<16x16xf32> -> vector<16x16xf32>
    %cst_63 = arith.constant dense<0xFF800000> : vector<16xf32>
    %193 = vector.multi_reduction <maximumf>, %192, %cst_63 [1] : vector<16x16xf32> to vector<16xf32>
    %194 = vector.shape_cast %193 : vector<16xf32> to vector<16x1xf32>
    %195 = vector.broadcast %194 : vector<16x1xf32> to vector<16x16xf32>
    %196 = arith.subf %192, %195 : vector<16x16xf32>
    %197 = math.exp %196 : vector<16x16xf32>
    %c6 = arith.constant 6 : index
    %198 = memref.load %arg4[%c6] : memref<8xf32, #tpu.memory_space<smem>>
    %cst_64 = arith.constant dense<0.000000e+00> : vector<16xf32>
    %199 = vector.multi_reduction <add>, %197, %cst_64 [1] : vector<16x16xf32> to vector<16xf32>
    %200 = vector.shape_cast %199 : vector<16xf32> to vector<16x1xf32>
    %201 = tpu.reciprocal %200 {approx = true} : vector<16x1xf32> -> vector<16x1xf32>
    %202 = vector.broadcast %198 : f32 to vector<16x1xf32>
    %203 = arith.mulf %202, %201 : vector<16x1xf32>
    %204 = vector.broadcast %203 : vector<16x1xf32> to vector<16x16xf32>
    %205 = arith.mulf %197, %204 : vector<16x16xf32>
    %c6_65 = arith.constant 6 : index
    %c0_66 = arith.constant 0 : index
    %c0_67 = arith.constant 0 : index
    %206 = vector.load %arg3[%c6_65, %c0_66, %c0_67] : memref<8x16x16xbf16, #tpu.memory_space<vmem>>, vector<1x16x16xbf16>
    %207 = vector.shape_cast %206 : vector<1x16x16xbf16> to vector<16x16xbf16>
    %208 = arith.extf %207 : vector<16x16xbf16> to vector<16x16xf32>
    %209 = arith.addf %205, %208 : vector<16x16xf32>
    %210 = arith.truncf %209 : vector<16x16xf32> to vector<16x16xbf16>
    %cst_68 = arith.constant dense<0.000000e+00> : vector<16x4xf32>
    %211 = tpu.matmul %210, %191, %cst_68 {dimension_numbers = #tpu.dot_dimension_numbers<[1], [0], [0], [1], [0, 0, 1, 1], [], []>} : vector<16x16xbf16>, vector<16x4xbf16>, vector<16x4xf32> -> vector<16x4xf32>
    %212 = arith.truncf %211 : vector<16x4xf32> to vector<16x4xbf16>
    %c24 = arith.constant 24 : index
    %c0_69 = arith.constant 0 : index
    %213 = vector.load %arg5[%c24, %c0_69] : memref<32x32xbf16, #tpu.memory_space<vmem>>, vector<4x32xbf16>
    %cst_70 = arith.constant dense<0.000000e+00> : vector<16x32xf32>
    %214 = tpu.matmul %212, %213, %cst_70 {dimension_numbers = #tpu.dot_dimension_numbers<[1], [0], [0], [1], [0, 0, 1, 1], [], []>} : vector<16x4xbf16>, vector<4x32xbf16>, vector<16x32xf32> -> vector<16x32xf32>
    %215 = arith.addf %185, %214 : vector<16x32xf32>
    %216 = vector.extract_strided_slice %4 {offsets = [0, 28], sizes = [16, 4], strides = [1, 1]} : vector<16x96xf32> to vector<16x4xf32>
    %217 = arith.truncf %216 : vector<16x4xf32> to vector<16x4xbf16>
    %218 = vector.extract_strided_slice %4 {offsets = [0, 60], sizes = [16, 4], strides = [1, 1]} : vector<16x96xf32> to vector<16x4xf32>
    %219 = arith.truncf %218 : vector<16x4xf32> to vector<16x4xbf16>
    %220 = vector.extract_strided_slice %4 {offsets = [0, 92], sizes = [16, 4], strides = [1, 1]} : vector<16x96xf32> to vector<16x4xf32>
    %221 = arith.truncf %220 : vector<16x4xf32> to vector<16x4xbf16>
    %cst_71 = arith.constant dense<0.000000e+00> : vector<16x16xf32>
    %222 = tpu.matmul %217, %219, %cst_71 {dimension_numbers = #tpu.dot_dimension_numbers<[1], [1], [0], [0], [0, 0, 1, 0], [], []>} : vector<16x4xbf16>, vector<16x4xbf16>, vector<16x16xf32> -> vector<16x16xf32>
    %cst_72 = arith.constant dense<0xFF800000> : vector<16xf32>
    %223 = vector.multi_reduction <maximumf>, %222, %cst_72 [1] : vector<16x16xf32> to vector<16xf32>
    %224 = vector.shape_cast %223 : vector<16xf32> to vector<16x1xf32>
    %225 = vector.broadcast %224 : vector<16x1xf32> to vector<16x16xf32>
    %226 = arith.subf %222, %225 : vector<16x16xf32>
    %227 = math.exp %226 : vector<16x16xf32>
    %c7 = arith.constant 7 : index
    %228 = memref.load %arg4[%c7] : memref<8xf32, #tpu.memory_space<smem>>
    %cst_73 = arith.constant dense<0.000000e+00> : vector<16xf32>
    %229 = vector.multi_reduction <add>, %227, %cst_73 [1] : vector<16x16xf32> to vector<16xf32>
    %230 = vector.shape_cast %229 : vector<16xf32> to vector<16x1xf32>
    %231 = tpu.reciprocal %230 {approx = true} : vector<16x1xf32> -> vector<16x1xf32>
    %232 = vector.broadcast %228 : f32 to vector<16x1xf32>
    %233 = arith.mulf %232, %231 : vector<16x1xf32>
    %234 = vector.broadcast %233 : vector<16x1xf32> to vector<16x16xf32>
    %235 = arith.mulf %227, %234 : vector<16x16xf32>
    %c7_74 = arith.constant 7 : index
    %c0_75 = arith.constant 0 : index
    %c0_76 = arith.constant 0 : index
    %236 = vector.load %arg3[%c7_74, %c0_75, %c0_76] : memref<8x16x16xbf16, #tpu.memory_space<vmem>>, vector<1x16x16xbf16>
    %237 = vector.shape_cast %236 : vector<1x16x16xbf16> to vector<16x16xbf16>
    %238 = arith.extf %237 : vector<16x16xbf16> to vector<16x16xf32>
    %239 = arith.addf %235, %238 : vector<16x16xf32>
    %240 = arith.truncf %239 : vector<16x16xf32> to vector<16x16xbf16>
    %cst_77 = arith.constant dense<0.000000e+00> : vector<16x4xf32>
    %241 = tpu.matmul %240, %221, %cst_77 {dimension_numbers = #tpu.dot_dimension_numbers<[1], [0], [0], [1], [0, 0, 1, 1], [], []>} : vector<16x16xbf16>, vector<16x4xbf16>, vector<16x4xf32> -> vector<16x4xf32>
    %242 = arith.truncf %241 : vector<16x4xf32> to vector<16x4xbf16>
    %c28 = arith.constant 28 : index
    %c0_78 = arith.constant 0 : index
    %243 = vector.load %arg5[%c28, %c0_78] : memref<32x32xbf16, #tpu.memory_space<vmem>>, vector<4x32xbf16>
    %cst_79 = arith.constant dense<0.000000e+00> : vector<16x32xf32>
    %244 = tpu.matmul %242, %243, %cst_79 {dimension_numbers = #tpu.dot_dimension_numbers<[1], [0], [0], [1], [0, 0, 1, 1], [], []>} : vector<16x4xbf16>, vector<4x32xbf16>, vector<16x32xf32> -> vector<16x32xf32>
    %245 = arith.addf %215, %244 : vector<16x32xf32>
    %c0_80 = arith.constant 0 : index
    %c0_81 = arith.constant 0 : index
    %246 = vector.load %arg6[%c0_80, %c0_81] : memref<1x32xf32, #tpu.memory_space<vmem>>, vector<1x32xf32>
    %247 = vector.broadcast %246 : vector<1x32xf32> to vector<16x32xf32>
    %248 = arith.addf %245, %247 : vector<16x32xf32>
    %c0_82 = arith.constant 0 : index
    %c0_83 = arith.constant 0 : index
    %c0_84 = arith.constant 0 : index
    %249 = vector.load %arg7[%c0_82, %c0_83, %c0_84] : memref<1x16x32xf32, #tpu.memory_space<vmem>>, vector<1x16x32xf32>
    %250 = vector.shape_cast %249 : vector<1x16x32xf32> to vector<16x32xf32>
    %251 = vector.shape_cast %248 : vector<16x32xf32> to vector<1x16x32xf32>
    tpu.vector_store %arg7[%c0_82, %c0_83, %c0_84], %251 {strides = array<i32>} : memref<1x16x32xf32, #tpu.memory_space<vmem>>, vector<1x16x32xf32>,
    return
  }
  func.func @transform_0(%arg0: i32) -> (i32, i32, i32) {
    %c0_i32 = arith.constant 0 : i32
    %c0_i32_0 = arith.constant 0 : i32
    %c0_i32_1 = arith.constant 0 : i32
    return %arg0, %c0_i32, %c0_i32_0 : i32, i32, i32
  }
  func.func @transform_1(%arg0: i32) -> (i32, i32) {
    %c0_i32 = arith.constant 0 : i32
    %c0_i32_0 = arith.constant 0 : i32
    %c0_i32_1 = arith.constant 0 : i32
    return %c0_i32, %c0_i32_0 : i32, i32
  }
  func.func @transform_2(%arg0: i32) -> (i32, i32, i32) {
    %c0_i32 = arith.constant 0 : i32
    %c0_i32_0 = arith.constant 0 : i32
    %c0_i32_1 = arith.constant 0 : i32
    %c0_i32_2 = arith.constant 0 : i32
    return %c0_i32, %c0_i32_0, %c0_i32_1 : i32, i32, i32
  }
  func.func @transform_3(%arg0: i32) -> i32 {
    %c0_i32 = arith.constant 0 : i32
    %c0_i32_0 = arith.constant 0 : i32
    return %c0_i32 : i32
  }
  func.func @transform_4(%arg0: i32) -> (i32, i32) {
    %c0_i32 = arith.constant 0 : i32
    %c0_i32_0 = arith.constant 0 : i32
    %c0_i32_1 = arith.constant 0 : i32
    return %c0_i32, %c0_i32_0 : i32, i32
  }
  func.func @transform_5(%arg0: i32) -> (i32, i32) {
    %c0_i32 = arith.constant 0 : i32
    %c0_i32_0 = arith.constant 0 : i32
    %c0_i32_1 = arith.constant 0 : i32
    return %c0_i32, %c0_i32_0 : i32, i32
  }
  func.func @transform_6(%arg0: i32) -> (i32, i32, i32) {
    %c0_i32 = arith.constant 0 : i32
    %c0_i32_0 = arith.constant 0 : i32
    %c0_i32_1 = arith.constant 0 : i32
    return %arg0, %c0_i32, %c0_i32_0 : i32, i32, i32
  }
}

module attributes {stable_mosaic.version = 11 : i64} {
  func.func @_gpsa_fused_kernel(%arg0: i32, %arg1: memref<1x16x32xf32, #tpu.memory_space<vmem>>, %arg2: memref<32x96xbf16, #tpu.memory_space<vmem>>, %arg3: memref<8x16x16xbf16, #tpu.memory_space<vmem>>, %arg4: memref<8xf32, #tpu.memory_space<smem>>, %arg5: memref<32x32xbf16, #tpu.memory_space<vmem>>, %arg6: memref<1x32xf32, #tpu.memory_space<vmem>>, %arg7: memref<1x16x32xf32, #tpu.memory_space<vmem>>) attributes {dimension_semantics = [#tpu.dimension_semantics<parallel>], iteration_bounds = array<i64: 2>, scalar_prefetch = 0 : i64, scratch_operands = 0 : i64, tpu.core_type = #tpu.core_type<tc>, window_params = [{transform_indices = @transform_0, window_bounds = array<i64: 1, 16, 32>}, {pipeline_mode = #tpu.pipeline_mode<synchronous>, transform_indices = @transform_1, window_bounds = array<i64: 32, 96>}, {pipeline_mode = #tpu.pipeline_mode<synchronous>, transform_indices = @transform_2, window_bounds = array<i64: 8, 16, 16>}, {transform_indices = @transform_3, window_bounds = array<i64: 8>}, {pipeline_mode = #tpu.pipeline_mode<synchronous>, transform_indices = @transform_4, window_bounds = array<i64: 32, 32>}, {pipeline_mode = #tpu.pipeline_mode<synchronous>, transform_indices = @transform_5, window_bounds = array<i64: 1, 32>}, {transform_indices = @transform_6, window_bounds = array<i64: 1, 16, 32>}]} {
    %c0 = arith.constant 0 : index
    %c0_0 = arith.constant 0 : index
    %c0_1 = arith.constant 0 : index
    %0 = vector.load %arg1[%c0, %c0_0, %c0_1] : memref<1x16x32xf32, #tpu.memory_space<vmem>>, vector<1x16x32xf32>
    %1 = vector.shape_cast %0 : vector<1x16x32xf32> to vector<16x32xf32>
    %2 = arith.truncf %1 : vector<16x32xf32> to vector<16x32xbf16>
    %c0_2 = arith.constant 0 : index
    %c0_3 = arith.constant 0 : index
    %3 = vector.load %arg2[%c0_2, %c0_3] : memref<32x96xbf16, #tpu.memory_space<vmem>>, vector<32x96xbf16>
    %cst = arith.constant dense<0.000000e+00> : vector<16x96xf32>
    %4 = tpu.matmul %2, %3, %cst {dimension_numbers = #tpu.dot_dimension_numbers<[1], [0], [0], [1], [0, 0, 1, 1], [], []>} : vector<16x32xbf16>, vector<32x96xbf16>, vector<16x96xf32> -> vector<16x96xf32>
    %cst_4 = arith.constant 0.000000e+00 : f32
    %5 = vector.broadcast %cst_4 : f32 to vector<16x32xf32>
    %6 = vector.extract_strided_slice %4 {offsets = [0, 0], sizes = [16, 4], strides = [1, 1]} : vector<16x96xf32> to vector<16x4xf32>
    %7 = arith.truncf %6 : vector<16x4xf32> to vector<16x4xbf16>
    %8 = vector.extract_strided_slice %4 {offsets = [0, 32], sizes = [16, 4], strides = [1, 1]} : vector<16x96xf32> to vector<16x4xf32>
    %9 = arith.truncf %8 : vector<16x4xf32> to vector<16x4xbf16>
    %10 = vector.extract_strided_slice %4 {offsets = [0, 64], sizes = [16, 4], strides = [1, 1]} : vector<16x96xf32> to vector<16x4xf32>
    %11 = arith.truncf %10 : vector<16x4xf32> to vector<16x4xbf16>
    %cst_5 = arith.constant dense<0.000000e+00> : vector<16x16xf32>
    %12 = tpu.matmul %7, %9, %cst_5 {dimension_numbers = #tpu.dot_dimension_numbers<[1], [1], [0], [0], [0, 0, 1, 0], [], []>} : vector<16x4xbf16>, vector<16x4xbf16>, vector<16x16xf32> -> vector<16x16xf32>
    %cst_6 = arith.constant dense<0xFF800000> : vector<16xf32>
    %13 = vector.multi_reduction <maximumf>, %12, %cst_6 [1] : vector<16x16xf32> to vector<16xf32>
    %14 = vector.shape_cast %13 : vector<16xf32> to vector<16x1xf32>
    %15 = vector.broadcast %14 : vector<16x1xf32> to vector<16x16xf32>
    %16 = arith.subf %12, %15 : vector<16x16xf32>
    %17 = math.exp %16 : vector<16x16xf32>
    %c0_7 = arith.constant 0 : index
    %18 = memref.load %arg4[%c0_7] : memref<8xf32, #tpu.memory_space<smem>>
    %cst_8 = arith.constant dense<0.000000e+00> : vector<16xf32>
    %19 = vector.multi_reduction <add>, %17, %cst_8 [1] : vector<16x16xf32> to vector<16xf32>
    %20 = vector.shape_cast %19 : vector<16xf32> to vector<16x1xf32>
    %21 = tpu.reciprocal %20 {approx = true} : vector<16x1xf32> -> vector<16x1xf32>
    %22 = vector.broadcast %18 : f32 to vector<16x1xf32>
    %23 = arith.mulf %22, %21 : vector<16x1xf32>
    %24 = vector.broadcast %23 : vector<16x1xf32> to vector<16x16xf32>
    %25 = arith.mulf %17, %24 : vector<16x16xf32>
    %c0_9 = arith.constant 0 : index
    %c0_10 = arith.constant 0 : index
    %c0_11 = arith.constant 0 : index
    %26 = vector.load %arg3[%c0_9, %c0_10, %c0_11] : memref<8x16x16xbf16, #tpu.memory_space<vmem>>, vector<1x16x16xbf16>
    %27 = vector.shape_cast %26 : vector<1x16x16xbf16> to vector<16x16xbf16>
    %28 = arith.extf %27 : vector<16x16xbf16> to vector<16x16xf32>
    %29 = arith.addf %25, %28 : vector<16x16xf32>
    %30 = arith.truncf %29 : vector<16x16xf32> to vector<16x16xbf16>
    %cst_12 = arith.constant dense<0.000000e+00> : vector<16x4xf32>
    %31 = tpu.matmul %30, %11, %cst_12 {dimension_numbers = #tpu.dot_dimension_numbers<[1], [0], [0], [1], [0, 0, 1, 1], [], []>} : vector<16x16xbf16>, vector<16x4xbf16>, vector<16x4xf32> -> vector<16x4xf32>
    %32 = arith.truncf %31 : vector<16x4xf32> to vector<16x4xbf16>
    %c0_13 = arith.constant 0 : index
    %c0_14 = arith.constant 0 : index
    %33 = vector.load %arg5[%c0_13, %c0_14] : memref<32x32xbf16, #tpu.memory_space<vmem>>, vector<4x32xbf16>
    %cst_15 = arith.constant dense<0.000000e+00> : vector<16x32xf32>
    %34 = tpu.matmul %32, %33, %cst_15 {dimension_numbers = #tpu.dot_dimension_numbers<[1], [0], [0], [1], [0, 0, 1, 1], [], []>} : vector<16x4xbf16>, vector<4x32xbf16>, vector<16x32xf32> -> vector<16x32xf32>
    %35 = arith.addf %5, %34 : vector<16x32xf32>
    %36 = vector.extract_strided_slice %4 {offsets = [0, 4], sizes = [16, 4], strides = [1, 1]} : vector<16x96xf32> to vector<16x4xf32>
    %37 = arith.truncf %36 : vector<16x4xf32> to vector<16x4xbf16>
    %38 = vector.extract_strided_slice %4 {offsets = [0, 36], sizes = [16, 4], strides = [1, 1]} : vector<16x96xf32> to vector<16x4xf32>
    %39 = arith.truncf %38 : vector<16x4xf32> to vector<16x4xbf16>
    %40 = vector.extract_strided_slice %4 {offsets = [0, 68], sizes = [16, 4], strides = [1, 1]} : vector<16x96xf32> to vector<16x4xf32>
    %41 = arith.truncf %40 : vector<16x4xf32> to vector<16x4xbf16>
    %cst_16 = arith.constant dense<0.000000e+00> : vector<16x16xf32>
    %42 = tpu.matmul %37, %39, %cst_16 {dimension_numbers = #tpu.dot_dimension_numbers<[1], [1], [0], [0], [0, 0, 1, 0], [], []>} : vector<16x4xbf16>, vector<16x4xbf16>, vector<16x16xf32> -> vector<16x16xf32>
    %cst_17 = arith.constant dense<0xFF800000> : vector<16xf32>
    %43 = vector.multi_reduction <maximumf>, %42, %cst_17 [1] : vector<16x16xf32> to vector<16xf32>
    %44 = vector.shape_cast %43 : vector<16xf32> to vector<16x1xf32>
    %45 = vector.broadcast %44 : vector<16x1xf32> to vector<16x16xf32>
    %46 = arith.subf %42, %45 : vector<16x16xf32>
    %47 = math.exp %46 : vector<16x16xf32>
    %c1 = arith.constant 1 : index
    %48 = memref.load %arg4[%c1] : memref<8xf32, #tpu.memory_space<smem>>
    %cst_18 = arith.constant dense<0.000000e+00> : vector<16xf32>
    %49 = vector.multi_reduction <add>, %47, %cst_18 [1] : vector<16x16xf32> to vector<16xf32>
    %50 = vector.shape_cast %49 : vector<16xf32> to vector<16x1xf32>
    %51 = tpu.reciprocal %50 {approx = true} : vector<16x1xf32> -> vector<16x1xf32>
    %52 = vector.broadcast %48 : f32 to vector<16x1xf32>
    %53 = arith.mulf %52, %51 : vector<16x1xf32>
    %54 = vector.broadcast %53 : vector<16x1xf32> to vector<16x16xf32>
    %55 = arith.mulf %47, %54 : vector<16x16xf32>
    %c1_19 = arith.constant 1 : index
    %c0_20 = arith.constant 0 : index
    %c0_21 = arith.constant 0 : index
    %56 = vector.load %arg3[%c1_19, %c0_20, %c0_21] : memref<8x16x16xbf16, #tpu.memory_space<vmem>>, vector<1x16x16xbf16>
    %57 = vector.shape_cast %56 : vector<1x16x16xbf16> to vector<16x16xbf16>
    %58 = arith.extf %57 : vector<16x16xbf16> to vector<16x16xf32>
    %59 = arith.addf %55, %58 : vector<16x16xf32>
    %60 = arith.truncf %59 : vector<16x16xf32> to vector<16x16xbf16>
    %cst_22 = arith.constant dense<0.000000e+00> : vector<16x4xf32>
    %61 = tpu.matmul %60, %41, %cst_22 {dimension_numbers = #tpu.dot_dimension_numbers<[1], [0], [0], [1], [0, 0, 1, 1], [], []>} : vector<16x16xbf16>, vector<16x4xbf16>, vector<16x4xf32> -> vector<16x4xf32>
    %62 = arith.truncf %61 : vector<16x4xf32> to vector<16x4xbf16>
    %c4 = arith.constant 4 : index
    %c0_23 = arith.constant 0 : index
    %63 = vector.load %arg5[%c4, %c0_23] : memref<32x32xbf16, #tpu.memory_space<vmem>>, vector<4x32xbf16>
    %cst_24 = arith.constant dense<0.000000e+00> : vector<16x32xf32>
    %64 = tpu.matmul %62, %63, %cst_24 {dimension_numbers = #tpu.dot_dimension_numbers<[1], [0], [0], [1], [0, 0, 1, 1], [], []>} : vector<16x4xbf16>, vector<4x32xbf16>, vector<16x32xf32> -> vector<16x32xf32>
    %65 = arith.addf %35, %64 : vector<16x32xf32>
    %66 = vector.extract_strided_slice %4 {offsets = [0, 8], sizes = [16, 4], strides = [1, 1]} : vector<16x96xf32> to vector<16x4xf32>
    %67 = arith.truncf %66 : vector<16x4xf32> to vector<16x4xbf16>
    %68 = vector.extract_strided_slice %4 {offsets = [0, 40], sizes = [16, 4], strides = [1, 1]} : vector<16x96xf32> to vector<16x4xf32>
    %69 = arith.truncf %68 : vector<16x4xf32> to vector<16x4xbf16>
    %70 = vector.extract_strided_slice %4 {offsets = [0, 72], sizes = [16, 4], strides = [1, 1]} : vector<16x96xf32> to vector<16x4xf32>
    %71 = arith.truncf %70 : vector<16x4xf32> to vector<16x4xbf16>
    %cst_25 = arith.constant dense<0.000000e+00> : vector<16x16xf32>
    %72 = tpu.matmul %67, %69, %cst_25 {dimension_numbers = #tpu.dot_dimension_numbers<[1], [1], [0], [0], [0, 0, 1, 0], [], []>} : vector<16x4xbf16>, vector<16x4xbf16>, vector<16x16xf32> -> vector<16x16xf32>
    %cst_26 = arith.constant dense<0xFF800000> : vector<16xf32>
    %73 = vector.multi_reduction <maximumf>, %72, %cst_26 [1] : vector<16x16xf32> to vector<16xf32>
    %74 = vector.shape_cast %73 : vector<16xf32> to vector<16x1xf32>
    %75 = vector.broadcast %74 : vector<16x1xf32> to vector<16x16xf32>
    %76 = arith.subf %72, %75 : vector<16x16xf32>
    %77 = math.exp %76 : vector<16x16xf32>
    %c2 = arith.constant 2 : index
    %78 = memref.load %arg4[%c2] : memref<8xf32, #tpu.memory_space<smem>>
    %cst_27 = arith.constant dense<0.000000e+00> : vector<16xf32>
    %79 = vector.multi_reduction <add>, %77, %cst_27 [1] : vector<16x16xf32> to vector<16xf32>
    %80 = vector.shape_cast %79 : vector<16xf32> to vector<16x1xf32>
    %81 = tpu.reciprocal %80 {approx = true} : vector<16x1xf32> -> vector<16x1xf32>
    %82 = vector.broadcast %78 : f32 to vector<16x1xf32>
    %83 = arith.mulf %82, %81 : vector<16x1xf32>
    %84 = vector.broadcast %83 : vector<16x1xf32> to vector<16x16xf32>
    %85 = arith.mulf %77, %84 : vector<16x16xf32>
    %c2_28 = arith.constant 2 : index
    %c0_29 = arith.constant 0 : index
    %c0_30 = arith.constant 0 : index
    %86 = vector.load %arg3[%c2_28, %c0_29, %c0_30] : memref<8x16x16xbf16, #tpu.memory_space<vmem>>, vector<1x16x16xbf16>
    %87 = vector.shape_cast %86 : vector<1x16x16xbf16> to vector<16x16xbf16>
    %88 = arith.extf %87 : vector<16x16xbf16> to vector<16x16xf32>
    %89 = arith.addf %85, %88 : vector<16x16xf32>
    %90 = arith.truncf %89 : vector<16x16xf32> to vector<16x16xbf16>
    %cst_31 = arith.constant dense<0.000000e+00> : vector<16x4xf32>
    %91 = tpu.matmul %90, %71, %cst_31 {dimension_numbers = #tpu.dot_dimension_numbers<[1], [0], [0], [1], [0, 0, 1, 1], [], []>} : vector<16x16xbf16>, vector<16x4xbf16>, vector<16x4xf32> -> vector<16x4xf32>
    %92 = arith.truncf %91 : vector<16x4xf32> to vector<16x4xbf16>
    %c8 = arith.constant 8 : index
    %c0_32 = arith.constant 0 : index
    %93 = vector.load %arg5[%c8, %c0_32] : memref<32x32xbf16, #tpu.memory_space<vmem>>, vector<4x32xbf16>
    %cst_33 = arith.constant dense<0.000000e+00> : vector<16x32xf32>
    %94 = tpu.matmul %92, %93, %cst_33 {dimension_numbers = #tpu.dot_dimension_numbers<[1], [0], [0], [1], [0, 0, 1, 1], [], []>} : vector<16x4xbf16>, vector<4x32xbf16>, vector<16x32xf32> -> vector<16x32xf32>
    %95 = arith.addf %65, %94 : vector<16x32xf32>
    %96 = vector.extract_strided_slice %4 {offsets = [0, 12], sizes = [16, 4], strides = [1, 1]} : vector<16x96xf32> to vector<16x4xf32>
    %97 = arith.truncf %96 : vector<16x4xf32> to vector<16x4xbf16>
    %98 = vector.extract_strided_slice %4 {offsets = [0, 44], sizes = [16, 4], strides = [1, 1]} : vector<16x96xf32> to vector<16x4xf32>
    %99 = arith.truncf %98 : vector<16x4xf32> to vector<16x4xbf16>
    %100 = vector.extract_strided_slice %4 {offsets = [0, 76], sizes = [16, 4], strides = [1, 1]} : vector<16x96xf32> to vector<16x4xf32>
    %101 = arith.truncf %100 : vector<16x4xf32> to vector<16x4xbf16>
    %cst_34 = arith.constant dense<0.000000e+00> : vector<16x16xf32>
    %102 = tpu.matmul %97, %99, %cst_34 {dimension_numbers = #tpu.dot_dimension_numbers<[1], [1], [0], [0], [0, 0, 1, 0], [], []>} : vector<16x4xbf16>, vector<16x4xbf16>, vector<16x16xf32> -> vector<16x16xf32>
    %cst_35 = arith.constant dense<0xFF800000> : vector<16xf32>
    %103 = vector.multi_reduction <maximumf>, %102, %cst_35 [1] : vector<16x16xf32> to vector<16xf32>
    %104 = vector.shape_cast %103 : vector<16xf32> to vector<16x1xf32>
    %105 = vector.broadcast %104 : vector<16x1xf32> to vector<16x16xf32>
    %106 = arith.subf %102, %105 : vector<16x16xf32>
    %107 = math.exp %106 : vector<16x16xf32>
    %c3 = arith.constant 3 : index
    %108 = memref.load %arg4[%c3] : memref<8xf32, #tpu.memory_space<smem>>
    %cst_36 = arith.constant dense<0.000000e+00> : vector<16xf32>
    %109 = vector.multi_reduction <add>, %107, %cst_36 [1] : vector<16x16xf32> to vector<16xf32>
    %110 = vector.shape_cast %109 : vector<16xf32> to vector<16x1xf32>
    %111 = tpu.reciprocal %110 {approx = true} : vector<16x1xf32> -> vector<16x1xf32>
    %112 = vector.broadcast %108 : f32 to vector<16x1xf32>
    %113 = arith.mulf %112, %111 : vector<16x1xf32>
    %114 = vector.broadcast %113 : vector<16x1xf32> to vector<16x16xf32>
    %115 = arith.mulf %107, %114 : vector<16x16xf32>
    %c3_37 = arith.constant 3 : index
    %c0_38 = arith.constant 0 : index
    %c0_39 = arith.constant 0 : index
    %116 = vector.load %arg3[%c3_37, %c0_38, %c0_39] : memref<8x16x16xbf16, #tpu.memory_space<vmem>>, vector<1x16x16xbf16>
    %117 = vector.shape_cast %116 : vector<1x16x16xbf16> to vector<16x16xbf16>
    %118 = arith.extf %117 : vector<16x16xbf16> to vector<16x16xf32>
    %119 = arith.addf %115, %118 : vector<16x16xf32>
    %120 = arith.truncf %119 : vector<16x16xf32> to vector<16x16xbf16>
    %cst_40 = arith.constant dense<0.000000e+00> : vector<16x4xf32>
    %121 = tpu.matmul %120, %101, %cst_40 {dimension_numbers = #tpu.dot_dimension_numbers<[1], [0], [0], [1], [0, 0, 1, 1], [], []>} : vector<16x16xbf16>, vector<16x4xbf16>, vector<16x4xf32> -> vector<16x4xf32>
    %122 = arith.truncf %121 : vector<16x4xf32> to vector<16x4xbf16>
    %c12 = arith.constant 12 : index
    %c0_41 = arith.constant 0 : index
    %123 = vector.load %arg5[%c12, %c0_41] : memref<32x32xbf16, #tpu.memory_space<vmem>>, vector<4x32xbf16>
    %cst_42 = arith.constant dense<0.000000e+00> : vector<16x32xf32>
    %124 = tpu.matmul %122, %123, %cst_42 {dimension_numbers = #tpu.dot_dimension_numbers<[1], [0], [0], [1], [0, 0, 1, 1], [], []>} : vector<16x4xbf16>, vector<4x32xbf16>, vector<16x32xf32> -> vector<16x32xf32>
    %125 = arith.addf %95, %124 : vector<16x32xf32>
    %126 = vector.extract_strided_slice %4 {offsets = [0, 16], sizes = [16, 4], strides = [1, 1]} : vector<16x96xf32> to vector<16x4xf32>
    %127 = arith.truncf %126 : vector<16x4xf32> to vector<16x4xbf16>
    %128 = vector.extract_strided_slice %4 {offsets = [0, 48], sizes = [16, 4], strides = [1, 1]} : vector<16x96xf32> to vector<16x4xf32>
    %129 = arith.truncf %128 : vector<16x4xf32> to vector<16x4xbf16>
    %130 = vector.extract_strided_slice %4 {offsets = [0, 80], sizes = [16, 4], strides = [1, 1]} : vector<16x96xf32> to vector<16x4xf32>
    %131 = arith.truncf %130 : vector<16x4xf32> to vector<16x4xbf16>
    %cst_43 = arith.constant dense<0.000000e+00> : vector<16x16xf32>
    %132 = tpu.matmul %127, %129, %cst_43 {dimension_numbers = #tpu.dot_dimension_numbers<[1], [1], [0], [0], [0, 0, 1, 0], [], []>} : vector<16x4xbf16>, vector<16x4xbf16>, vector<16x16xf32> -> vector<16x16xf32>
    %cst_44 = arith.constant dense<0xFF800000> : vector<16xf32>
    %133 = vector.multi_reduction <maximumf>, %132, %cst_44 [1] : vector<16x16xf32> to vector<16xf32>
    %134 = vector.shape_cast %133 : vector<16xf32> to vector<16x1xf32>
    %135 = vector.broadcast %134 : vector<16x1xf32> to vector<16x16xf32>
    %136 = arith.subf %132, %135 : vector<16x16xf32>
    %137 = math.exp %136 : vector<16x16xf32>
    %c4_45 = arith.constant 4 : index
    %138 = memref.load %arg4[%c4_45] : memref<8xf32, #tpu.memory_space<smem>>
    %cst_46 = arith.constant dense<0.000000e+00> : vector<16xf32>
    %139 = vector.multi_reduction <add>, %137, %cst_46 [1] : vector<16x16xf32> to vector<16xf32>
    %140 = vector.shape_cast %139 : vector<16xf32> to vector<16x1xf32>
    %141 = tpu.reciprocal %140 {approx = true} : vector<16x1xf32> -> vector<16x1xf32>
    %142 = vector.broadcast %138 : f32 to vector<16x1xf32>
    %143 = arith.mulf %142, %141 : vector<16x1xf32>
    %144 = vector.broadcast %143 : vector<16x1xf32> to vector<16x16xf32>
    %145 = arith.mulf %137, %144 : vector<16x16xf32>
    %c4_47 = arith.constant 4 : index
    %c0_48 = arith.constant 0 : index
    %c0_49 = arith.constant 0 : index
    %146 = vector.load %arg3[%c4_47, %c0_48, %c0_49] : memref<8x16x16xbf16, #tpu.memory_space<vmem>>, vector<1x16x16xbf16>
    %147 = vector.shape_cast %146 : vector<1x16x16xbf16> to vector<16x16xbf16>
    %148 = arith.extf %147 : vector<16x16xbf16> to vector<16x16xf32>
    %149 = arith.addf %145, %148 : vector<16x16xf32>
    %150 = arith.truncf %149 : vector<16x16xf32> to vector<16x16xbf16>
    %cst_50 = arith.constant dense<0.000000e+00> : vector<16x4xf32>
    %151 = tpu.matmul %150, %131, %cst_50 {dimension_numbers = #tpu.dot_dimension_numbers<[1], [0], [0], [1], [0, 0, 1, 1], [], []>} : vector<16x16xbf16>, vector<16x4xbf16>, vector<16x4xf32> -> vector<16x4xf32>
    %152 = arith.truncf %151 : vector<16x4xf32> to vector<16x4xbf16>
    %c16 = arith.constant 16 : index
    %c0_51 = arith.constant 0 : index
    %153 = vector.load %arg5[%c16, %c0_51] : memref<32x32xbf16, #tpu.memory_space<vmem>>, vector<4x32xbf16>
    %cst_52 = arith.constant dense<0.000000e+00> : vector<16x32xf32>
    %154 = tpu.matmul %152, %153, %cst_52 {dimension_numbers = #tpu.dot_dimension_numbers<[1], [0], [0], [1], [0, 0, 1, 1], [], []>} : vector<16x4xbf16>, vector<4x32xbf16>, vector<16x32xf32> -> vector<16x32xf32>
    %155 = arith.addf %125, %154 : vector<16x32xf32>
    %156 = vector.extract_strided_slice %4 {offsets = [0, 20], sizes = [16, 4], strides = [1, 1]} : vector<16x96xf32> to vector<16x4xf32>
    %157 = arith.truncf %156 : vector<16x4xf32> to vector<16x4xbf16>
    %158 = vector.extract_strided_slice %4 {offsets = [0, 52], sizes = [16, 4], strides = [1, 1]} : vector<16x96xf32> to vector<16x4xf32>
    %159 = arith.truncf %158 : vector<16x4xf32> to vector<16x4xbf16>
    %160 = vector.extract_strided_slice %4 {offsets = [0, 84], sizes = [16, 4], strides = [1, 1]} : vector<16x96xf32> to vector<16x4xf32>
    %161 = arith.truncf %160 : vector<16x4xf32> to vector<16x4xbf16>
    %cst_53 = arith.constant dense<0.000000e+00> : vector<16x16xf32>
    %162 = tpu.matmul %157, %159, %cst_53 {dimension_numbers = #tpu.dot_dimension_numbers<[1], [1], [0], [0], [0, 0, 1, 0], [], []>} : vector<16x4xbf16>, vector<16x4xbf16>, vector<16x16xf32> -> vector<16x16xf32>
    %cst_54 = arith.constant dense<0xFF800000> : vector<16xf32>
    %163 = vector.multi_reduction <maximumf>, %162, %cst_54 [1] : vector<16x16xf32> to vector<16xf32>
    %164 = vector.shape_cast %163 : vector<16xf32> to vector<16x1xf32>
    %165 = vector.broadcast %164 : vector<16x1xf32> to vector<16x16xf32>
    %166 = arith.subf %162, %165 : vector<16x16xf32>
    %167 = math.exp %166 : vector<16x16xf32>
    %c5 = arith.constant 5 : index
    %168 = memref.load %arg4[%c5] : memref<8xf32, #tpu.memory_space<smem>>
    %cst_55 = arith.constant dense<0.000000e+00> : vector<16xf32>
    %169 = vector.multi_reduction <add>, %167, %cst_55 [1] : vector<16x16xf32> to vector<16xf32>
    %170 = vector.shape_cast %169 : vector<16xf32> to vector<16x1xf32>
    %171 = tpu.reciprocal %170 {approx = true} : vector<16x1xf32> -> vector<16x1xf32>
    %172 = vector.broadcast %168 : f32 to vector<16x1xf32>
    %173 = arith.mulf %172, %171 : vector<16x1xf32>
    %174 = vector.broadcast %173 : vector<16x1xf32> to vector<16x16xf32>
    %175 = arith.mulf %167, %174 : vector<16x16xf32>
    %c5_56 = arith.constant 5 : index
    %c0_57 = arith.constant 0 : index
    %c0_58 = arith.constant 0 : index
    %176 = vector.load %arg3[%c5_56, %c0_57, %c0_58] : memref<8x16x16xbf16, #tpu.memory_space<vmem>>, vector<1x16x16xbf16>
    %177 = vector.shape_cast %176 : vector<1x16x16xbf16> to vector<16x16xbf16>
    %178 = arith.extf %177 : vector<16x16xbf16> to vector<16x16xf32>
    %179 = arith.addf %175, %178 : vector<16x16xf32>
    %180 = arith.truncf %179 : vector<16x16xf32> to vector<16x16xbf16>
    %cst_59 = arith.constant dense<0.000000e+00> : vector<16x4xf32>
    %181 = tpu.matmul %180, %161, %cst_59 {dimension_numbers = #tpu.dot_dimension_numbers<[1], [0], [0], [1], [0, 0, 1, 1], [], []>} : vector<16x16xbf16>, vector<16x4xbf16>, vector<16x4xf32> -> vector<16x4xf32>
    %182 = arith.truncf %181 : vector<16x4xf32> to vector<16x4xbf16>
    %c20 = arith.constant 20 : index
    %c0_60 = arith.constant 0 : index
    %183 = vector.load %arg5[%c20, %c0_60] : memref<32x32xbf16, #tpu.memory_space<vmem>>, vector<4x32xbf16>
    %cst_61 = arith.constant dense<0.000000e+00> : vector<16x32xf32>
    %184 = tpu.matmul %182, %183, %cst_61 {dimension_numbers = #tpu.dot_dimension_numbers<[1], [0], [0], [1], [0, 0, 1, 1], [], []>} : vector<16x4xbf16>, vector<4x32xbf16>, vector<16x32xf32> -> vector<16x32xf32>
    %185 = arith.addf %155, %184 : vector<16x32xf32>
    %186 = vector.extract_strided_slice %4 {offsets = [0, 24], sizes = [16, 4], strides = [1, 1]} : vector<16x96xf32> to vector<16x4xf32>
    %187 = arith.truncf %186 : vector<16x4xf32> to vector<16x4xbf16>
    %188 = vector.extract_strided_slice %4 {offsets = [0, 56], sizes = [16, 4], strides = [1, 1]} : vector<16x96xf32> to vector<16x4xf32>
    %189 = arith.truncf %188 : vector<16x4xf32> to vector<16x4xbf16>
    %190 = vector.extract_strided_slice %4 {offsets = [0, 88], sizes = [16, 4], strides = [1, 1]} : vector<16x96xf32> to vector<16x4xf32>
    %191 = arith.truncf %190 : vector<16x4xf32> to vector<16x4xbf16>
    %cst_62 = arith.constant dense<0.000000e+00> : vector<16x16xf32>
    %192 = tpu.matmul %187, %189, %cst_62 {dimension_numbers = #tpu.dot_dimension_numbers<[1], [1], [0], [0], [0, 0, 1, 0], [], []>} : vector<16x4xbf16>, vector<16x4xbf16>, vector<16x16xf32> -> vector<16x16xf32>
    %cst_63 = arith.constant dense<0xFF800000> : vector<16xf32>
    %193 = vector.multi_reduction <maximumf>, %192, %cst_63 [1] : vector<16x16xf32> to vector<16xf32>
    %194 = vector.shape_cast %193 : vector<16xf32> to vector<16x1xf32>
    %195 = vector.broadcast %194 : vector<16x1xf32> to vector<16x16xf32>
    %196 = arith.subf %192, %195 : vector<16x16xf32>
    %197 = math.exp %196 : vector<16x16xf32>
    %c6 = arith.constant 6 : index
    %198 = memref.load %arg4[%c6] : memref<8xf32, #tpu.memory_space<smem>>
    %cst_64 = arith.constant dense<0.000000e+00> : vector<16xf32>
    %199 = vector.multi_reduction <add>, %197, %cst_64 [1] : vector<16x16xf32> to vector<16xf32>
    %200 = vector.shape_cast %199 : vector<16xf32> to vector<16x1xf32>
    %201 = tpu.reciprocal %200 {approx = true} : vector<16x1xf32> -> vector<16x1xf32>
    %202 = vector.broadcast %198 : f32 to vector<16x1xf32>
    %203 = arith.mulf %202, %201 : vector<16x1xf32>
    %204 = vector.broadcast %203 : vector<16x1xf32> to vector<16x16xf32>
    %205 = arith.mulf %197, %204 : vector<16x16xf32>
    %c6_65 = arith.constant 6 : index
    %c0_66 = arith.constant 0 : index
    %c0_67 = arith.constant 0 : index
    %206 = vector.load %arg3[%c6_65, %c0_66, %c0_67] : memref<8x16x16xbf16, #tpu.memory_space<vmem>>, vector<1x16x16xbf16>
    %207 = vector.shape_cast %206 : vector<1x16x16xbf16> to vector<16x16xbf16>
    %208 = arith.extf %207 : vector<16x16xbf16> to vector<16x16xf32>
    %209 = arith.addf %205, %208 : vector<16x16xf32>
    %210 = arith.truncf %209 : vector<16x16xf32> to vector<16x16xbf16>
    %cst_68 = arith.constant dense<0.000000e+00> : vector<16x4xf32>
    %211 = tpu.matmul %210, %191, %cst_68 {dimension_numbers = #tpu.dot_dimension_numbers<[1], [0], [0], [1], [0, 0, 1, 1], [], []>} : vector<16x16xbf16>, vector<16x4xbf16>, vector<16x4xf32> -> vector<16x4xf32>
    %212 = arith.truncf %211 : vector<16x4xf32> to vector<16x4xbf16>
    %c24 = arith.constant 24 : index
    %c0_69 = arith.constant 0 : index
    %213 = vector.load %arg5[%c24, %c0_69] : memref<32x32xbf16, #tpu.memory_space<vmem>>, vector<4x32xbf16>
    %cst_70 = arith.constant dense<0.000000e+00> : vector<16x32xf32>
    %214 = tpu.matmul %212, %213, %cst_70 {dimension_numbers = #tpu.dot_dimension_numbers<[1], [0], [0], [1], [0, 0, 1, 1], [], []>} : vector<16x4xbf16>, vector<4x32xbf16>, vector<16x32xf32> -> vector<16x32xf32>
    %215 = arith.addf %185, %214 : vector<16x32xf32>
    %216 = vector.extract_strided_slice %4 {offsets = [0, 28], sizes = [16, 4], strides = [1, 1]} : vector<16x96xf32> to vector<16x4xf32>
    %217 = arith.truncf %216 : vector<16x4xf32> to vector<16x4xbf16>
    %218 = vector.extract_strided_slice %4 {offsets = [0, 60], sizes = [16, 4], strides = [1, 1]} : vector<16x96xf32> to vector<16x4xf32>
    %219 = arith.truncf %218 : vector<16x4xf32> to vector<16x4xbf16>
    %220 = vector.extract_strided_slice %4 {offsets = [0, 92], sizes = [16, 4], strides = [1, 1]} : vector<16x96xf32> to vector<16x4xf32>
    %221 = arith.truncf %220 : vector<16x4xf32> to vector<16x4xbf16>
    %cst_71 = arith.constant dense<0.000000e+00> : vector<16x16xf32>
    %222 = tpu.matmul %217, %219, %cst_71 {dimension_numbers = #tpu.dot_dimension_numbers<[1], [1], [0], [0], [0, 0, 1, 0], [], []>} : vector<16x4xbf16>, vector<16x4xbf16>, vector<16x16xf32> -> vector<16x16xf32>
    %cst_72 = arith.constant dense<0xFF800000> : vector<16xf32>
    %223 = vector.multi_reduction <maximumf>, %222, %cst_72 [1] : vector<16x16xf32> to vector<16xf32>
    %224 = vector.shape_cast %223 : vector<16xf32> to vector<16x1xf32>
    %225 = vector.broadcast %224 : vector<16x1xf32> to vector<16x16xf32>
    %226 = arith.subf %222, %225 : vector<16x16xf32>
    %227 = math.exp %226 : vector<16x16xf32>
    %c7 = arith.constant 7 : index
    %228 = memref.load %arg4[%c7] : memref<8xf32, #tpu.memory_space<smem>>
    %cst_73 = arith.constant dense<0.000000e+00> : vector<16xf32>
    %229 = vector.multi_reduction <add>, %227, %cst_73 [1] : vector<16x16xf32> to vector<16xf32>
    %230 = vector.shape_cast %229 : vector<16xf32> to vector<16x1xf32>
    %231 = tpu.reciprocal %230 {approx = true} : vector<16x1xf32> -> vector<16x1xf32>
    %232 = vector.broadcast %228 : f32 to vector<16x1xf32>
    %233 = arith.mulf %232, %231 : vector<16x1xf32>
    %234 = vector.broadcast %233 : vector<16x1xf32> to vector<16x16xf32>
    %235 = arith.mulf %227, %234 : vector<16x16xf32>
    %c7_74 = arith.constant 7 : index
    %c0_75 = arith.constant 0 : index
    %c0_76 = arith.constant 0 : index
    %236 = vector.load %arg3[%c7_74, %c0_75, %c0_76] : memref<8x16x16xbf16, #tpu.memory_space<vmem>>, vector<1x16x16xbf16>
    %237 = vector.shape_cast %236 : vector<1x16x16xbf16> to vector<16x16xbf16>
    %238 = arith.extf %237 : vector<16x16xbf16> to vector<16x16xf32>
    %239 = arith.addf %235, %238 : vector<16x16xf32>
    %240 = arith.truncf %239 : vector<16x16xf32> to vector<16x16xbf16>
    %cst_77 = arith.constant dense<0.000000e+00> : vector<16x4xf32>
    %241 = tpu.matmul %240, %221, %cst_77 {dimension_numbers = #tpu.dot_dimension_numbers<[1], [0], [0], [1], [0, 0, 1, 1], [], []>} : vector<16x16xbf16>, vector<16x4xbf16>, vector<16x4xf32> -> vector<16x4xf32>
    %242 = arith.truncf %241 : vector<16x4xf32> to vector<16x4xbf16>
    %c28 = arith.constant 28 : index
    %c0_78 = arith.constant 0 : index
    %243 = vector.load %arg5[%c28, %c0_78] : memref<32x32xbf16, #tpu.memory_space<vmem>>, vector<4x32xbf16>
    %cst_79 = arith.constant dense<0.000000e+00> : vector<16x32xf32>
    %244 = tpu.matmul %242, %243, %cst_79 {dimension_numbers = #tpu.dot_dimension_numbers<[1], [0], [0], [1], [0, 0, 1, 1], [], []>} : vector<16x4xbf16>, vector<4x32xbf16>, vector<16x32xf32> -> vector<16x32xf32>
    %245 = arith.addf %215, %244 : vector<16x32xf32>
    %c0_80 = arith.constant 0 : index
    %c0_81 = arith.constant 0 : index
    %246 = vector.load %arg6[%c0_80, %c0_81] : memref<1x32xf32, #tpu.memory_space<vmem>>, vector<1x32xf32>
    %247 = vector.broadcast %246 : vector<1x32xf32> to vector<16x32xf32>
    %248 = arith.addf %245, %247 : vector<16x32xf32>
    %c0_82 = arith.constant 0 : index
    %c0_83 = arith.constant 0 : index
    %c0_84 = arith.constant 0 : index
    %249 = vector.load %arg7[%c0_82, %c0_83, %c0_84] : memref<1x16x32xf32, #tpu.memory_space<vmem>>, vector<1x16x32xf32>
    %250 = vector.shape_cast %249 : vector<1x16x32xf32> to vector<16x32xf32>
    %251 = vector.shape_cast %248 : vector<16x32xf32> to vector<1x16x32xf32>
    tpu.vector_store %arg7[%c0_82, %c0_83, %c0_84], %251 {strides = array<i32>} : memref<1x16x32xf32, #tpu.memory_space<vmem>>, vector<1x16x32xf32>,
    return
  }
  func.func @transform_0(%arg0: i32) -> (i32, i32, i32) {
    %c0_i32 = arith.constant 0 : i32
    %c0_i32_0 = arith.constant 0 : i32
    %c0_i32_1 = arith.constant 0 : i32
    return %arg0, %c0_i32, %c0_i32_0 : i32, i32, i32
  }
  func.func @transform_1(%arg0: i32) -> (i32, i32) {
    %c0_i32 = arith.constant 0 : i32
    %c0_i32_0 = arith.constant 0 : i32
    %c0_i32_1 = arith.constant 0 : i32
    return %c0_i32, %c0_i32_0 : i32, i32
  }
  func.func @transform_2(%arg0: i32) -> (i32, i32, i32) {
    %c0_i32 = arith.constant 0 : i32
    %c0_i32_0 = arith.constant 0 : i32
    %c0_i32_1 = arith.constant 0 : i32
    %c0_i32_2 = arith.constant 0 : i32
    return %c0_i32, %c0_i32_0, %c0_i32_1 : i32, i32, i32
  }
  func.func @transform_3(%arg0: i32) -> i32 {
    %c0_i32 = arith.constant 0 : i32
    %c0_i32_0 = arith.constant 0 : i32
    return %c0_i32 : i32
  }
  func.func @transform_4(%arg0: i32) -> (i32, i32) {
    %c0_i32 = arith.constant 0 : i32
    %c0_i32_0 = arith.constant 0 : i32
    %c0_i32_1 = arith.constant 0 : i32
    return %c0_i32, %c0_i32_0 : i32, i32
  }
  func.func @transform_5(%arg0: i32) -> (i32, i32) {
    %c0_i32 = arith.constant 0 : i32
    %c0_i32_0 = arith.constant 0 : i32
    %c0_i32_1 = arith.constant 0 : i32
    return %c0_i32, %c0_i32_0 : i32, i32
  }
  func.func @transform_6(%arg0: i32) -> (i32, i32, i32) {
    %c0_i32 = arith.constant 0 : i32
    %c0_i32_0 = arith.constant 0 : i32
    %c0_i32_1 = arith.constant 0 : i32
    return %arg0, %c0_i32, %c0_i32_0 : i32, i32, i32
  }
}

</mosaic_0001>

<llo_original>
// kernel: tpu_custom_call.1
$region0: #{tpu_custom_call.1}
  #allocation0 [shape = 'u32[]', space=smem, size = 0x4, offset = 0x4, fixed_abs, tag = 'smem constant byte address 0x4 - core index']
  #allocation1 [shape = 'u32[144,128]{1,0:T(1,128)}', space=vmem, size = 0x12000, scoped, tag = 'internal scratch']
  %s0 = inlined_call_operand.hbm [shape: f32[2,16,32], index: 0, kind: input, shape index: {}]
  %s1 = inlined_call_operand.hbm [shape: bf16[32,96], index: 1, kind: input, shape index: {}]
  %s2 = inlined_call_operand.hbm [shape: bf16[8,16,16], index: 2, kind: input, shape index: {}]
  %s3 = inlined_call_operand.vmem [shape: f32[8], index: 3, kind: input, shape index: {}]
  %s4 = inlined_call_operand.hbm [shape: bf16[32,32], index: 4, kind: input, shape index: {}]
  %s5 = inlined_call_operand.vmem [shape: f32[1,32], index: 5, kind: input, shape index: {}]
  %s6 = inlined_call_operand.hbm [shape: f32[2,16,32], index: 6, kind: output, shape index: {}]
  %s7 = sld [smem:[#allocation0]]
  $region77: #{tpu_custom_call.1} parent=0
    _
  %s9 = ssub.s32 1, %s7
  %s10 = scalar_select 0, %s9, %s7
  $region1: #{tpu_custom_call.1} parent=0
    #allocation2 [shape = 'u8[16384]{0}', space=vmem, size = 0x4000, scoped, tag = 'input window, operand 0']
    #allocation3 [shape = 's32[2]{0}', space=sflag, size = 0x8, scoped, tag = 'scoped memory for tpu_custom_call.1']
    #allocation4 [shape = 's32[2]{0}', space=sflag, size = 0x8, scoped, tag = 'scoped memory for tpu_custom_call.1']
    #allocation5 [shape = 's32[2]{0}', space=sflag, size = 0x8, scoped, tag = 'scoped memory for tpu_custom_call.1']
    #allocation6 [shape = 'u8[8192]{0}', space=vmem, size = 0x2000, scoped, tag = 'input window, operand 1, single buffered']
    #allocation7 [shape = 's32[1]{0}', space=sflag, size = 0x4, scoped, tag = 'scoped memory for tpu_custom_call.1']
    #allocation8 [shape = 'u8[32768]{0}', space=vmem, size = 0x8000, scoped, tag = 'input window, operand 2, single buffered']
    #allocation9 [shape = 'u8[512]{0}', space=smem, size = 0x200, scoped, tag = 'input window, operand 3, single buffered']
    #allocation10 [shape = 'u8[8192]{0}', space=vmem, size = 0x2000, scoped, tag = 'input window, operand 4, single buffered']
    #allocation11 [shape = 's32[1]{0}', space=sflag, size = 0x4, scoped, tag = 'scoped memory for tpu_custom_call.1']
    #allocation12 [shape = 'u8[16384]{0}', space=vmem, size = 0x4000, scoped, tag = 'output window, operand 0']
    %11 = vsyncpa [#allocation3], 0
    %s12 = scalar_lea.sflag [#allocation3], 1
    %13 = vsyncpa %s12, 0
    %14 = vsyncpa [#allocation7], 0
    %15 = vsyncpa [#allocation5], 0
    %16 = vsyncpa [#allocation11], 0
    %17 = vsyncpa [#allocation4], 0
    %s18 = scalar_lea.sflag [#allocation4], 1
    %19 = vsyncpa %s18, 0
    loop: start=0, step=1, limit=4
    $region2: #{tpu_custom_call.1} parent=1 // loop_pre_header
      _
    $region3: #{tpu_custom_call.1} parent=1 // loop_header
      %s21 = sphi 0, %s25
      %p22 = scmp.ge.s32.totalorder %s21, 4
      %s31 = sphi 0, %s33
      %s34 = sphi 0, %s31
      %s35 = sphi 0, %s34
      %s51 = sphi 0, %s35
      %s55 = sphi 0, %s55
      %s57 = sphi 0, %s55
      %s58 = sphi 0, %s57
      %s72 = sphi 0, %s58
      %s76 = sphi 0, %s76
      %s78 = sphi 0, %s76
      %s79 = sphi 0, %s78
      %s93 = sphi 0, %s79
      %s97 = sphi 0, %s97
      %s99 = sphi 0, %s97
      %s100 = sphi 0, %s99
      %s114 = sphi 0, %s100
      %s118 = sphi 0, %s118
      %s120 = sphi 0, %s118
      %s121 = sphi 0, %s120
      %s135 = sphi 0, %s121
      %s139 = sphi 0, %s139
      %s141 = sphi 0, %s139
      %s142 = sphi 0, %s141
      %s156 = sphi 0, %s142
      %s162 = sphi 0, %s164
      %s165 = sphi 0, %s162
      %s166 = sphi 0, %s165
      %s182 = sphi 0, %s166
    $region4: #{tpu_custom_call.1} parent=1 // loop_header_branch
      %24 = sbr.rel (%p22) target = $region8
    $region5: #{tpu_custom_call.1} parent=1 // loop_body
      %s26 = ssub.s32 %s21, 1
      %s27 = ssub.s32 %s21, 2
      %s28 = sadd.s32 %s21, 1
      %s29 = ssub.s32 %s21, %s28
      %p30 = scmp.eq.s32.totalorder %s29, 0
      %s32 = sadd.s32 %s31, 1
      %s33 = scalar_select %p30, %s31, %s32
      %p36 = pneg %p30
      %p37 = scmp.eq.s32.totalorder %s21, 1
      %p38 = por %p36, %p37
      %p39 = scmp.ne.s32.totalorder %s31, %s34
      %p40 = scmp.eq.s32.totalorder %s21, 0
      %p41 = por %p39, %p40
      %p42 = scmp.ne.s32.totalorder %s31, %s34
      %p43 = scmp.eq.s32.totalorder %s26, 1
      %p44 = por %p42, %p43
      %p45 = scmp.ne.s32.totalorder %s34, %s35
      %p46 = scmp.eq.s32.totalorder %s26, 0
      %p47 = por %p45, %p46
      %p48 = scmp.ne.s32.totalorder %s34, %s35
      %p49 = scmp.eq.s32.totalorder %s27, 1
      %p50 = por %p48, %p49
      %p52 = scmp.ne.s32.totalorder %s35, %s51
      %p53 = scmp.eq.s32.totalorder %s27, 0
      %p54 = por %p52, %p53
      %s56 = sadd.s32 %s55, 1
      %p59 = scmp.eq.s32.totalorder %s21, 1
      %p60 = scmp.ne.s32.totalorder %s55, %s57
      %p61 = scmp.eq.s32.totalorder %s21, 0
      %p62 = por %p60, %p61
      %p63 = scmp.ne.s32.totalorder %s55, %s57
      %p64 = scmp.eq.s32.totalorder %s26, 1
      %p65 = por %p63, %p64
      %p66 = scmp.ne.s32.totalorder %s57, %s58
      %p67 = scmp.eq.s32.totalorder %s26, 0
      %p68 = por %p66, %p67
      %p69 = scmp.ne.s32.totalorder %s57, %s58
      %p70 = scmp.eq.s32.totalorder %s27, 1
      %p71 = por %p69, %p70
      %p73 = scmp.ne.s32.totalorder %s58, %s72
      %p74 = scmp.eq.s32.totalorder %s27, 0
      %p75 = por %p73, %p74
      %s77 = sadd.s32 %s76, 1
      %p80 = scmp.eq.s32.totalorder %s21, 1
      %p81 = scmp.ne.s32.totalorder %s76, %s78
      %p82 = scmp.eq.s32.totalorder %s21, 0
      %p83 = por %p81, %p82
      %p84 = scmp.ne.s32.totalorder %s76, %s78
      %p85 = scmp.eq.s32.totalorder %s26, 1
      %p86 = por %p84, %p85
      %p87 = scmp.ne.s32.totalorder %s78, %s79
      %p88 = scmp.eq.s32.totalorder %s26, 0
      %p89 = por %p87, %p88
      %p90 = scmp.ne.s32.totalorder %s78, %s79
      %p91 = scmp.eq.s32.totalorder %s27, 1
      %p92 = por %p90, %p91
      %p94 = scmp.ne.s32.totalorder %s79, %s93
      %p95 = scmp.eq.s32.totalorder %s27, 0
      %p96 = por %p94, %p95
      %s98 = sadd.s32 %s97, 1
      %p101 = scmp.eq.s32.totalorder %s21, 1
      %p102 = scmp.ne.s32.totalorder %s97, %s99
      %p103 = scmp.eq.s32.totalorder %s21, 0
      %p104 = por %p102, %p103
      %p105 = scmp.ne.s32.totalorder %s97, %s99
      %p106 = scmp.eq.s32.totalorder %s26, 1
      %p107 = por %p105, %p106
      %p108 = scmp.ne.s32.totalorder %s99, %s100
      %p109 = scmp.eq.s32.totalorder %s26, 0
      %p110 = por %p108, %p109
      %p111 = scmp.ne.s32.totalorder %s99, %s100
      %p112 = scmp.eq.s32.totalorder %s27, 1
      %p113 = por %p111, %p112
      %p115 = scmp.ne.s32.totalorder %s100, %s114
      %p116 = scmp.eq.s32.totalorder %s27, 0
      %p117 = por %p115, %p116
      %s119 = sadd.s32 %s118, 1
      %p122 = scmp.eq.s32.totalorder %s21, 1
      %p123 = scmp.ne.s32.totalorder %s118, %s120
      %p124 = scmp.eq.s32.totalorder %s21, 0
      %p125 = por %p123, %p124
      %p126 = scmp.ne.s32.totalorder %s118, %s120
      %p127 = scmp.eq.s32.totalorder %s26, 1
      %p128 = por %p126, %p127
      %p129 = scmp.ne.s32.totalorder %s120, %s121
      %p130 = scmp.eq.s32.totalorder %s26, 0
      %p131 = por %p129, %p130
      %p132 = scmp.ne.s32.totalorder %s120, %s121
      %p133 = scmp.eq.s32.totalorder %s27, 1
      %p134 = por %p132, %p133
      %p136 = scmp.ne.s32.totalorder %s121, %s135
      %p137 = scmp.eq.s32.totalorder %s27, 0
      %p138 = por %p136, %p137
      %s140 = sadd.s32 %s139, 1
      %p143 = scmp.eq.s32.totalorder %s21, 1
      %p144 = scmp.ne.s32.totalorder %s139, %s141
      %p145 = scmp.eq.s32.totalorder %s21, 0
      %p146 = por %p144, %p145
      %p147 = scmp.ne.s32.totalorder %s139, %s141
      %p148 = scmp.eq.s32.totalorder %s26, 1
      %p149 = por %p147, %p148
      %p150 = scmp.ne.s32.totalorder %s141, %s142
      %p151 = scmp.eq.s32.totalorder %s26, 0
      %p152 = por %p150, %p151
      %p153 = scmp.ne.s32.totalorder %s141, %s142
      %p154 = scmp.eq.s32.totalorder %s27, 1
      %p155 = por %p153, %p154
      %p157 = scmp.ne.s32.totalorder %s142, %s156
      %p158 = scmp.eq.s32.totalorder %s27, 0
      %p159 = por %p157, %p158
      %s160 = ssub.s32 %s21, %s28
      %p161 = scmp.eq.s32.totalorder %s160, 0
      %s163 = sadd.s32 %s162, 1
      %s164 = scalar_select %p161, %s162, %s163
      %p167 = pneg %p161
      %p168 = scmp.eq.s32.totalorder %s21, 1
      %p169 = por %p167, %p168
      %p170 = scmp.ne.s32.totalorder %s162, %s165
      %p171 = scmp.eq.s32.totalorder %s21, 0
      %p172 = por %p170, %p171
      %p173 = scmp.ne.s32.totalorder %s162, %s165
      %p174 = scmp.eq.s32.totalorder %s26, 1
      %p175 = por %p173, %p174
      %p176 = scmp.ne.s32.totalorder %s165, %s166
      %p177 = scmp.eq.s32.totalorder %s26, 0
      %p178 = por %p176, %p177
      %p179 = scmp.ne.s32.totalorder %s165, %s166
      %p180 = scmp.eq.s32.totalorder %s27, 1
      %p181 = por %p179, %p180
      %p183 = scmp.ne.s32.totalorder %s166, %s182
      %p184 = scmp.eq.s32.totalorder %s27, 0
      %p185 = por %p183, %p184
      %p186 = scmp.le.s32.totalorder 1, %s21
      %p187 = scmp.lt.s32.totalorder %s21, 3
      %p188 = pnand %p186, %p187
      %p189 = pneg %p188
      // Predicated region
      $region9: #{tpu_custom_call.1} parent=5 // pred_check
        _
      $region10: #{tpu_custom_call.1} parent=5 // pred_check_branch
        %191 = sbr.rel (%p188) target = $region12
      $region11: #{tpu_custom_call.1} parent=5 // pred_region
        %s192 = ssub.s32 %s21, 1
        // Predicated region
        $region13: #{tpu_custom_call.1} parent=11 // pred_check
          %p193 = pneg %p68
        $region14: #{tpu_custom_call.1} parent=11 // pred_check_branch
          %195 = sbr.rel (%p193) target = $region16
        $region15: #{tpu_custom_call.1} parent=11 // pred_region
          %s197 = ssub.s32 256, 256
          %198 = vsyncadd [#allocation7], %s197
          %s199 = sshll.u32 [#allocation6], 4
          %s200 = int_to_ptr.vmem [resolvable:$true] %s199
          %205 = dma.hbm_to_vmem [thread:$0]  %s1, 256, %s200, [#allocation7], 64, 64, 4
        $region16: #{tpu_custom_call.1} parent=11 // pred_fallthru
          _
        // Predicated region
        $region17: #{tpu_custom_call.1} parent=11 // pred_check
          %p206 = pneg %p89
        $region18: #{tpu_custom_call.1} parent=11 // pred_check_branch
          %208 = sbr.rel (%p206) target = $region20
        $region19: #{tpu_custom_call.1} parent=11 // pred_region
          %s210 = ssub.s32 1024, 1024
          %211 = vsyncadd [#allocation7], %s210
          %s212 = sshll.u32 [#allocation8], 4
          %s213 = int_to_ptr.vmem [resolvable:$true] %s212
          %218 = dma.hbm_to_vmem [thread:$0]  %s2, 1024, %s213, [#allocation7], 64, 64, 4
        $region20: #{tpu_custom_call.1} parent=11 // pred_fallthru
          _
        // Predicated region
        $region21: #{tpu_custom_call.1} parent=11 // pred_check
          %p219 = pneg %p110
        $region22: #{tpu_custom_call.1} parent=11 // pred_check_branch
          %221 = sbr.rel (%p219) target = $region24
        $region23: #{tpu_custom_call.1} parent=11 // pred_region
          %s223 = ssub.s32 16, 16
          %224 = vsyncadd [#allocation5], %s223
          %s226 = sshll.u32 %s3, 4
          %s227 = int_to_ptr.vmem [resolvable:$true] %s226
          %229 = dma.vmem_to_smem %s227, 16, [#allocation9], [#allocation5]
        $region24: #{tpu_custom_call.1} parent=11 // pred_fallthru
          _
        // Predicated region
        $region25: #{tpu_custom_call.1} parent=11 // pred_check
          %p230 = pneg %p131
        $region26: #{tpu_custom_call.1} parent=11 // pred_check_branch
          %232 = sbr.rel (%p230) target = $region28
        $region27: #{tpu_custom_call.1} parent=11 // pred_region
          %s234 = ssub.s32 256, 256
          %235 = vsyncadd [#allocation11], %s234
          %s236 = sshll.u32 [#allocation10], 4
          %s237 = int_to_ptr.vmem [resolvable:$true] %s236
          %242 = dma.hbm_to_vmem [thread:$0]  %s4, 256, %s237, [#allocation11], 64, 64, 4
        $region28: #{tpu_custom_call.1} parent=11 // pred_fallthru
          _
        // Predicated region
        $region29: #{tpu_custom_call.1} parent=11 // pred_check
          %p243 = pneg %p152
        $region30: #{tpu_custom_call.1} parent=11 // pred_check_branch
          %245 = sbr.rel (%p243) target = $region32
        $region31: #{tpu_custom_call.1} parent=11 // pred_region
          _
        $region32: #{tpu_custom_call.1} parent=11 // pred_fallthru
          _
      $region12: #{tpu_custom_call.1} parent=5 // pred_fallthru
        _
      %p246 = scmp.lt.s32.totalorder %s21, 2
      // Predicated region
      $region33: #{tpu_custom_call.1} parent=5 // pred_check
        %p247 = pneg %p246
      $region34: #{tpu_custom_call.1} parent=5 // pred_check_branch
        %249 = sbr.rel (%p247) target = $region36
      $region35: #{tpu_custom_call.1} parent=5 // pred_region
        // Predicated region
        $region37: #{tpu_custom_call.1} parent=35 // pred_check
          %p250 = pneg %p41
        $region38: #{tpu_custom_call.1} parent=35 // pred_check_branch
          %252 = sbr.rel (%p250) target = $region40
        $region39: #{tpu_custom_call.1} parent=35 // pred_region
          %s253 = sand.u32 %s31, 1
          %s254 = scalar_lea.sflag [#allocation3], %s253
          %s255 = sand.u32 %s31, 1
          %s256 = smul.addr %s255, 16
          %s257 = scalar_lea.vmem [#allocation2], %s256
          %s259 = ssub.s32 256, 256
          %260 = vsyncadd %s254, %s259
          %s261 = smul.addr %s21, 2
          %s262 = smul.addr %s261, 128
          %s263 = scalar_lea.hbm %s0, %s262
          %s264 = sshll.u32 %s257, 4
          %s265 = int_to_ptr.vmem [resolvable:$true] %s264
          %270 = dma.hbm_to_vmem [thread:$0]  %s263, 256, %s265, %s254, 128, 128, 8
        $region40: #{tpu_custom_call.1} parent=35 // pred_fallthru
          _
      $region36: #{tpu_custom_call.1} parent=5 // pred_fallthru
        _
      %p271 = scmp.le.s32.totalorder 1, %s21
      %p272 = scmp.lt.s32.totalorder %s21, 3
      %p273 = pnand %p271, %p272
      %p274 = pneg %p273
      // Predicated region
      $region41: #{tpu_custom_call.1} parent=5 // pred_check
        _
      $region42: #{tpu_custom_call.1} parent=5 // pred_check_branch
        %276 = sbr.rel (%p273) target = $region44
      $region43: #{tpu_custom_call.1} parent=5 // pred_region
        %s277 = ssub.s32 %s21, 1
        %s278 = sand.u32 %s34, 1
        %s279 = scalar_lea.sflag [#allocation3], %s278
        %s280 = sand.u32 %s34, 1
        %s281 = smul.addr %s280, 16
        %s282 = scalar_lea.vmem [#allocation2], %s281
        // Predicated region
        $region45: #{tpu_custom_call.1} parent=43 // pred_check
          %p283 = pneg %p47
        $region46: #{tpu_custom_call.1} parent=43 // pred_check_branch
          %285 = sbr.rel (%p283) target = $region48
        $region47: #{tpu_custom_call.1} parent=43 // pred_region
          %286 = dma.done %s279, 256
        $region48: #{tpu_custom_call.1} parent=43 // pred_fallthru
          _
        // Predicated region
        $region49: #{tpu_custom_call.1} parent=43 // pred_check
          %p287 = pneg %p68
        $region50: #{tpu_custom_call.1} parent=43 // pred_check_branch
          %289 = sbr.rel (%p287) target = $region52
        $region51: #{tpu_custom_call.1} parent=43 // pred_region
          %290 = dma.done [#allocation7], 256
        $region52: #{tpu_custom_call.1} parent=43 // pred_fallthru
          _
        // Predicated region
        $region53: #{tpu_custom_call.1} parent=43 // pred_check
          %p291 = pneg %p89
        $region54: #{tpu_custom_call.1} parent=43 // pred_check_branch
          %293 = sbr.rel (%p291) target = $region56
        $region55: #{tpu_custom_call.1} parent=43 // pred_region
          %294 = dma.done [#allocation7], 1024
        $region56: #{tpu_custom_call.1} parent=43 // pred_fallthru
          _
        // Predicated region
        $region57: #{tpu_custom_call.1} parent=43 // pred_check
          %p295 = pneg %p110
        $region58: #{tpu_custom_call.1} parent=43 // pred_check_branch
          %297 = sbr.rel (%p295) target = $region60
        $region59: #{tpu_custom_call.1} parent=43 // pred_region
          %298 = dma.done [#allocation5], 16
        $region60: #{tpu_custom_call.1} parent=43 // pred_fallthru
          _
        // Predicated region
        $region61: #{tpu_custom_call.1} parent=43 // pred_check
          %p299 = pneg %p131
        $region62: #{tpu_custom_call.1} parent=43 // pred_check_branch
          %301 = sbr.rel (%p299) target = $region64
        $region63: #{tpu_custom_call.1} parent=43 // pred_region
          %302 = dma.done [#allocation11], 256
        $region64: #{tpu_custom_call.1} parent=43 // pred_fallthru
          _
        %303 = sfence
        %s304 = sand.u32 %s34, 1
        %s305 = scalar_lea.sflag [#allocation3], %s304
        %s306 = sand.u32 %s34, 1
        %s307 = smul.addr %s306, 16
        %s308 = scalar_lea.vmem [#allocation2], %s307
        %p309 = pneg %p47
        %p310 = pneg %p44
        %p311 = pneg %p68
        %p312 = pneg %p65
        %p313 = pneg %p89
        %p314 = pneg %p86
        %p315 = pneg %p110
        %p316 = pneg %p107
        %p317 = pneg %p131
        %p318 = pneg %p128
        %p319 = pneg %p152
        %p320 = pneg %p149
        %p321 = pneg %p178
        %p322 = pneg %p175
        %s323 = sand.u32 %s165, 1
        %s324 = scalar_lea.sflag [#allocation4], %s323
        %s325 = sand.u32 %s165, 1
        %s326 = smul.addr %s325, 16
        %s327 = scalar_lea.vmem [#allocation12], %s326
        %v329 = vld [vmem:[%s282] sm:$0xff]
        %v330 = vld [vmem:[%s282 + $0x8] sm:$0xff]
        %v331 = vpack.c.bf16 %v330, %v329
        %v332 = vld [vmem:[#allocation6] sm:$0xf]
        %v333 = vld [vmem:[#allocation6 + $0x4] sm:$0xf]
        %v334 = vld [vmem:[#allocation6 + $0x8] sm:$0xf]
        %v335 = vld [vmem:[#allocation6 + $0xc] sm:$0xf]
        %v340 = vunpack.c.l.b16 %v332
        %v341 = vunpack.c.l.b16 %v333
        %v342 = vunpack.c.l.b16 %v334
        %v343 = vunpack.c.l.b16 %v335
        %v344 = vpack.c.b16 %v341, %v340
        %v345 = vpack.c.b16 %v343, %v342
        %vm348 = vcmask 261120
        %v350 = vsel %vm348, %v331, 0
        %352 = vmatprep.subr.bf16.mxu0 0
        %353 = vmatpush1.bf16.msra.mxu0 0
        %354 = vmatprep.subr.bf16.mxu0 0
        %355 = vmatpush1.bf16.msra.mxu0 0
        %356 = vmatprep.subr.bf16.mxu0 0
        %357 = vmatpush1.bf16.msra.mxu0 0
        %358 = vmatprep.subr.bf16.mxu0 0
        %359 = vmatpush1.bf16.msra.mxu0 0
        %360 = vmatprep.subr.bf16.mxu0 0
        %361 = vmatpush1.bf16.msra.mxu0 0
        %362 = vmatprep.subr.bf16.mxu0 0
        %363 = vmatpush1.bf16.msra.mxu0 0
        %364 = vmatprep.subr.bf16.mxu0 0
        %365 = vmatpush1.bf16.msra.mxu0 %v345
        %366 = vmatprep.subr.bf16.mxu0 0
        %367 = vmatpush1.bf16.msra.mxu0 %v344
        %368 = vmatprep.subr.bf16.mxu0 0
        %369 = vmatpush2.bf16.msra.mxu0 0
        %370 = vmatprep.subr.bf16.mxu0 0
        %371 = vmatpush2.bf16.msra.mxu0 0
        %372 = vmatprep.subr.bf16.mxu0 0
        %373 = vmatpush2.bf16.msra.mxu0 0
        %374 = vmatprep.subr.bf16.mxu0 0
        %375 = vmatpush2.bf16.msra.mxu0 0
        %376 = vmatprep.subr.bf16.mxu0 0
        %377 = vmatpush2.bf16.msra.mxu0 0
        %378 = vmatprep.subr.bf16.mxu0 0
        %379 = vmatpush2.bf16.msra.mxu0 0
        %380 = vmatprep.subr.bf16.mxu0 0
        %381 = vmatpush2.bf16.msra.mxu0 0
        %382 = vmatprep.subr.bf16.mxu0 0
        %383 = vmatpush2.bf16.msra.mxu0 0
        %384 = vmatprep.mubr.bf16.mxu0 0
        %385 = vmatmul.mubr.bf16.gmra.mxu0 %v350
        %v386 = vpop.f32.mrf.mxu0
        %v387 = vadd.f32 0.0, %v386
        %v388 = vpop.f32.mrf.mxu0
        %v389 = vpop.f32.mrf.mxu0
        %v390 = vadd.f32 0.0, %v389
        %v391 = vpop.f32.mrf.mxu0
        %392 = vdwg.mxu0
        %v393 = vpack.c.bf16 %v390, %v387
        %395 = vrot.lane.b32.xlu0 %v393, 96
        %v396 = vpop.permute.xlu0 %395
        %vm397 = vcmask 31744
        %v399 = vsel %vm397, %v393, 0
        %v402 = vsel %vm397, %v396, 0
        %404 = vmatprep.subr.bf16.mxu0 0
        %405 = vmatpush1.bf16.xpose.msra.mxu0 0
        %406 = vmatprep.subr.bf16.mxu0 0
        %407 = vmatpush1.bf16.xpose.msra.mxu0 0
        %408 = vmatprep.subr.bf16.mxu0 0
        %409 = vmatpush1.bf16.xpose.msra.mxu0 0
        %410 = vmatprep.subr.bf16.mxu0 0
        %411 = vmatpush1.bf16.xpose.msra.mxu0 0
        %412 = vmatprep.subr.bf16.mxu0 0
        %413 = vmatpush1.bf16.xpose.msra.mxu0 0
        %414 = vmatprep.subr.bf16.mxu0 0
        %415 = vmatpush1.bf16.xpose.msra.mxu0 0
        %416 = vmatprep.subr.bf16.mxu0 0
        %417 = vmatpush1.bf16.xpose.msra.mxu0 0
        %418 = vmatprep.subr.bf16.mxu0 0
        %419 = vmatpush1.bf16.xpose.msra.mxu0 %v402
        %420 = vmatprep.subr.bf16.mxu0 0
        %421 = vmatpush2.bf16.xpose.msra.mxu0 0
        %422 = vmatprep.subr.bf16.mxu0 0
        %423 = vmatpush2.bf16.xpose.msra.mxu0 0
        %424 = vmatprep.subr.bf16.mxu0 0
        %425 = vmatpush2.bf16.xpose.msra.mxu0 0
        %426 = vmatprep.subr.bf16.mxu0 0
        %427 = vmatpush2.bf16.xpose.msra.mxu0 0
        %428 = vmatprep.subr.bf16.mxu0 0
        %429 = vmatpush2.bf16.xpose.msra.mxu0 0
        %430 = vmatprep.subr.bf16.mxu0 0
        %431 = vmatpush2.bf16.xpose.msra.mxu0 0
        %432 = vmatprep.subr.bf16.mxu0 0
        %433 = vmatpush2.bf16.xpose.msra.mxu0 0
        %434 = vmatprep.subr.bf16.mxu0 0
        %435 = vmatpush2.bf16.xpose.msra.mxu0 0
        %436 = vmatprep.mubr.bf16.mxu0 0
        %437 = vmatmul.mubr.bf16.gmra.mxu0 %v399
        %v438 = vpop.f32.mrf.mxu0
        %v439 = vadd.f32 0.0, %v438
        %v440 = vpop.f32.mrf.mxu0
        %v441 = vpop.f32.mrf.mxu0
        %v442 = vadd.f32 0.0, %v441
        %v443 = vpop.f32.mrf.mxu0
        %444 = vdwg.mxu0
        %vm445 = vcmask 130048
        %v446 = vsel %vm445, %v439, -inf
        %447 = vmax.xlane.f32.xlu0 %v446
        %v448 = vpop.xlane.xlu0 %447
        %v449 = vsel %vm445, %v442, -inf
        %450 = vmax.xlane.f32.xlu0 %v449
        %v451 = vpop.xlane.xlu0 %450
        %v452 = vsub.f32 %v439, %v448
        %v453 = vsub.f32 %v442, %v451
        %v454 = vmul.f32 %v452, 1.442695
        %v455 = vpow.pop %v454
        %v456 = vmul.f32 %v453, 1.442695
        %v457 = vpow.pop %v456
        %s458 = sld [smem:[#allocation9]]
        %v459 = vsel %vm445, %v455, 0.0
        %460 = vadd.xlane.f32.xlu0 %v459
        %v461 = vpop.xlane.xlu0 %460
        %v462 = vsel %vm445, %v457, 0.0
        %463 = vadd.xlane.f32.xlu0 %v462
        %v464 = vpop.xlane.xlu0 %463
        %v465 = vrcp.pop %v461
        %v466 = vrcp.pop %v464
        %v467 = vstv %s458
        %v468 = vmul.f32 %v467, %v465
        %v469 = vmul.f32 %v467, %v466
        %v470 = vmul.f32 %v455, %v468
        %v471 = vmul.f32 %v457, %v469
        %v472 = vld [vmem:[#allocation8] sm:$0xf]
        %v473 = vld [vmem:[#allocation8 + $0x4] sm:$0xf]
        %v474 = vunpack.c.l.bf16 %v472
        %v475 = vunpack.c.l.bf16 %v473
        %v476 = vadd.f32 %v470, %v474
        %v477 = vadd.f32 %v471, %v475
        %v478 = vpack.c.bf16 %v477, %v476
        %479 = vrot.lane.b32.xlu0 %v393, 64
        %v480 = vpop.permute.xlu0 %479
        %v483 = vsel %vm445, %v478, 0
        %485 = vmatprep.subr.bf16.mxu0 0
        %486 = vmatpush1.bf16.msra.mxu0 0
        %487 = vmatprep.subr.bf16.mxu0 0
        %488 = vmatpush1.bf16.msra.mxu0 0
        %489 = vmatprep.subr.bf16.mxu0 0
        %490 = vmatpush1.bf16.msra.mxu0 0
        %491 = vmatprep.subr.bf16.mxu0 0
        %492 = vmatpush1.bf16.msra.mxu0 0
        %493 = vmatprep.subr.bf16.mxu0 0
        %494 = vmatpush1.bf16.msra.mxu0 0
        %495 = vmatprep.subr.bf16.mxu0 0
        %496 = vmatpush1.bf16.msra.mxu0 0
        %497 = vmatprep.subr.bf16.mxu0 0
        %498 = vmatpush1.bf16.msra.mxu0 0
        %499 = vmatprep.subr.bf16.mxu0 0
        %500 = vmatpush1.bf16.msra.mxu0 %v480
        %501 = vmatprep.subr.bf16.mxu0 0
        %502 = vmatpush2.bf16.msra.mxu0 0
        %503 = vmatprep.subr.bf16.mxu0 0
        %504 = vmatpush2.bf16.msra.mxu0 0
        %505 = vmatprep.subr.bf16.mxu0 0
        %506 = vmatpush2.bf16.msra.mxu0 0
        %507 = vmatprep.subr.bf16.mxu0 0
        %508 = vmatpush2.bf16.msra.mxu0 0
        %509 = vmatprep.subr.bf16.mxu0 0
        %510 = vmatpush2.bf16.msra.mxu0 0
        %511 = vmatprep.subr.bf16.mxu0 0
        %512 = vmatpush2.bf16.msra.mxu0 0
        %513 = vmatprep.subr.bf16.mxu0 0
        %514 = vmatpush2.bf16.msra.mxu0 0
        %515 = vmatprep.subr.bf16.mxu0 0
        %516 = vmatpush2.bf16.msra.mxu0 0
        %517 = vmatprep.mubr.bf16.mxu0 0
        %518 = vmatmul.mubr.bf16.gmra.mxu0 %v483
        %v519 = vpop.f32.mrf.mxu0
        %v520 = vadd.f32 0.0, %v519
        %v521 = vpop.f32.mrf.mxu0
        %v522 = vpop.f32.mrf.mxu0
        %v523 = vadd.f32 0.0, %v522
        %v524 = vpop.f32.mrf.mxu0
        %525 = vdwg.mxu0
        %v526 = vpack.c.bf16 %v523, %v520
        %v527 = vld [vmem:[#allocation10] sm:$0x3]
        %528 = vrot.lane.b32.xlu0 %v393, 124
        %v529 = vpop.permute.xlu0 %528
        %530 = vrot.lane.b32.xlu0 %v393, 92
        %v531 = vpop.permute.xlu0 %530
        %v533 = vsel %vm397, %v529, 0
        %v536 = vsel %vm397, %v531, 0
        %538 = vmatprep.subr.bf16.mxu0 0
        %539 = vmatpush1.bf16.xpose.msra.mxu0 0
        %540 = vmatprep.subr.bf16.mxu0 0
        %541 = vmatpush1.bf16.xpose.msra.mxu0 0
        %542 = vmatprep.subr.bf16.mxu0 0
        %543 = vmatpush1.bf16.xpose.msra.mxu0 0
        %544 = vmatprep.subr.bf16.mxu0 0
        %545 = vmatpush1.bf16.xpose.msra.mxu0 0
        %546 = vmatprep.subr.bf16.mxu0 0
        %547 = vmatpush1.bf16.xpose.msra.mxu0 0
        %548 = vmatprep.subr.bf16.mxu0 0
        %549 = vmatpush1.bf16.xpose.msra.mxu0 0
        %550 = vmatprep.subr.bf16.mxu0 0
        %551 = vmatpush1.bf16.xpose.msra.mxu0 0
        %552 = vmatprep.subr.bf16.mxu0 0
        %553 = vmatpush1.bf16.xpose.msra.mxu0 %v536
        %554 = vmatprep.subr.bf16.mxu0 0
        %555 = vmatpush2.bf16.xpose.msra.mxu0 0
        %556 = vmatprep.subr.bf16.mxu0 0
        %557 = vmatpush2.bf16.xpose.msra.mxu0 0
        %558 = vmatprep.subr.bf16.mxu0 0
        %559 = vmatpush2.bf16.xpose.msra.mxu0 0
        %560 = vmatprep.subr.bf16.mxu0 0
        %561 = vmatpush2.bf16.xpose.msra.mxu0 0
        %562 = vmatprep.subr.bf16.mxu0 0
        %563 = vmatpush2.bf16.xpose.msra.mxu0 0
        %564 = vmatprep.subr.bf16.mxu0 0
        %565 = vmatpush2.bf16.xpose.msra.mxu0 0
        %566 = vmatprep.subr.bf16.mxu0 0
        %567 = vmatpush2.bf16.xpose.msra.mxu0 0
        %568 = vmatprep.subr.bf16.mxu0 0
        %569 = vmatpush2.bf16.xpose.msra.mxu0 0
        %570 = vmatprep.mubr.bf16.mxu0 0
        %571 = vmatmul.mubr.bf16.gmra.mxu0 %v533
        %v572 = vpop.f32.mrf.mxu0
        %v573 = vadd.f32 0.0, %v572
        %v574 = vpop.f32.mrf.mxu0
        %v575 = vpop.f32.mrf.mxu0
        %v576 = vadd.f32 0.0, %v575
        %v577 = vpop.f32.mrf.mxu0
        %578 = vdwg.mxu0
        %v579 = vsel %vm445, %v573, -inf
        %580 = vmax.xlane.f32.xlu0 %v579
        %v581 = vpop.xlane.xlu0 %580
        %v582 = vsel %vm445, %v576, -inf
        %583 = vmax.xlane.f32.xlu0 %v582
        %v584 = vpop.xlane.xlu0 %583
        %v585 = vsub.f32 %v573, %v581
        %v586 = vsub.f32 %v576, %v584
        %v587 = vmul.f32 %v585, 1.442695
        %v588 = vpow.pop %v587
        %v589 = vmul.f32 %v586, 1.442695
        %v590 = vpow.pop %v589
        %s591 = sld [smem:[#allocation9 + $0x1]]
        %v592 = vsel %vm445, %v588, 0.0
        %593 = vadd.xlane.f32.xlu0 %v592
        %v594 = vpop.xlane.xlu0 %593
        %v595 = vsel %vm445, %v590, 0.0
        %596 = vadd.xlane.f32.xlu0 %v595
        %v597 = vpop.xlane.xlu0 %596
        %v598 = vrcp.pop %v594
        %v599 = vrcp.pop %v597
        %v600 = vstv %s591
        %v601 = vmul.f32 %v600, %v598
        %v602 = vmul.f32 %v600, %v599
        %v603 = vmul.f32 %v588, %v601
        %v604 = vmul.f32 %v590, %v602
        %s605 = scalar_lea.vmem [#allocation8], 8
        %v606 = vld [vmem:[%s605] sm:$0xf]
        %v607 = vld [vmem:[%s605 + $0x4] sm:$0xf]
        %v608 = vunpack.c.l.bf16 %v606
        %v609 = vunpack.c.l.bf16 %v607
        %v610 = vadd.f32 %v603, %v608
        %v611 = vadd.f32 %v604, %v609
        %v612 = vpack.c.bf16 %v611, %v610
        %613 = vrot.lane.b32.xlu0 %v393, 60
        %v614 = vpop.permute.xlu0 %613
        %v617 = vsel %vm445, %v612, 0
        %619 = vmatprep.subr.bf16.mxu0 0
        %620 = vmatpush1.bf16.msra.mxu0 0
        %621 = vmatprep.subr.bf16.mxu0 0
        %622 = vmatpush1.bf16.msra.mxu0 0
        %623 = vmatprep.subr.bf16.mxu0 0
        %624 = vmatpush1.bf16.msra.mxu0 0
        %625 = vmatprep.subr.bf16.mxu0 0
        %626 = vmatpush1.bf16.msra.mxu0 0
        %627 = vmatprep.subr.bf16.mxu0 0
        %628 = vmatpush1.bf16.msra.mxu0 0
        %629 = vmatprep.subr.bf16.mxu0 0
        %630 = vmatpush1.bf16.msra.mxu0 0
        %631 = vmatprep.subr.bf16.mxu0 0
        %632 = vmatpush1.bf16.msra.mxu0 0
        %633 = vmatprep.subr.bf16.mxu0 0
        %634 = vmatpush1.bf16.msra.mxu0 %v614
        %635 = vmatprep.subr.bf16.mxu0 0
        %636 = vmatpush2.bf16.msra.mxu0 0
        %637 = vmatprep.subr.bf16.mxu0 0
        %638 = vmatpush2.bf16.msra.mxu0 0
        %639 = vmatprep.subr.bf16.mxu0 0
        %640 = vmatpush2.bf16.msra.mxu0 0
        %641 = vmatprep.subr.bf16.mxu0 0
        %642 = vmatpush2.bf16.msra.mxu0 0
        %643 = vmatprep.subr.bf16.mxu0 0
        %644 = vmatpush2.bf16.msra.mxu0 0
        %645 = vmatprep.subr.bf16.mxu0 0
        %646 = vmatpush2.bf16.msra.mxu0 0
        %647 = vmatprep.subr.bf16.mxu0 0
        %648 = vmatpush2.bf16.msra.mxu0 0
        %649 = vmatprep.subr.bf16.mxu0 0
        %650 = vmatpush2.bf16.msra.mxu0 0
        %651 = vmatprep.mubr.bf16.mxu0 0
        %652 = vmatmul.mubr.bf16.gmra.mxu0 %v617
        %v653 = vpop.f32.mrf.mxu0
        %v654 = vadd.f32 0.0, %v653
        %v655 = vpop.f32.mrf.mxu0
        %v656 = vpop.f32.mrf.mxu0
        %v657 = vadd.f32 0.0, %v656
        %v658 = vpop.f32.mrf.mxu0
        %659 = vdwg.mxu0
        %v660 = vpack.c.bf16 %v657, %v654
        %v661 = vld [vmem:[#allocation10] sm:$0xc]
        %v663 = vunpack.c.l.b16 %v661
        %v664 = vpack.c.b16 %v663, %v663
        %v665 = vrot.slane %v664, 2
        %v667 = vsel %vm397, %v660, 0
        %vm669 = vcmask 1041408
        %v671 = vsel %vm669, %v665, 0
        %673 = vmatprep.subr.bf16.mxu0 0
        %674 = vmatpush1.bf16.msra.mxu0 0
        %675 = vmatprep.subr.bf16.mxu0 0
        %676 = vmatpush1.bf16.msra.mxu0 0
        %677 = vmatprep.subr.bf16.mxu0 0
        %678 = vmatpush1.bf16.msra.mxu0 0
        %679 = vmatprep.subr.bf16.mxu0 0
        %680 = vmatpush1.bf16.msra.mxu0 0
        %681 = vmatprep.subr.bf16.mxu0 0
        %682 = vmatpush1.bf16.msra.mxu0 0
        %683 = vmatprep.subr.bf16.mxu0 0
        %684 = vmatpush1.bf16.msra.mxu0 0
        %685 = vmatprep.subr.bf16.mxu0 0
        %686 = vmatpush1.bf16.msra.mxu0 0
        %687 = vmatprep.subr.bf16.mxu0 0
        %688 = vmatpush1.bf16.msra.mxu0 %v671
        %689 = vmatprep.subr.bf16.mxu0 0
        %690 = vmatpush2.bf16.msra.mxu0 0
        %691 = vmatprep.subr.bf16.mxu0 0
        %692 = vmatpush2.bf16.msra.mxu0 0
        %693 = vmatprep.subr.bf16.mxu0 0
        %694 = vmatpush2.bf16.msra.mxu0 0
        %695 = vmatprep.subr.bf16.mxu0 0
        %696 = vmatpush2.bf16.msra.mxu0 0
        %697 = vmatprep.subr.bf16.mxu0 0
        %698 = vmatpush2.bf16.msra.mxu0 0
        %699 = vmatprep.subr.bf16.mxu0 0
        %700 = vmatpush2.bf16.msra.mxu0 0
        %701 = vmatprep.subr.bf16.mxu0 0
        %702 = vmatpush2.bf16.msra.mxu0 0
        %703 = vmatprep.subr.bf16.mxu0 0
        %704 = vmatpush2.bf16.msra.mxu0 0
        %705 = vmatprep.mubr.bf16.mxu0 0
        %706 = vmatmul.mubr.bf16.gmra.mxu0 %v667
        %v707 = vpop.f32.mrf.mxu0
        %v708 = vadd.f32 0.0, %v707
        %v709 = vpop.f32.mrf.mxu0
        %v710 = vpop.f32.mrf.mxu0
        %v711 = vadd.f32 0.0, %v710
        %v712 = vpop.f32.mrf.mxu0
        %713 = vdwg.mxu0
        %v715 = vsel %vm397, %v526, 0
        %v718 = vsel %vm669, %v527, 0
        %720 = vmatprep.subr.bf16.mxu0 0
        %721 = vmatpush1.bf16.msra.mxu0 0
        %722 = vmatprep.subr.bf16.mxu0 0
        %723 = vmatpush1.bf16.msra.mxu0 0
        %724 = vmatprep.subr.bf16.mxu0 0
        %725 = vmatpush1.bf16.msra.mxu0 0
        %726 = vmatprep.subr.bf16.mxu0 0
        %727 = vmatpush1.bf16.msra.mxu0 0
        %728 = vmatprep.subr.bf16.mxu0 0
        %729 = vmatpush1.bf16.msra.mxu0 0
        %730 = vmatprep.subr.bf16.mxu0 0
        %731 = vmatpush1.bf16.msra.mxu0 0
        %732 = vmatprep.subr.bf16.mxu0 0
        %733 = vmatpush1.bf16.msra.mxu0 0
        %734 = vmatprep.subr.bf16.mxu0 0
        %735 = vmatpush1.bf16.msra.mxu0 %v718
        %736 = vmatprep.subr.bf16.mxu0 0
        %737 = vmatpush2.bf16.msra.mxu0 0
        %738 = vmatprep.subr.bf16.mxu0 0
        %739 = vmatpush2.bf16.msra.mxu0 0
        %740 = vmatprep.subr.bf16.mxu0 0
        %741 = vmatpush2.bf16.msra.mxu0 0
        %742 = vmatprep.subr.bf16.mxu0 0
        %743 = vmatpush2.bf16.msra.mxu0 0
        %744 = vmatprep.subr.bf16.mxu0 0
        %745 = vmatpush2.bf16.msra.mxu0 0
        %746 = vmatprep.subr.bf16.mxu0 0
        %747 = vmatpush2.bf16.msra.mxu0 0
        %748 = vmatprep.subr.bf16.mxu0 0
        %749 = vmatpush2.bf16.msra.mxu0 0
        %750 = vmatprep.subr.bf16.mxu0 0
        %751 = vmatpush2.bf16.msra.mxu0 0
        %752 = vmatprep.mubr.bf16.mxu0 0
        %753 = vmatmul.mubr.bf16.gmra.mxu0 %v715
        %v754 = vpop.f32.mrf.mxu0
        %v755 = vadd.f32 %v708, %v754
        %v756 = vpop.f32.mrf.mxu0
        %v757 = vpop.f32.mrf.mxu0
        %v758 = vadd.f32 %v711, %v757
        %v759 = vpop.f32.mrf.mxu0
        %760 = vdwg.mxu0
        %761 = vrot.lane.b32.xlu0 %v393, 120
        %v762 = vpop.permute.xlu0 %761
        %763 = vrot.lane.b32.xlu0 %v393, 88
        %v764 = vpop.permute.xlu0 %763
        %v766 = vsel %vm397, %v762, 0
        %v769 = vsel %vm397, %v764, 0
        %771 = vmatprep.subr.bf16.mxu0 0
        %772 = vmatpush1.bf16.xpose.msra.mxu0 0
        %773 = vmatprep.subr.bf16.mxu0 0
        %774 = vmatpush1.bf16.xpose.msra.mxu0 0
        %775 = vmatprep.subr.bf16.mxu0 0
        %776 = vmatpush1.bf16.xpose.msra.mxu0 0
        %777 = vmatprep.subr.bf16.mxu0 0
        %778 = vmatpush1.bf16.xpose.msra.mxu0 0
        %779 = vmatprep.subr.bf16.mxu0 0
        %780 = vmatpush1.bf16.xpose.msra.mxu0 0
        %781 = vmatprep.subr.bf16.mxu0 0
        %782 = vmatpush1.bf16.xpose.msra.mxu0 0
        %783 = vmatprep.subr.bf16.mxu0 0
        %784 = vmatpush1.bf16.xpose.msra.mxu0 0
        %785 = vmatprep.subr.bf16.mxu0 0
        %786 = vmatpush1.bf16.xpose.msra.mxu0 %v769
        %787 = vmatprep.subr.bf16.mxu0 0
        %788 = vmatpush2.bf16.xpose.msra.mxu0 0
        %789 = vmatprep.subr.bf16.mxu0 0
        %790 = vmatpush2.bf16.xpose.msra.mxu0 0
        %791 = vmatprep.subr.bf16.mxu0 0
        %792 = vmatpush2.bf16.xpose.msra.mxu0 0
        %793 = vmatprep.subr.bf16.mxu0 0
        %794 = vmatpush2.bf16.xpose.msra.mxu0 0
        %795 = vmatprep.subr.bf16.mxu0 0
        %796 = vmatpush2.bf16.xpose.msra.mxu0 0
        %797 = vmatprep.subr.bf16.mxu0 0
        %798 = vmatpush2.bf16.xpose.msra.mxu0 0
        %799 = vmatprep.subr.bf16.mxu0 0
        %800 = vmatpush2.bf16.xpose.msra.mxu0 0
        %801 = vmatprep.subr.bf16.mxu0 0
        %802 = vmatpush2.bf16.xpose.msra.mxu0 0
        %803 = vmatprep.mubr.bf16.mxu0 0
        %804 = vmatmul.mubr.bf16.gmra.mxu0 %v766
        %v805 = vpop.f32.mrf.mxu0
        %v806 = vadd.f32 0.0, %v805
        %v807 = vpop.f32.mrf.mxu0
        %v808 = vpop.f32.mrf.mxu0
        %v809 = vadd.f32 0.0, %v808
        %v810 = vpop.f32.mrf.mxu0
        %811 = vdwg.mxu0
        %v812 = vsel %vm445, %v806, -inf
        %813 = vmax.xlane.f32.xlu0 %v812
        %v814 = vpop.xlane.xlu0 %813
        %v815 = vsel %vm445, %v809, -inf
        %816 = vmax.xlane.f32.xlu0 %v815
        %v817 = vpop.xlane.xlu0 %816
        %v818 = vsub.f32 %v806, %v814
        %v819 = vsub.f32 %v809, %v817
        %v820 = vmul.f32 %v818, 1.442695
        %v821 = vpow.pop %v820
        %v822 = vmul.f32 %v819, 1.442695
        %v823 = vpow.pop %v822
        %s824 = sld [smem:[#allocation9 + $0x2]]
        %v825 = vsel %vm445, %v821, 0.0
        %826 = vadd.xlane.f32.xlu0 %v825
        %v827 = vpop.xlane.xlu0 %826
        %v828 = vsel %vm445, %v823, 0.0
        %829 = vadd.xlane.f32.xlu0 %v828
        %v830 = vpop.xlane.xlu0 %829
        %v831 = vrcp.pop %v827
        %v832 = vrcp.pop %v830
        %v833 = vstv %s824
        %v834 = vmul.f32 %v833, %v831
        %v835 = vmul.f32 %v833, %v832
        %v836 = vmul.f32 %v821, %v834
        %v837 = vmul.f32 %v823, %v835
        %s838 = scalar_lea.vmem [#allocation8], 16
        %v839 = vld [vmem:[%s838] sm:$0xf]
        %v840 = vld [vmem:[%s838 + $0x4] sm:$0xf]
        %v841 = vunpack.c.l.bf16 %v839
        %v842 = vunpack.c.l.bf16 %v840
        %v843 = vadd.f32 %v836, %v841
        %v844 = vadd.f32 %v837, %v842
        %v845 = vpack.c.bf16 %v844, %v843
        %846 = vrot.lane.b32.xlu0 %v393, 56
        %v847 = vpop.permute.xlu0 %846
        %v850 = vsel %vm445, %v845, 0
        %852 = vmatprep.subr.bf16.mxu0 0
        %853 = vmatpush1.bf16.msra.mxu0 0
        %854 = vmatprep.subr.bf16.mxu0 0
        %855 = vmatpush1.bf16.msra.mxu0 0
        %856 = vmatprep.subr.bf16.mxu0 0
        %857 = vmatpush1.bf16.msra.mxu0 0
        %858 = vmatprep.subr.bf16.mxu0 0
        %859 = vmatpush1.bf16.msra.mxu0 0
        %860 = vmatprep.subr.bf16.mxu0 0
        %861 = vmatpush1.bf16.msra.mxu0 0
        %862 = vmatprep.subr.bf16.mxu0 0
        %863 = vmatpush1.bf16.msra.mxu0 0
        %864 = vmatprep.subr.bf16.mxu0 0
        %865 = vmatpush1.bf16.msra.mxu0 0
        %866 = vmatprep.subr.bf16.mxu0 0
        %867 = vmatpush1.bf16.msra.mxu0 %v847
        %868 = vmatprep.subr.bf16.mxu0 0
        %869 = vmatpush2.bf16.msra.mxu0 0
        %870 = vmatprep.subr.bf16.mxu0 0
        %871 = vmatpush2.bf16.msra.mxu0 0
        %872 = vmatprep.subr.bf16.mxu0 0
        %873 = vmatpush2.bf16.msra.mxu0 0
        %874 = vmatprep.subr.bf16.mxu0 0
        %875 = vmatpush2.bf16.msra.mxu0 0
        %876 = vmatprep.subr.bf16.mxu0 0
        %877 = vmatpush2.bf16.msra.mxu0 0
        %878 = vmatprep.subr.bf16.mxu0 0
        %879 = vmatpush2.bf16.msra.mxu0 0
        %880 = vmatprep.subr.bf16.mxu0 0
        %881 = vmatpush2.bf16.msra.mxu0 0
        %882 = vmatprep.subr.bf16.mxu0 0
        %883 = vmatpush2.bf16.msra.mxu0 0
        %884 = vmatprep.mubr.bf16.mxu0 0
        %885 = vmatmul.mubr.bf16.gmra.mxu0 %v850
        %v886 = vpop.f32.mrf.mxu0
        %v887 = vadd.f32 0.0, %v886
        %v888 = vpop.f32.mrf.mxu0
        %v889 = vpop.f32.mrf.mxu0
        %v890 = vadd.f32 0.0, %v889
        %v891 = vpop.f32.mrf.mxu0
        %892 = vdwg.mxu0
        %v893 = vpack.c.bf16 %v890, %v887
        %v894 = vld [vmem:[#allocation10 + $0x4] sm:$0x3]
        %v896 = vsel %vm397, %v893, 0
        %v899 = vsel %vm669, %v894, 0
        %901 = vmatprep.subr.bf16.mxu0 0
        %902 = vmatpush1.bf16.msra.mxu0 0
        %903 = vmatprep.subr.bf16.mxu0 0
        %904 = vmatpush1.bf16.msra.mxu0 0
        %905 = vmatprep.subr.bf16.mxu0 0
        %906 = vmatpush1.bf16.msra.mxu0 0
        %907 = vmatprep.subr.bf16.mxu0 0
        %908 = vmatpush1.bf16.msra.mxu0 0
        %909 = vmatprep.subr.bf16.mxu0 0
        %910 = vmatpush1.bf16.msra.mxu0 0
        %911 = vmatprep.subr.bf16.mxu0 0
        %912 = vmatpush1.bf16.msra.mxu0 0
        %913 = vmatprep.subr.bf16.mxu0 0
        %914 = vmatpush1.bf16.msra.mxu0 0
        %915 = vmatprep.subr.bf16.mxu0 0
        %916 = vmatpush1.bf16.msra.mxu0 %v899
        %917 = vmatprep.subr.bf16.mxu0 0
        %918 = vmatpush2.bf16.msra.mxu0 0
        %919 = vmatprep.subr.bf16.mxu0 0
        %920 = vmatpush2.bf16.msra.mxu0 0
        %921 = vmatprep.subr.bf16.mxu0 0
        %922 = vmatpush2.bf16.msra.mxu0 0
        %923 = vmatprep.subr.bf16.mxu0 0
        %924 = vmatpush2.bf16.msra.mxu0 0
        %925 = vmatprep.subr.bf16.mxu0 0
        %926 = vmatpush2.bf16.msra.mxu0 0
        %927 = vmatprep.subr.bf16.mxu0 0
        %928 = vmatpush2.bf16.msra.mxu0 0
        %929 = vmatprep.subr.bf16.mxu0 0
        %930 = vmatpush2.bf16.msra.mxu0 0
        %931 = vmatprep.subr.bf16.mxu0 0
        %932 = vmatpush2.bf16.msra.mxu0 0
        %933 = vmatprep.mubr.bf16.mxu0 0
        %934 = vmatmul.mubr.bf16.gmra.mxu0 %v896
        %v935 = vpop.f32.mrf.mxu0
        %v936 = vadd.f32 0.0, %v935
        %v937 = vpop.f32.mrf.mxu0
        %v938 = vpop.f32.mrf.mxu0
        %v939 = vadd.f32 0.0, %v938
        %v940 = vpop.f32.mrf.mxu0
        %941 = vdwg.mxu0
        %v942 = vadd.f32 %v755, %v936
        %v943 = vadd.f32 %v758, %v939
        %944 = vrot.lane.b32.xlu0 %v393, 116
        %v945 = vpop.permute.xlu0 %944
        %946 = vrot.lane.b32.xlu0 %v393, 84
        %v947 = vpop.permute.xlu0 %946
        %v949 = vsel %vm397, %v945, 0
        %v952 = vsel %vm397, %v947, 0
        %954 = vmatprep.subr.bf16.mxu0 0
        %955 = vmatpush1.bf16.xpose.msra.mxu0 0
        %956 = vmatprep.subr.bf16.mxu0 0
        %957 = vmatpush1.bf16.xpose.msra.mxu0 0
        %958 = vmatprep.subr.bf16.mxu0 0
        %959 = vmatpush1.bf16.xpose.msra.mxu0 0
        %960 = vmatprep.subr.bf16.mxu0 0
        %961 = vmatpush1.bf16.xpose.msra.mxu0 0
        %962 = vmatprep.subr.bf16.mxu0 0
        %963 = vmatpush1.bf16.xpose.msra.mxu0 0
        %964 = vmatprep.subr.bf16.mxu0 0
        %965 = vmatpush1.bf16.xpose.msra.mxu0 0
        %966 = vmatprep.subr.bf16.mxu0 0
        %967 = vmatpush1.bf16.xpose.msra.mxu0 0
        %968 = vmatprep.subr.bf16.mxu0 0
        %969 = vmatpush1.bf16.xpose.msra.mxu0 %v952
        %970 = vmatprep.subr.bf16.mxu0 0
        %971 = vmatpush2.bf16.xpose.msra.mxu0 0
        %972 = vmatprep.subr.bf16.mxu0 0
        %973 = vmatpush2.bf16.xpose.msra.mxu0 0
        %974 = vmatprep.subr.bf16.mxu0 0
        %975 = vmatpush2.bf16.xpose.msra.mxu0 0
        %976 = vmatprep.subr.bf16.mxu0 0
        %977 = vmatpush2.bf16.xpose.msra.mxu0 0
        %978 = vmatprep.subr.bf16.mxu0 0
        %979 = vmatpush2.bf16.xpose.msra.mxu0 0
        %980 = vmatprep.subr.bf16.mxu0 0
        %981 = vmatpush2.bf16.xpose.msra.mxu0 0
        %982 = vmatprep.subr.bf16.mxu0 0
        %983 = vmatpush2.bf16.xpose.msra.mxu0 0
        %984 = vmatprep.subr.bf16.mxu0 0
        %985 = vmatpush2.bf16.xpose.msra.mxu0 0
        %986 = vmatprep.mubr.bf16.mxu0 0
        %987 = vmatmul.mubr.bf16.gmra.mxu0 %v949
        %v988 = vpop.f32.mrf.mxu0
        %v989 = vadd.f32 0.0, %v988
        %v990 = vpop.f32.mrf.mxu0
        %v991 = vpop.f32.mrf.mxu0
        %v992 = vadd.f32 0.0, %v991
        %v993 = vpop.f32.mrf.mxu0
        %994 = vdwg.mxu0
        %v995 = vsel %vm445, %v989, -inf
        %996 = vmax.xlane.f32.xlu0 %v995
        %v997 = vpop.xlane.xlu0 %996
        %v998 = vsel %vm445, %v992, -inf
        %999 = vmax.xlane.f32.xlu0 %v998
        %v1000 = vpop.xlane.xlu0 %999
        %v1001 = vsub.f32 %v989, %v997
        %v1002 = vsub.f32 %v992, %v1000
        %v1003 = vmul.f32 %v1001, 1.442695
        %v1004 = vpow.pop %v1003
        %v1005 = vmul.f32 %v1002, 1.442695
        %v1006 = vpow.pop %v1005
        %s1007 = sld [smem:[#allocation9 + $0x3]]
        %v1008 = vsel %vm445, %v1004, 0.0
        %1009 = vadd.xlane.f32.xlu0 %v1008
        %v1010 = vpop.xlane.xlu0 %1009
        %v1011 = vsel %vm445, %v1006, 0.0
        %1012 = vadd.xlane.f32.xlu0 %v1011
        %v1013 = vpop.xlane.xlu0 %1012
        %v1014 = vrcp.pop %v1010
        %v1015 = vrcp.pop %v1013
        %v1016 = vstv %s1007
        %v1017 = vmul.f32 %v1016, %v1014
        %v1018 = vmul.f32 %v1016, %v1015
        %v1019 = vmul.f32 %v1004, %v1017
        %v1020 = vmul.f32 %v1006, %v1018
        %s1021 = scalar_lea.vmem [#allocation8], 24
        %v1022 = vld [vmem:[%s1021] sm:$0xf]
        %v1023 = vld [vmem:[%s1021 + $0x4] sm:$0xf]
        %v1024 = vunpack.c.l.bf16 %v1022
        %v1025 = vunpack.c.l.bf16 %v1023
        %v1026 = vadd.f32 %v1019, %v1024
        %v1027 = vadd.f32 %v1020, %v1025
        %v1028 = vpack.c.bf16 %v1027, %v1026
        %1029 = vrot.lane.b32.xlu0 %v393, 52
        %v1030 = vpop.permute.xlu0 %1029
        %v1033 = vsel %vm445, %v1028, 0
        %1035 = vmatprep.subr.bf16.mxu0 0
        %1036 = vmatpush1.bf16.msra.mxu0 0
        %1037 = vmatprep.subr.bf16.mxu0 0
        %1038 = vmatpush1.bf16.msra.mxu0 0
        %1039 = vmatprep.subr.bf16.mxu0 0
        %1040 = vmatpush1.bf16.msra.mxu0 0
        %1041 = vmatprep.subr.bf16.mxu0 0
        %1042 = vmatpush1.bf16.msra.mxu0 0
        %1043 = vmatprep.subr.bf16.mxu0 0
        %1044 = vmatpush1.bf16.msra.mxu0 0
        %1045 = vmatprep.subr.bf16.mxu0 0
        %1046 = vmatpush1.bf16.msra.mxu0 0
        %1047 = vmatprep.subr.bf16.mxu0 0
        %1048 = vmatpush1.bf16.msra.mxu0 0
        %1049 = vmatprep.subr.bf16.mxu0 0
        %1050 = vmatpush1.bf16.msra.mxu0 %v1030
        %1051 = vmatprep.subr.bf16.mxu0 0
        %1052 = vmatpush2.bf16.msra.mxu0 0
        %1053 = vmatprep.subr.bf16.mxu0 0
        %1054 = vmatpush2.bf16.msra.mxu0 0
        %1055 = vmatprep.subr.bf16.mxu0 0
        %1056 = vmatpush2.bf16.msra.mxu0 0
        %1057 = vmatprep.subr.bf16.mxu0 0
        %1058 = vmatpush2.bf16.msra.mxu0 0
        %1059 = vmatprep.subr.bf16.mxu0 0
        %1060 = vmatpush2.bf16.msra.mxu0 0
        %1061 = vmatprep.subr.bf16.mxu0 0
        %1062 = vmatpush2.bf16.msra.mxu0 0
        %1063 = vmatprep.subr.bf16.mxu0 0
        %1064 = vmatpush2.bf16.msra.mxu0 0
        %1065 = vmatprep.subr.bf16.mxu0 0
        %1066 = vmatpush2.bf16.msra.mxu0 0
        %1067 = vmatprep.mubr.bf16.mxu0 0
        %1068 = vmatmul.mubr.bf16.gmra.mxu0 %v1033
        %v1069 = vpop.f32.mrf.mxu0
        %v1070 = vadd.f32 0.0, %v1069
        %v1071 = vpop.f32.mrf.mxu0
        %v1072 = vpop.f32.mrf.mxu0
        %v1073 = vadd.f32 0.0, %v1072
        %v1074 = vpop.f32.mrf.mxu0
        %1075 = vdwg.mxu0
        %v1076 = vpack.c.bf16 %v1073, %v1070
        %v1077 = vld [vmem:[#allocation10 + $0x4] sm:$0xc]
        %v1079 = vunpack.c.l.b16 %v1077
        %v1080 = vpack.c.b16 %v1079, %v1079
        %v1081 = vrot.slane %v1080, 2
        %v1083 = vsel %vm397, %v1076, 0
        %v1086 = vsel %vm669, %v1081, 0
        %1088 = vmatprep.subr.bf16.mxu0 0
        %1089 = vmatpush1.bf16.msra.mxu0 0
        %1090 = vmatprep.subr.bf16.mxu0 0
        %1091 = vmatpush1.bf16.msra.mxu0 0
        %1092 = vmatprep.subr.bf16.mxu0 0
        %1093 = vmatpush1.bf16.msra.mxu0 0
        %1094 = vmatprep.subr.bf16.mxu0 0
        %1095 = vmatpush1.bf16.msra.mxu0 0
        %1096 = vmatprep.subr.bf16.mxu0 0
        %1097 = vmatpush1.bf16.msra.mxu0 0
        %1098 = vmatprep.subr.bf16.mxu0 0
        %1099 = vmatpush1.bf16.msra.mxu0 0
        %1100 = vmatprep.subr.bf16.mxu0 0
        %1101 = vmatpush1.bf16.msra.mxu0 0
        %1102 = vmatprep.subr.bf16.mxu0 0
        %1103 = vmatpush1.bf16.msra.mxu0 %v1086
        %1104 = vmatprep.subr.bf16.mxu0 0
        %1105 = vmatpush2.bf16.msra.mxu0 0
        %1106 = vmatprep.subr.bf16.mxu0 0
        %1107 = vmatpush2.bf16.msra.mxu0 0
        %1108 = vmatprep.subr.bf16.mxu0 0
        %1109 = vmatpush2.bf16.msra.mxu0 0
        %1110 = vmatprep.subr.bf16.mxu0 0
        %1111 = vmatpush2.bf16.msra.mxu0 0
        %1112 = vmatprep.subr.bf16.mxu0 0
        %1113 = vmatpush2.bf16.msra.mxu0 0
        %1114 = vmatprep.subr.bf16.mxu0 0
        %1115 = vmatpush2.bf16.msra.mxu0 0
        %1116 = vmatprep.subr.bf16.mxu0 0
        %1117 = vmatpush2.bf16.msra.mxu0 0
        %1118 = vmatprep.subr.bf16.mxu0 0
        %1119 = vmatpush2.bf16.msra.mxu0 0
        %1120 = vmatprep.mubr.bf16.mxu0 0
        %1121 = vmatmul.mubr.bf16.gmra.mxu0 %v1083
        %v1122 = vpop.f32.mrf.mxu0
        %v1123 = vadd.f32 0.0, %v1122
        %v1124 = vpop.f32.mrf.mxu0
        %v1125 = vpop.f32.mrf.mxu0
        %v1126 = vadd.f32 0.0, %v1125
        %v1127 = vpop.f32.mrf.mxu0
        %1128 = vdwg.mxu0
        %v1129 = vadd.f32 %v942, %v1123
        %v1130 = vadd.f32 %v943, %v1126
        %1131 = vrot.lane.b32.xlu0 %v393, 112
        %v1132 = vpop.permute.xlu0 %1131
        %1133 = vrot.lane.b32.xlu0 %v393, 80
        %v1134 = vpop.permute.xlu0 %1133
        %v1136 = vsel %vm397, %v1132, 0
        %v1139 = vsel %vm397, %v1134, 0
        %1141 = vmatprep.subr.bf16.mxu0 0
        %1142 = vmatpush1.bf16.xpose.msra.mxu0 0
        %1143 = vmatprep.subr.bf16.mxu0 0
        %1144 = vmatpush1.bf16.xpose.msra.mxu0 0
        %1145 = vmatprep.subr.bf16.mxu0 0
        %1146 = vmatpush1.bf16.xpose.msra.mxu0 0
        %1147 = vmatprep.subr.bf16.mxu0 0
        %1148 = vmatpush1.bf16.xpose.msra.mxu0 0
        %1149 = vmatprep.subr.bf16.mxu0 0
        %1150 = vmatpush1.bf16.xpose.msra.mxu0 0
        %1151 = vmatprep.subr.bf16.mxu0 0
        %1152 = vmatpush1.bf16.xpose.msra.mxu0 0
        %1153 = vmatprep.subr.bf16.mxu0 0
        %1154 = vmatpush1.bf16.xpose.msra.mxu0 0
        %1155 = vmatprep.subr.bf16.mxu0 0
        %1156 = vmatpush1.bf16.xpose.msra.mxu0 %v1139
        %1157 = vmatprep.subr.bf16.mxu0 0
        %1158 = vmatpush2.bf16.xpose.msra.mxu0 0
        %1159 = vmatprep.subr.bf16.mxu0 0
        %1160 = vmatpush2.bf16.xpose.msra.mxu0 0
        %1161 = vmatprep.subr.bf16.mxu0 0
        %1162 = vmatpush2.bf16.xpose.msra.mxu0 0
        %1163 = vmatprep.subr.bf16.mxu0 0
        %1164 = vmatpush2.bf16.xpose.msra.mxu0 0
        %1165 = vmatprep.subr.bf16.mxu0 0
        %1166 = vmatpush2.bf16.xpose.msra.mxu0 0
        %1167 = vmatprep.subr.bf16.mxu0 0
        %1168 = vmatpush2.bf16.xpose.msra.mxu0 0
        %1169 = vmatprep.subr.bf16.mxu0 0
        %1170 = vmatpush2.bf16.xpose.msra.mxu0 0
        %1171 = vmatprep.subr.bf16.mxu0 0
        %1172 = vmatpush2.bf16.xpose.msra.mxu0 0
        %1173 = vmatprep.mubr.bf16.mxu0 0
        %1174 = vmatmul.mubr.bf16.gmra.mxu0 %v1136
        %v1175 = vpop.f32.mrf.mxu0
        %v1176 = vadd.f32 0.0, %v1175
        %v1177 = vpop.f32.mrf.mxu0
        %v1178 = vpop.f32.mrf.mxu0
        %v1179 = vadd.f32 0.0, %v1178
        %v1180 = vpop.f32.mrf.mxu0
        %1181 = vdwg.mxu0
        %v1182 = vsel %vm445, %v1176, -inf
        %1183 = vmax.xlane.f32.xlu0 %v1182
        %v1184 = vpop.xlane.xlu0 %1183
        %v1185 = vsel %vm445, %v1179, -inf
        %1186 = vmax.xlane.f32.xlu0 %v1185
        %v1187 = vpop.xlane.xlu0 %1186
        %v1188 = vsub.f32 %v1176, %v1184
        %v1189 = vsub.f32 %v1179, %v1187
        %v1190 = vmul.f32 %v1188, 1.442695
        %v1191 = vpow.pop %v1190
        %v1192 = vmul.f32 %v1189, 1.442695
        %v1193 = vpow.pop %v1192
        %s1194 = sld [smem:[#allocation9 + $0x4]]
        %v1195 = vsel %vm445, %v1191, 0.0
        %1196 = vadd.xlane.f32.xlu0 %v1195
        %v1197 = vpop.xlane.xlu0 %1196
        %v1198 = vsel %vm445, %v1193, 0.0
        %1199 = vadd.xlane.f32.xlu0 %v1198
        %v1200 = vpop.xlane.xlu0 %1199
        %v1201 = vrcp.pop %v1197
        %v1202 = vrcp.pop %v1200
        %v1203 = vstv %s1194
        %v1204 = vmul.f32 %v1203, %v1201
        %v1205 = vmul.f32 %v1203, %v1202
        %v1206 = vmul.f32 %v1191, %v1204
        %v1207 = vmul.f32 %v1193, %v1205
        %s1208 = scalar_lea.vmem [#allocation8], 32
        %v1209 = vld [vmem:[%s1208] sm:$0xf]
        %v1210 = vld [vmem:[%s1208 + $0x4] sm:$0xf]
        %v1211 = vunpack.c.l.bf16 %v1209
        %v1212 = vunpack.c.l.bf16 %v1210
        %v1213 = vadd.f32 %v1206, %v1211
        %v1214 = vadd.f32 %v1207, %v1212
        %v1215 = vpack.c.bf16 %v1214, %v1213
        %1216 = vrot.lane.b32.xlu0 %v393, 48
        %v1217 = vpop.permute.xlu0 %1216
        %v1220 = vsel %vm445, %v1215, 0
        %1222 = vmatprep.subr.bf16.mxu0 0
        %1223 = vmatpush1.bf16.msra.mxu0 0
        %1224 = vmatprep.subr.bf16.mxu0 0
        %1225 = vmatpush1.bf16.msra.mxu0 0
        %1226 = vmatprep.subr.bf16.mxu0 0
        %1227 = vmatpush1.bf16.msra.mxu0 0
        %1228 = vmatprep.subr.bf16.mxu0 0
        %1229 = vmatpush1.bf16.msra.mxu0 0
        %1230 = vmatprep.subr.bf16.mxu0 0
        %1231 = vmatpush1.bf16.msra.mxu0 0
        %1232 = vmatprep.subr.bf16.mxu0 0
        %1233 = vmatpush1.bf16.msra.mxu0 0
        %1234 = vmatprep.subr.bf16.mxu0 0
        %1235 = vmatpush1.bf16.msra.mxu0 0
        %1236 = vmatprep.subr.bf16.mxu0 0
        %1237 = vmatpush1.bf16.msra.mxu0 %v1217
        %1238 = vmatprep.subr.bf16.mxu0 0
        %1239 = vmatpush2.bf16.msra.mxu0 0
        %1240 = vmatprep.subr.bf16.mxu0 0
        %1241 = vmatpush2.bf16.msra.mxu0 0
        %1242 = vmatprep.subr.bf16.mxu0 0
        %1243 = vmatpush2.bf16.msra.mxu0 0
        %1244 = vmatprep.subr.bf16.mxu0 0
        %1245 = vmatpush2.bf16.msra.mxu0 0
        %1246 = vmatprep.subr.bf16.mxu0 0
        %1247 = vmatpush2.bf16.msra.mxu0 0
        %1248 = vmatprep.subr.bf16.mxu0 0
        %1249 = vmatpush2.bf16.msra.mxu0 0
        %1250 = vmatprep.subr.bf16.mxu0 0
        %1251 = vmatpush2.bf16.msra.mxu0 0
        %1252 = vmatprep.subr.bf16.mxu0 0
        %1253 = vmatpush2.bf16.msra.mxu0 0
        %1254 = vmatprep.mubr.bf16.mxu0 0
        %1255 = vmatmul.mubr.bf16.gmra.mxu0 %v1220
        %v1256 = vpop.f32.mrf.mxu0
        %v1257 = vadd.f32 0.0, %v1256
        %v1258 = vpop.f32.mrf.mxu0
        %v1259 = vpop.f32.mrf.mxu0
        %v1260 = vadd.f32 0.0, %v1259
        %v1261 = vpop.f32.mrf.mxu0
        %1262 = vdwg.mxu0
        %v1263 = vpack.c.bf16 %v1260, %v1257
        %v1264 = vld [vmem:[#allocation10 + $0x8] sm:$0x3]
        %v1266 = vsel %vm397, %v1263, 0
        %v1269 = vsel %vm669, %v1264, 0
        %1271 = vmatprep.subr.bf16.mxu0 0
        %1272 = vmatpush1.bf16.msra.mxu0 0
        %1273 = vmatprep.subr.bf16.mxu0 0
        %1274 = vmatpush1.bf16.msra.mxu0 0
        %1275 = vmatprep.subr.bf16.mxu0 0
        %1276 = vmatpush1.bf16.msra.mxu0 0
        %1277 = vmatprep.subr.bf16.mxu0 0
        %1278 = vmatpush1.bf16.msra.mxu0 0
        %1279 = vmatprep.subr.bf16.mxu0 0
        %1280 = vmatpush1.bf16.msra.mxu0 0
        %1281 = vmatprep.subr.bf16.mxu0 0
        %1282 = vmatpush1.bf16.msra.mxu0 0
        %1283 = vmatprep.subr.bf16.mxu0 0
        %1284 = vmatpush1.bf16.msra.mxu0 0
        %1285 = vmatprep.subr.bf16.mxu0 0
        %1286 = vmatpush1.bf16.msra.mxu0 %v1269
        %1287 = vmatprep.subr.bf16.mxu0 0
        %1288 = vmatpush2.bf16.msra.mxu0 0
        %1289 = vmatprep.subr.bf16.mxu0 0
        %1290 = vmatpush2.bf16.msra.mxu0 0
        %1291 = vmatprep.subr.bf16.mxu0 0
        %1292 = vmatpush2.bf16.msra.mxu0 0
        %1293 = vmatprep.subr.bf16.mxu0 0
        %1294 = vmatpush2.bf16.msra.mxu0 0
        %1295 = vmatprep.subr.bf16.mxu0 0
        %1296 = vmatpush2.bf16.msra.mxu0 0
        %1297 = vmatprep.subr.bf16.mxu0 0
        %1298 = vmatpush2.bf16.msra.mxu0 0
        %1299 = vmatprep.subr.bf16.mxu0 0
        %1300 = vmatpush2.bf16.msra.mxu0 0
        %1301 = vmatprep.subr.bf16.mxu0 0
        %1302 = vmatpush2.bf16.msra.mxu0 0
        %1303 = vmatprep.mubr.bf16.mxu0 0
        %1304 = vmatmul.mubr.bf16.gmra.mxu0 %v1266
        %v1305 = vpop.f32.mrf.mxu0
        %v1306 = vadd.f32 0.0, %v1305
        %v1307 = vpop.f32.mrf.mxu0
        %v1308 = vpop.f32.mrf.mxu0
        %v1309 = vadd.f32 0.0, %v1308
        %v1310 = vpop.f32.mrf.mxu0
        %1311 = vdwg.mxu0
        %v1312 = vadd.f32 %v1129, %v1306
        %v1313 = vadd.f32 %v1130, %v1309
        %1314 = vrot.lane.b32.xlu0 %v393, 108
        %v1315 = vpop.permute.xlu0 %1314
        %1316 = vrot.lane.b32.xlu0 %v393, 76
        %v1317 = vpop.permute.xlu0 %1316
        %v1319 = vsel %vm397, %v1315, 0
        %v1322 = vsel %vm397, %v1317, 0
        %1324 = vmatprep.subr.bf16.mxu0 0
        %1325 = vmatpush1.bf16.xpose.msra.mxu0 0
        %1326 = vmatprep.subr.bf16.mxu0 0
        %1327 = vmatpush1.bf16.xpose.msra.mxu0 0
        %1328 = vmatprep.subr.bf16.mxu0 0
        %1329 = vmatpush1.bf16.xpose.msra.mxu0 0
        %1330 = vmatprep.subr.bf16.mxu0 0
        %1331 = vmatpush1.bf16.xpose.msra.mxu0 0
        %1332 = vmatprep.subr.bf16.mxu0 0
        %1333 = vmatpush1.bf16.xpose.msra.mxu0 0
        %1334 = vmatprep.subr.bf16.mxu0 0
        %1335 = vmatpush1.bf16.xpose.msra.mxu0 0
        %1336 = vmatprep.subr.bf16.mxu0 0
        %1337 = vmatpush1.bf16.xpose.msra.mxu0 0
        %1338 = vmatprep.subr.bf16.mxu0 0
        %1339 = vmatpush1.bf16.xpose.msra.mxu0 %v1322
        %1340 = vmatprep.subr.bf16.mxu0 0
        %1341 = vmatpush2.bf16.xpose.msra.mxu0 0
        %1342 = vmatprep.subr.bf16.mxu0 0
        %1343 = vmatpush2.bf16.xpose.msra.mxu0 0
        %1344 = vmatprep.subr.bf16.mxu0 0
        %1345 = vmatpush2.bf16.xpose.msra.mxu0 0
        %1346 = vmatprep.subr.bf16.mxu0 0
        %1347 = vmatpush2.bf16.xpose.msra.mxu0 0
        %1348 = vmatprep.subr.bf16.mxu0 0
        %1349 = vmatpush2.bf16.xpose.msra.mxu0 0
        %1350 = vmatprep.subr.bf16.mxu0 0
        %1351 = vmatpush2.bf16.xpose.msra.mxu0 0
        %1352 = vmatprep.subr.bf16.mxu0 0
        %1353 = vmatpush2.bf16.xpose.msra.mxu0 0
        %1354 = vmatprep.subr.bf16.mxu0 0
        %1355 = vmatpush2.bf16.xpose.msra.mxu0 0
        %1356 = vmatprep.mubr.bf16.mxu0 0
        %1357 = vmatmul.mubr.bf16.gmra.mxu0 %v1319
        %v1358 = vpop.f32.mrf.mxu0
        %v1359 = vadd.f32 0.0, %v1358
        %v1360 = vpop.f32.mrf.mxu0
        %v1361 = vpop.f32.mrf.mxu0
        %v1362 = vadd.f32 0.0, %v1361
        %v1363 = vpop.f32.mrf.mxu0
        %1364 = vdwg.mxu0
        %v1365 = vsel %vm445, %v1359, -inf
        %1366 = vmax.xlane.f32.xlu0 %v1365
        %v1367 = vpop.xlane.xlu0 %1366
        %v1368 = vsel %vm445, %v1362, -inf
        %1369 = vmax.xlane.f32.xlu0 %v1368
        %v1370 = vpop.xlane.xlu0 %1369
        %v1371 = vsub.f32 %v1359, %v1367
        %v1372 = vsub.f32 %v1362, %v1370
        %v1373 = vmul.f32 %v1371, 1.442695
        %v1374 = vpow.pop %v1373
        %v1375 = vmul.f32 %v1372, 1.442695
        %v1376 = vpow.pop %v1375
        %s1377 = sld [smem:[#allocation9 + $0x5]]
        %v1378 = vsel %vm445, %v1374, 0.0
        %1379 = vadd.xlane.f32.xlu0 %v1378
        %v1380 = vpop.xlane.xlu0 %1379
        %v1381 = vsel %vm445, %v1376, 0.0
        %1382 = vadd.xlane.f32.xlu0 %v1381
        %v1383 = vpop.xlane.xlu0 %1382
        %v1384 = vrcp.pop %v1380
        %v1385 = vrcp.pop %v1383
        %v1386 = vstv %s1377
        %v1387 = vmul.f32 %v1386, %v1384
        %v1388 = vmul.f32 %v1386, %v1385
        %v1389 = vmul.f32 %v1374, %v1387
        %v1390 = vmul.f32 %v1376, %v1388
        %s1391 = scalar_lea.vmem [#allocation8], 40
        %v1392 = vld [vmem:[%s1391] sm:$0xf]
        %v1393 = vld [vmem:[%s1391 + $0x4] sm:$0xf]
        %v1394 = vunpack.c.l.bf16 %v1392
        %v1395 = vunpack.c.l.bf16 %v1393
        %v1396 = vadd.f32 %v1389, %v1394
        %v1397 = vadd.f32 %v1390, %v1395
        %v1398 = vpack.c.bf16 %v1397, %v1396
        %1399 = vrot.lane.b32.xlu0 %v393, 44
        %v1400 = vpop.permute.xlu0 %1399
        %v1403 = vsel %vm445, %v1398, 0
        %1405 = vmatprep.subr.bf16.mxu0 0
        %1406 = vmatpush1.bf16.msra.mxu0 0
        %1407 = vmatprep.subr.bf16.mxu0 0
        %1408 = vmatpush1.bf16.msra.mxu0 0
        %1409 = vmatprep.subr.bf16.mxu0 0
        %1410 = vmatpush1.bf16.msra.mxu0 0
        %1411 = vmatprep.subr.bf16.mxu0 0
        %1412 = vmatpush1.bf16.msra.mxu0 0
        %1413 = vmatprep.subr.bf16.mxu0 0
        %1414 = vmatpush1.bf16.msra.mxu0 0
        %1415 = vmatprep.subr.bf16.mxu0 0
        %1416 = vmatpush1.bf16.msra.mxu0 0
        %1417 = vmatprep.subr.bf16.mxu0 0
        %1418 = vmatpush1.bf16.msra.mxu0 0
        %1419 = vmatprep.subr.bf16.mxu0 0
        %1420 = vmatpush1.bf16.msra.mxu0 %v1400
        %1421 = vmatprep.subr.bf16.mxu0 0
        %1422 = vmatpush2.bf16.msra.mxu0 0
        %1423 = vmatprep.subr.bf16.mxu0 0
        %1424 = vmatpush2.bf16.msra.mxu0 0
        %1425 = vmatprep.subr.bf16.mxu0 0
        %1426 = vmatpush2.bf16.msra.mxu0 0
        %1427 = vmatprep.subr.bf16.mxu0 0
        %1428 = vmatpush2.bf16.msra.mxu0 0
        %1429 = vmatprep.subr.bf16.mxu0 0
        %1430 = vmatpush2.bf16.msra.mxu0 0
        %1431 = vmatprep.subr.bf16.mxu0 0
        %1432 = vmatpush2.bf16.msra.mxu0 0
        %1433 = vmatprep.subr.bf16.mxu0 0
        %1434 = vmatpush2.bf16.msra.mxu0 0
        %1435 = vmatprep.subr.bf16.mxu0 0
        %1436 = vmatpush2.bf16.msra.mxu0 0
        %1437 = vmatprep.mubr.bf16.mxu0 0
        %1438 = vmatmul.mubr.bf16.gmra.mxu0 %v1403
        %v1439 = vpop.f32.mrf.mxu0
        %v1440 = vadd.f32 0.0, %v1439
        %v1441 = vpop.f32.mrf.mxu0
        %v1442 = vpop.f32.mrf.mxu0
        %v1443 = vadd.f32 0.0, %v1442
        %v1444 = vpop.f32.mrf.mxu0
        %1445 = vdwg.mxu0
        %v1446 = vpack.c.bf16 %v1443, %v1440
        %v1447 = vld [vmem:[#allocation10 + $0x8] sm:$0xc]
        %v1449 = vunpack.c.l.b16 %v1447
        %v1450 = vpack.c.b16 %v1449, %v1449
        %v1451 = vrot.slane %v1450, 2
        %v1453 = vsel %vm397, %v1446, 0
        %v1456 = vsel %vm669, %v1451, 0
        %1458 = vmatprep.subr.bf16.mxu0 0
        %1459 = vmatpush1.bf16.msra.mxu0 0
        %1460 = vmatprep.subr.bf16.mxu0 0
        %1461 = vmatpush1.bf16.msra.mxu0 0
        %1462 = vmatprep.subr.bf16.mxu0 0
        %1463 = vmatpush1.bf16.msra.mxu0 0
        %1464 = vmatprep.subr.bf16.mxu0 0
        %1465 = vmatpush1.bf16.msra.mxu0 0
        %1466 = vmatprep.subr.bf16.mxu0 0
        %1467 = vmatpush1.bf16.msra.mxu0 0
        %1468 = vmatprep.subr.bf16.mxu0 0
        %1469 = vmatpush1.bf16.msra.mxu0 0
        %1470 = vmatprep.subr.bf16.mxu0 0
        %1471 = vmatpush1.bf16.msra.mxu0 0
        %1472 = vmatprep.subr.bf16.mxu0 0
        %1473 = vmatpush1.bf16.msra.mxu0 %v1456
        %1474 = vmatprep.subr.bf16.mxu0 0
        %1475 = vmatpush2.bf16.msra.mxu0 0
        %1476 = vmatprep.subr.bf16.mxu0 0
        %1477 = vmatpush2.bf16.msra.mxu0 0
        %1478 = vmatprep.subr.bf16.mxu0 0
        %1479 = vmatpush2.bf16.msra.mxu0 0
        %1480 = vmatprep.subr.bf16.mxu0 0
        %1481 = vmatpush2.bf16.msra.mxu0 0
        %1482 = vmatprep.subr.bf16.mxu0 0
        %1483 = vmatpush2.bf16.msra.mxu0 0
        %1484 = vmatprep.subr.bf16.mxu0 0
        %1485 = vmatpush2.bf16.msra.mxu0 0
        %1486 = vmatprep.subr.bf16.mxu0 0
        %1487 = vmatpush2.bf16.msra.mxu0 0
        %1488 = vmatprep.subr.bf16.mxu0 0
        %1489 = vmatpush2.bf16.msra.mxu0 0
        %1490 = vmatprep.mubr.bf16.mxu0 0
        %1491 = vmatmul.mubr.bf16.gmra.mxu0 %v1453
        %v1492 = vpop.f32.mrf.mxu0
        %v1493 = vadd.f32 0.0, %v1492
        %v1494 = vpop.f32.mrf.mxu0
        %v1495 = vpop.f32.mrf.mxu0
        %v1496 = vadd.f32 0.0, %v1495
        %v1497 = vpop.f32.mrf.mxu0
        %1498 = vdwg.mxu0
        %v1499 = vadd.f32 %v1312, %v1493
        %v1500 = vadd.f32 %v1313, %v1496
        %1501 = vrot.lane.b32.xlu0 %v393, 104
        %v1502 = vpop.permute.xlu0 %1501
        %1503 = vrot.lane.b32.xlu0 %v393, 72
        %v1504 = vpop.permute.xlu0 %1503
        %v1506 = vsel %vm397, %v1502, 0
        %v1509 = vsel %vm397, %v1504, 0
        %1511 = vmatprep.subr.bf16.mxu0 0
        %1512 = vmatpush1.bf16.xpose.msra.mxu0 0
        %1513 = vmatprep.subr.bf16.mxu0 0
        %1514 = vmatpush1.bf16.xpose.msra.mxu0 0
        %1515 = vmatprep.subr.bf16.mxu0 0
        %1516 = vmatpush1.bf16.xpose.msra.mxu0 0
        %1517 = vmatprep.subr.bf16.mxu0 0
        %1518 = vmatpush1.bf16.xpose.msra.mxu0 0
        %1519 = vmatprep.subr.bf16.mxu0 0
        %1520 = vmatpush1.bf16.xpose.msra.mxu0 0
        %1521 = vmatprep.subr.bf16.mxu0 0
        %1522 = vmatpush1.bf16.xpose.msra.mxu0 0
        %1523 = vmatprep.subr.bf16.mxu0 0
        %1524 = vmatpush1.bf16.xpose.msra.mxu0 0
        %1525 = vmatprep.subr.bf16.mxu0 0
        %1526 = vmatpush1.bf16.xpose.msra.mxu0 %v1509
        %1527 = vmatprep.subr.bf16.mxu0 0
        %1528 = vmatpush2.bf16.xpose.msra.mxu0 0
        %1529 = vmatprep.subr.bf16.mxu0 0
        %1530 = vmatpush2.bf16.xpose.msra.mxu0 0
        %1531 = vmatprep.subr.bf16.mxu0 0
        %1532 = vmatpush2.bf16.xpose.msra.mxu0 0
        %1533 = vmatprep.subr.bf16.mxu0 0
        %1534 = vmatpush2.bf16.xpose.msra.mxu0 0
        %1535 = vmatprep.subr.bf16.mxu0 0
        %1536 = vmatpush2.bf16.xpose.msra.mxu0 0
        %1537 = vmatprep.subr.bf16.mxu0 0
        %1538 = vmatpush2.bf16.xpose.msra.mxu0 0
        %1539 = vmatprep.subr.bf16.mxu0 0
        %1540 = vmatpush2.bf16.xpose.msra.mxu0 0
        %1541 = vmatprep.subr.bf16.mxu0 0
        %1542 = vmatpush2.bf16.xpose.msra.mxu0 0
        %1543 = vmatprep.mubr.bf16.mxu0 0
        %1544 = vmatmul.mubr.bf16.gmra.mxu0 %v1506
        %v1545 = vpop.f32.mrf.mxu0
        %v1546 = vadd.f32 0.0, %v1545
        %v1547 = vpop.f32.mrf.mxu0
        %v1548 = vpop.f32.mrf.mxu0
        %v1549 = vadd.f32 0.0, %v1548
        %v1550 = vpop.f32.mrf.mxu0
        %1551 = vdwg.mxu0
        %v1552 = vsel %vm445, %v1546, -inf
        %1553 = vmax.xlane.f32.xlu0 %v1552
        %v1554 = vpop.xlane.xlu0 %1553
        %v1555 = vsel %vm445, %v1549, -inf
        %1556 = vmax.xlane.f32.xlu0 %v1555
        %v1557 = vpop.xlane.xlu0 %1556
        %v1558 = vsub.f32 %v1546, %v1554
        %v1559 = vsub.f32 %v1549, %v1557
        %v1560 = vmul.f32 %v1558, 1.442695
        %v1561 = vpow.pop %v1560
        %v1562 = vmul.f32 %v1559, 1.442695
        %v1563 = vpow.pop %v1562
        %s1564 = sld [smem:[#allocation9 + $0x6]]
        %v1565 = vsel %vm445, %v1561, 0.0
        %1566 = vadd.xlane.f32.xlu0 %v1565
        %v1567 = vpop.xlane.xlu0 %1566
        %v1568 = vsel %vm445, %v1563, 0.0
        %1569 = vadd.xlane.f32.xlu0 %v1568
        %v1570 = vpop.xlane.xlu0 %1569
        %v1571 = vrcp.pop %v1567
        %v1572 = vrcp.pop %v1570
        %v1573 = vstv %s1564
        %v1574 = vmul.f32 %v1573, %v1571
        %v1575 = vmul.f32 %v1573, %v1572
        %v1576 = vmul.f32 %v1561, %v1574
        %v1577 = vmul.f32 %v1563, %v1575
        %s1578 = scalar_lea.vmem [#allocation8], 48
        %v1579 = vld [vmem:[%s1578] sm:$0xf]
        %v1580 = vld [vmem:[%s1578 + $0x4] sm:$0xf]
        %v1581 = vunpack.c.l.bf16 %v1579
        %v1582 = vunpack.c.l.bf16 %v1580
        %v1583 = vadd.f32 %v1576, %v1581
        %v1584 = vadd.f32 %v1577, %v1582
        %v1585 = vpack.c.bf16 %v1584, %v1583
        %1586 = vrot.lane.b32.xlu0 %v393, 40
        %v1587 = vpop.permute.xlu0 %1586
        %v1590 = vsel %vm445, %v1585, 0
        %1592 = vmatprep.subr.bf16.mxu0 0
        %1593 = vmatpush1.bf16.msra.mxu0 0
        %1594 = vmatprep.subr.bf16.mxu0 0
        %1595 = vmatpush1.bf16.msra.mxu0 0
        %1596 = vmatprep.subr.bf16.mxu0 0
        %1597 = vmatpush1.bf16.msra.mxu0 0
        %1598 = vmatprep.subr.bf16.mxu0 0
        %1599 = vmatpush1.bf16.msra.mxu0 0
        %1600 = vmatprep.subr.bf16.mxu0 0
        %1601 = vmatpush1.bf16.msra.mxu0 0
        %1602 = vmatprep.subr.bf16.mxu0 0
        %1603 = vmatpush1.bf16.msra.mxu0 0
        %1604 = vmatprep.subr.bf16.mxu0 0
        %1605 = vmatpush1.bf16.msra.mxu0 0
        %1606 = vmatprep.subr.bf16.mxu0 0
        %1607 = vmatpush1.bf16.msra.mxu0 %v1587
        %1608 = vmatprep.subr.bf16.mxu0 0
        %1609 = vmatpush2.bf16.msra.mxu0 0
        %1610 = vmatprep.subr.bf16.mxu0 0
        %1611 = vmatpush2.bf16.msra.mxu0 0
        %1612 = vmatprep.subr.bf16.mxu0 0
        %1613 = vmatpush2.bf16.msra.mxu0 0
        %1614 = vmatprep.subr.bf16.mxu0 0
        %1615 = vmatpush2.bf16.msra.mxu0 0
        %1616 = vmatprep.subr.bf16.mxu0 0
        %1617 = vmatpush2.bf16.msra.mxu0 0
        %1618 = vmatprep.subr.bf16.mxu0 0
        %1619 = vmatpush2.bf16.msra.mxu0 0
        %1620 = vmatprep.subr.bf16.mxu0 0
        %1621 = vmatpush2.bf16.msra.mxu0 0
        %1622 = vmatprep.subr.bf16.mxu0 0
        %1623 = vmatpush2.bf16.msra.mxu0 0
        %1624 = vmatprep.mubr.bf16.mxu0 0
        %1625 = vmatmul.mubr.bf16.gmra.mxu0 %v1590
        %v1626 = vpop.f32.mrf.mxu0
        %v1627 = vadd.f32 0.0, %v1626
        %v1628 = vpop.f32.mrf.mxu0
        %v1629 = vpop.f32.mrf.mxu0
        %v1630 = vadd.f32 0.0, %v1629
        %v1631 = vpop.f32.mrf.mxu0
        %1632 = vdwg.mxu0
        %v1633 = vpack.c.bf16 %v1630, %v1627
        %v1634 = vld [vmem:[#allocation10 + $0xc] sm:$0x3]
        %v1636 = vsel %vm397, %v1633, 0
        %v1639 = vsel %vm669, %v1634, 0
        %1641 = vmatprep.subr.bf16.mxu0 0
        %1642 = vmatpush1.bf16.msra.mxu0 0
        %1643 = vmatprep.subr.bf16.mxu0 0
        %1644 = vmatpush1.bf16.msra.mxu0 0
        %1645 = vmatprep.subr.bf16.mxu0 0
        %1646 = vmatpush1.bf16.msra.mxu0 0
        %1647 = vmatprep.subr.bf16.mxu0 0
        %1648 = vmatpush1.bf16.msra.mxu0 0
        %1649 = vmatprep.subr.bf16.mxu0 0
        %1650 = vmatpush1.bf16.msra.mxu0 0
        %1651 = vmatprep.subr.bf16.mxu0 0
        %1652 = vmatpush1.bf16.msra.mxu0 0
        %1653 = vmatprep.subr.bf16.mxu0 0
        %1654 = vmatpush1.bf16.msra.mxu0 0
        %1655 = vmatprep.subr.bf16.mxu0 0
        %1656 = vmatpush1.bf16.msra.mxu0 %v1639
        %1657 = vmatprep.subr.bf16.mxu0 0
        %1658 = vmatpush2.bf16.msra.mxu0 0
        %1659 = vmatprep.subr.bf16.mxu0 0
        %1660 = vmatpush2.bf16.msra.mxu0 0
        %1661 = vmatprep.subr.bf16.mxu0 0
        %1662 = vmatpush2.bf16.msra.mxu0 0
        %1663 = vmatprep.subr.bf16.mxu0 0
        %1664 = vmatpush2.bf16.msra.mxu0 0
        %1665 = vmatprep.subr.bf16.mxu0 0
        %1666 = vmatpush2.bf16.msra.mxu0 0
        %1667 = vmatprep.subr.bf16.mxu0 0
        %1668 = vmatpush2.bf16.msra.mxu0 0
        %1669 = vmatprep.subr.bf16.mxu0 0
        %1670 = vmatpush2.bf16.msra.mxu0 0
        %1671 = vmatprep.subr.bf16.mxu0 0
        %1672 = vmatpush2.bf16.msra.mxu0 0
        %1673 = vmatprep.mubr.bf16.mxu0 0
        %1674 = vmatmul.mubr.bf16.gmra.mxu0 %v1636
        %v1675 = vpop.f32.mrf.mxu0
        %v1676 = vadd.f32 0.0, %v1675
        %v1677 = vpop.f32.mrf.mxu0
        %v1678 = vpop.f32.mrf.mxu0
        %v1679 = vadd.f32 0.0, %v1678
        %v1680 = vpop.f32.mrf.mxu0
        %1681 = vdwg.mxu0
        %v1682 = vadd.f32 %v1499, %v1676
        %v1683 = vadd.f32 %v1500, %v1679
        %1684 = vrot.lane.b32.xlu0 %v393, 100
        %v1685 = vpop.permute.xlu0 %1684
        %1686 = vrot.lane.b32.xlu0 %v393, 68
        %v1687 = vpop.permute.xlu0 %1686
        %v1689 = vsel %vm397, %v1685, 0
        %v1692 = vsel %vm397, %v1687, 0
        %1694 = vmatprep.subr.bf16.mxu0 0
        %1695 = vmatpush1.bf16.xpose.msra.mxu0 0
        %1696 = vmatprep.subr.bf16.mxu0 0
        %1697 = vmatpush1.bf16.xpose.msra.mxu0 0
        %1698 = vmatprep.subr.bf16.mxu0 0
        %1699 = vmatpush1.bf16.xpose.msra.mxu0 0
        %1700 = vmatprep.subr.bf16.mxu0 0
        %1701 = vmatpush1.bf16.xpose.msra.mxu0 0
        %1702 = vmatprep.subr.bf16.mxu0 0
        %1703 = vmatpush1.bf16.xpose.msra.mxu0 0
        %1704 = vmatprep.subr.bf16.mxu0 0
        %1705 = vmatpush1.bf16.xpose.msra.mxu0 0
        %1706 = vmatprep.subr.bf16.mxu0 0
        %1707 = vmatpush1.bf16.xpose.msra.mxu0 0
        %1708 = vmatprep.subr.bf16.mxu0 0
        %1709 = vmatpush1.bf16.xpose.msra.mxu0 %v1692
        %1710 = vmatprep.subr.bf16.mxu0 0
        %1711 = vmatpush2.bf16.xpose.msra.mxu0 0
        %1712 = vmatprep.subr.bf16.mxu0 0
        %1713 = vmatpush2.bf16.xpose.msra.mxu0 0
        %1714 = vmatprep.subr.bf16.mxu0 0
        %1715 = vmatpush2.bf16.xpose.msra.mxu0 0
        %1716 = vmatprep.subr.bf16.mxu0 0
        %1717 = vmatpush2.bf16.xpose.msra.mxu0 0
        %1718 = vmatprep.subr.bf16.mxu0 0
        %1719 = vmatpush2.bf16.xpose.msra.mxu0 0
        %1720 = vmatprep.subr.bf16.mxu0 0
        %1721 = vmatpush2.bf16.xpose.msra.mxu0 0
        %1722 = vmatprep.subr.bf16.mxu0 0
        %1723 = vmatpush2.bf16.xpose.msra.mxu0 0
        %1724 = vmatprep.subr.bf16.mxu0 0
        %1725 = vmatpush2.bf16.xpose.msra.mxu0 0
        %1726 = vmatprep.mubr.bf16.mxu0 0
        %1727 = vmatmul.mubr.bf16.gmra.mxu0 %v1689
        %v1728 = vpop.f32.mrf.mxu0
        %v1729 = vadd.f32 0.0, %v1728
        %v1730 = vpop.f32.mrf.mxu0
        %v1731 = vpop.f32.mrf.mxu0
        %v1732 = vadd.f32 0.0, %v1731
        %v1733 = vpop.f32.mrf.mxu0
        %1734 = vdwg.mxu0
        %v1735 = vsel %vm445, %v1729, -inf
        %1736 = vmax.xlane.f32.xlu0 %v1735
        %v1737 = vpop.xlane.xlu0 %1736
        %v1738 = vsel %vm445, %v1732, -inf
        %1739 = vmax.xlane.f32.xlu0 %v1738
        %v1740 = vpop.xlane.xlu0 %1739
        %v1741 = vsub.f32 %v1729, %v1737
        %v1742 = vsub.f32 %v1732, %v1740
        %v1743 = vmul.f32 %v1741, 1.442695
        %v1744 = vpow.pop %v1743
        %v1745 = vmul.f32 %v1742, 1.442695
        %v1746 = vpow.pop %v1745
        %s1747 = sld [smem:[#allocation9 + $0x7]]
        %v1748 = vsel %vm445, %v1744, 0.0
        %1749 = vadd.xlane.f32.xlu0 %v1748
        %v1750 = vpop.xlane.xlu0 %1749
        %v1751 = vsel %vm445, %v1746, 0.0
        %1752 = vadd.xlane.f32.xlu0 %v1751
        %v1753 = vpop.xlane.xlu0 %1752
        %v1754 = vrcp.pop %v1750
        %v1755 = vrcp.pop %v1753
        %v1756 = vstv %s1747
        %v1757 = vmul.f32 %v1756, %v1754
        %v1758 = vmul.f32 %v1756, %v1755
        %v1759 = vmul.f32 %v1744, %v1757
        %v1760 = vmul.f32 %v1746, %v1758
        %s1761 = scalar_lea.vmem [#allocation8], 56
        %v1762 = vld [vmem:[%s1761] sm:$0xf]
        %v1763 = vld [vmem:[%s1761 + $0x4] sm:$0xf]
        %v1764 = vunpack.c.l.bf16 %v1762
        %v1765 = vunpack.c.l.bf16 %v1763
        %v1766 = vadd.f32 %v1759, %v1764
        %v1767 = vadd.f32 %v1760, %v1765
        %v1768 = vpack.c.bf16 %v1767, %v1766
        %1769 = vrot.lane.b32.xlu0 %v393, 36
        %v1770 = vpop.permute.xlu0 %1769
        %v1773 = vsel %vm445, %v1768, 0
        %1775 = vmatprep.subr.bf16.mxu0 0
        %1776 = vmatpush1.bf16.msra.mxu0 0
        %1777 = vmatprep.subr.bf16.mxu0 0
        %1778 = vmatpush1.bf16.msra.mxu0 0
        %1779 = vmatprep.subr.bf16.mxu0 0
        %1780 = vmatpush1.bf16.msra.mxu0 0
        %1781 = vmatprep.subr.bf16.mxu0 0
        %1782 = vmatpush1.bf16.msra.mxu0 0
        %1783 = vmatprep.subr.bf16.mxu0 0
        %1784 = vmatpush1.bf16.msra.mxu0 0
        %1785 = vmatprep.subr.bf16.mxu0 0
        %1786 = vmatpush1.bf16.msra.mxu0 0
        %1787 = vmatprep.subr.bf16.mxu0 0
        %1788 = vmatpush1.bf16.msra.mxu0 0
        %1789 = vmatprep.subr.bf16.mxu0 0
        %1790 = vmatpush1.bf16.msra.mxu0 %v1770
        %1791 = vmatprep.subr.bf16.mxu0 0
        %1792 = vmatpush2.bf16.msra.mxu0 0
        %1793 = vmatprep.subr.bf16.mxu0 0
        %1794 = vmatpush2.bf16.msra.mxu0 0
        %1795 = vmatprep.subr.bf16.mxu0 0
        %1796 = vmatpush2.bf16.msra.mxu0 0
        %1797 = vmatprep.subr.bf16.mxu0 0
        %1798 = vmatpush2.bf16.msra.mxu0 0
        %1799 = vmatprep.subr.bf16.mxu0 0
        %1800 = vmatpush2.bf16.msra.mxu0 0
        %1801 = vmatprep.subr.bf16.mxu0 0
        %1802 = vmatpush2.bf16.msra.mxu0 0
        %1803 = vmatprep.subr.bf16.mxu0 0
        %1804 = vmatpush2.bf16.msra.mxu0 0
        %1805 = vmatprep.subr.bf16.mxu0 0
        %1806 = vmatpush2.bf16.msra.mxu0 0
        %1807 = vmatprep.mubr.bf16.mxu0 0
        %1808 = vmatmul.mubr.bf16.gmra.mxu0 %v1773
        %v1809 = vpop.f32.mrf.mxu0
        %v1810 = vadd.f32 0.0, %v1809
        %v1811 = vpop.f32.mrf.mxu0
        %v1812 = vpop.f32.mrf.mxu0
        %v1813 = vadd.f32 0.0, %v1812
        %v1814 = vpop.f32.mrf.mxu0
        %1815 = vdwg.mxu0
        %v1816 = vpack.c.bf16 %v1813, %v1810
        %v1817 = vld [vmem:[#allocation10 + $0xc] sm:$0xc]
        %v1819 = vunpack.c.l.b16 %v1817
        %v1820 = vpack.c.b16 %v1819, %v1819
        %v1821 = vrot.slane %v1820, 2
        %v1823 = vsel %vm397, %v1816, 0
        %v1826 = vsel %vm669, %v1821, 0
        %1828 = vmatprep.subr.bf16.mxu0 0
        %1829 = vmatpush1.bf16.msra.mxu0 0
        %1830 = vmatprep.subr.bf16.mxu0 0
        %1831 = vmatpush1.bf16.msra.mxu0 0
        %1832 = vmatprep.subr.bf16.mxu0 0
        %1833 = vmatpush1.bf16.msra.mxu0 0
        %1834 = vmatprep.subr.bf16.mxu0 0
        %1835 = vmatpush1.bf16.msra.mxu0 0
        %1836 = vmatprep.subr.bf16.mxu0 0
        %1837 = vmatpush1.bf16.msra.mxu0 0
        %1838 = vmatprep.subr.bf16.mxu0 0
        %1839 = vmatpush1.bf16.msra.mxu0 0
        %1840 = vmatprep.subr.bf16.mxu0 0
        %1841 = vmatpush1.bf16.msra.mxu0 0
        %1842 = vmatprep.subr.bf16.mxu0 0
        %1843 = vmatpush1.bf16.msra.mxu0 %v1826
        %1844 = vmatprep.subr.bf16.mxu0 0
        %1845 = vmatpush2.bf16.msra.mxu0 0
        %1846 = vmatprep.subr.bf16.mxu0 0
        %1847 = vmatpush2.bf16.msra.mxu0 0
        %1848 = vmatprep.subr.bf16.mxu0 0
        %1849 = vmatpush2.bf16.msra.mxu0 0
        %1850 = vmatprep.subr.bf16.mxu0 0
        %1851 = vmatpush2.bf16.msra.mxu0 0
        %1852 = vmatprep.subr.bf16.mxu0 0
        %1853 = vmatpush2.bf16.msra.mxu0 0
        %1854 = vmatprep.subr.bf16.mxu0 0
        %1855 = vmatpush2.bf16.msra.mxu0 0
        %1856 = vmatprep.subr.bf16.mxu0 0
        %1857 = vmatpush2.bf16.msra.mxu0 0
        %1858 = vmatprep.subr.bf16.mxu0 0
        %1859 = vmatpush2.bf16.msra.mxu0 0
        %1860 = vmatprep.mubr.bf16.mxu0 0
        %1861 = vmatmul.mubr.bf16.gmra.mxu0 %v1823
        %v1862 = vpop.f32.mrf.mxu0
        %v1863 = vadd.f32 0.0, %v1862
        %v1864 = vpop.f32.mrf.mxu0
        %v1865 = vpop.f32.mrf.mxu0
        %v1866 = vadd.f32 0.0, %v1865
        %v1867 = vpop.f32.mrf.mxu0
        %1868 = vdwg.mxu0
        %v1869 = vadd.f32 %v1682, %v1863
        %v1870 = vadd.f32 %v1683, %v1866
        %v1871 = vld [vmem:[%s5] sm:$0x1]
        %v1873 = vlaneseq
        %v1874 = vshrl.u32 %v1873, 7
        %v1875 = vsub.s32 0, %v1874
        %v1876 = vrot.slane %v1871, %v1875
        %v1878 = vadd.f32 %v1869, %v1876
        %v1879 = vadd.f32 %v1870, %v1876
        %1880 = vst.msk [vmem:[%s327] sm:$0xff] %vm348, %v1878
        %1881 = vst.msk [vmem:[%s327 + $0x8] sm:$0xff] %vm348, %v1879
        %s1882 = sand.u32 %s165, 1
        %s1883 = scalar_lea.sflag [#allocation4], %s1882
        %s1884 = sand.u32 %s165, 1
        %s1885 = smul.addr %s1884, 16
        %s1886 = scalar_lea.vmem [#allocation12], %s1885
        // Predicated region
        $region65: #{tpu_custom_call.1} parent=43 // pred_check
          %p1887 = pneg %p175
        $region66: #{tpu_custom_call.1} parent=43 // pred_check_branch
          %1889 = sbr.rel (%p1887) target = $region68
        $region67: #{tpu_custom_call.1} parent=43 // pred_region
          %s1891 = ssub.s32 256, 256
          %1892 = vsyncadd %s1883, %s1891
          %s1893 = smul.addr %s26, 2
          %s1894 = smul.addr %s1893, 128
          %s1895 = scalar_lea.hbm %s6, %s1894
          %s1896 = sshll.u32 %s1886, 4
          %s1897 = int_to_ptr.vmem [resolvable:$true] %s1896
          %1902 = dma.vmem_to_hbm [thread:$0]  %s1897, 256, %s1895, %s1883, 128, 128, 8
        $region68: #{tpu_custom_call.1} parent=43 // pred_fallthru
          _
      $region44: #{tpu_custom_call.1} parent=5 // pred_fallthru
        _
      %p1903 = scmp.le.s32.totalorder 2, %s21
      // Predicated region
      $region69: #{tpu_custom_call.1} parent=5 // pred_check
        %p1904 = pneg %p1903
      $region70: #{tpu_custom_call.1} parent=5 // pred_check_branch
        %1906 = sbr.rel (%p1904) target = $region72
      $region71: #{tpu_custom_call.1} parent=5 // pred_region
        %s1907 = ssub.s32 %s21, 2
        // Predicated region
        $region73: #{tpu_custom_call.1} parent=71 // pred_check
          %p1908 = pneg %p181
        $region74: #{tpu_custom_call.1} parent=71 // pred_check_branch
          %1910 = sbr.rel (%p1908) target = $region76
        $region75: #{tpu_custom_call.1} parent=71 // pred_region
          %s1911 = sand.u32 %s166, 1
          %s1912 = scalar_lea.sflag [#allocation4], %s1911
          %s1913 = sand.u32 %s166, 1
          %s1914 = smul.addr %s1913, 16
          %s1915 = scalar_lea.vmem [#allocation12], %s1914
          %1916 = dma.done %s1912, 256
        $region76: #{tpu_custom_call.1} parent=71 // pred_fallthru
          _
      $region72: #{tpu_custom_call.1} parent=5 // pred_fallthru
        _
    $region6: #{tpu_custom_call.1} parent=1 // loop_footer
      %s25 = sadd.s32 1, %s21
    $region7: #{tpu_custom_call.1} parent=1 // loop_footer_branch
      %20 = sbr.rel target = $region3
    $region8: #{tpu_custom_call.1} parent=1 // loop_exit
      _
    %1917 = vsyncpa [#allocation3], 1
    %s1918 = scalar_lea.sflag [#allocation3], 1
    %1919 = vsyncpa %s1918, 1
    %1920 = vsyncpa [#allocation7], 1
    %1921 = vsyncpa [#allocation11], 1
    %1922 = vsyncpa [#allocation4], 1
    %s1923 = scalar_lea.sflag [#allocation4], 1
    %1924 = vsyncpa %s1923, 1
    %1925 = vsyncpa [#allocation5], 1
    %s1926 = scalar_lea.sflag [#allocation5], 1
    %1927 = vsyncpa %s1926, 1

// kernel: tpu_custom_call.1
$region0: #{tpu_custom_call.1}
  #allocation0 [shape = 'u32[]', space=smem, size = 0x4, offset = 0x4, fixed_abs, tag = 'smem constant byte address 0x4 - core index']
  #allocation1 [shape = 'u32[144,128]{1,0:T(1,128)}', space=vmem, size = 0x12000, scoped, tag = 'internal scratch']
  %s0 = inlined_call_operand.hbm [shape: f32[2,16,32], index: 0, kind: input, shape index: {}]
  %s1 = inlined_call_operand.hbm [shape: bf16[32,96], index: 1, kind: input, shape index: {}]
  %s2 = inlined_call_operand.hbm [shape: bf16[8,16,16], index: 2, kind: input, shape index: {}]
  %s3 = inlined_call_operand.vmem [shape: f32[8], index: 3, kind: input, shape index: {}]
  %s4 = inlined_call_operand.hbm [shape: bf16[32,32], index: 4, kind: input, shape index: {}]
  %s5 = inlined_call_operand.vmem [shape: f32[1,32], index: 5, kind: input, shape index: {}]
  %s6 = inlined_call_operand.hbm [shape: f32[2,16,32], index: 6, kind: output, shape index: {}]
  %s7 = sld [smem:[#allocation0]]
  $region77: #{tpu_custom_call.1} parent=0
    _
  %s9 = ssub.s32 1, %s7
  %s10 = scalar_select 0, %s9, %s7
  $region1: #{tpu_custom_call.1} parent=0
    #allocation2 [shape = 'u8[16384]{0}', space=vmem, size = 0x4000, scoped, tag = 'input window, operand 0']
    #allocation3 [shape = 's32[2]{0}', space=sflag, size = 0x8, scoped, tag = 'scoped memory for tpu_custom_call.1']
    #allocation4 [shape = 's32[2]{0}', space=sflag, size = 0x8, scoped, tag = 'scoped memory for tpu_custom_call.1']
    #allocation5 [shape = 's32[2]{0}', space=sflag, size = 0x8, scoped, tag = 'scoped memory for tpu_custom_call.1']
    #allocation6 [shape = 'u8[8192]{0}', space=vmem, size = 0x2000, scoped, tag = 'input window, operand 1, single buffered']
    #allocation7 [shape = 's32[1]{0}', space=sflag, size = 0x4, scoped, tag = 'scoped memory for tpu_custom_call.1']
    #allocation8 [shape = 'u8[32768]{0}', space=vmem, size = 0x8000, scoped, tag = 'input window, operand 2, single buffered']
    #allocation9 [shape = 'u8[512]{0}', space=smem, size = 0x200, scoped, tag = 'input window, operand 3, single buffered']
    #allocation10 [shape = 'u8[8192]{0}', space=vmem, size = 0x2000, scoped, tag = 'input window, operand 4, single buffered']
    #allocation11 [shape = 's32[1]{0}', space=sflag, size = 0x4, scoped, tag = 'scoped memory for tpu_custom_call.1']
    #allocation12 [shape = 'u8[16384]{0}', space=vmem, size = 0x4000, scoped, tag = 'output window, operand 0']
    %11 = vsyncpa [#allocation3], 0
    %s12 = scalar_lea.sflag [#allocation3], 1
    %13 = vsyncpa %s12, 0
    %14 = vsyncpa [#allocation7], 0
    %15 = vsyncpa [#allocation5], 0
    %16 = vsyncpa [#allocation11], 0
    %17 = vsyncpa [#allocation4], 0
    %s18 = scalar_lea.sflag [#allocation4], 1
    %19 = vsyncpa %s18, 0
    loop: start=0, step=1, limit=4
    $region2: #{tpu_custom_call.1} parent=1 // loop_pre_header
      _
    $region3: #{tpu_custom_call.1} parent=1 // loop_header
      %s21 = sphi 0, %s25
      %p22 = scmp.ge.s32.totalorder %s21, 4
      %s31 = sphi 0, %s33
      %s34 = sphi 0, %s31
      %s35 = sphi 0, %s34
      %s51 = sphi 0, %s35
      %s55 = sphi 0, %s55
      %s57 = sphi 0, %s55
      %s58 = sphi 0, %s57
      %s72 = sphi 0, %s58
      %s76 = sphi 0, %s76
      %s78 = sphi 0, %s76
      %s79 = sphi 0, %s78
      %s93 = sphi 0, %s79
      %s97 = sphi 0, %s97
      %s99 = sphi 0, %s97
      %s100 = sphi 0, %s99
      %s114 = sphi 0, %s100
      %s118 = sphi 0, %s118
      %s120 = sphi 0, %s118
      %s121 = sphi 0, %s120
      %s135 = sphi 0, %s121
      %s139 = sphi 0, %s139
      %s141 = sphi 0, %s139
      %s142 = sphi 0, %s141
      %s156 = sphi 0, %s142
      %s162 = sphi 0, %s164
      %s165 = sphi 0, %s162
      %s166 = sphi 0, %s165
      %s182 = sphi 0, %s166
    $region4: #{tpu_custom_call.1} parent=1 // loop_header_branch
      %24 = sbr.rel (%p22) target = $region8
    $region5: #{tpu_custom_call.1} parent=1 // loop_body
      %s26 = ssub.s32 %s21, 1
      %s27 = ssub.s32 %s21, 2
      %s28 = sadd.s32 %s21, 1
      %s29 = ssub.s32 %s21, %s28
      %p30 = scmp.eq.s32.totalorder %s29, 0
      %s32 = sadd.s32 %s31, 1
      %s33 = scalar_select %p30, %s31, %s32
      %p36 = pneg %p30
      %p37 = scmp.eq.s32.totalorder %s21, 1
      %p38 = por %p36, %p37
      %p39 = scmp.ne.s32.totalorder %s31, %s34
      %p40 = scmp.eq.s32.totalorder %s21, 0
      %p41 = por %p39, %p40
      %p42 = scmp.ne.s32.totalorder %s31, %s34
      %p43 = scmp.eq.s32.totalorder %s26, 1
      %p44 = por %p42, %p43
      %p45 = scmp.ne.s32.totalorder %s34, %s35
      %p46 = scmp.eq.s32.totalorder %s26, 0
      %p47 = por %p45, %p46
      %p48 = scmp.ne.s32.totalorder %s34, %s35
      %p49 = scmp.eq.s32.totalorder %s27, 1
      %p50 = por %p48, %p49
      %p52 = scmp.ne.s32.totalorder %s35, %s51
      %p53 = scmp.eq.s32.totalorder %s27, 0
      %p54 = por %p52, %p53
      %s56 = sadd.s32 %s55, 1
      %p59 = scmp.eq.s32.totalorder %s21, 1
      %p60 = scmp.ne.s32.totalorder %s55, %s57
      %p61 = scmp.eq.s32.totalorder %s21, 0
      %p62 = por %p60, %p61
      %p63 = scmp.ne.s32.totalorder %s55, %s57
      %p64 = scmp.eq.s32.totalorder %s26, 1
      %p65 = por %p63, %p64
      %p66 = scmp.ne.s32.totalorder %s57, %s58
      %p67 = scmp.eq.s32.totalorder %s26, 0
      %p68 = por %p66, %p67
      %p69 = scmp.ne.s32.totalorder %s57, %s58
      %p70 = scmp.eq.s32.totalorder %s27, 1
      %p71 = por %p69, %p70
      %p73 = scmp.ne.s32.totalorder %s58, %s72
      %p74 = scmp.eq.s32.totalorder %s27, 0
      %p75 = por %p73, %p74
      %s77 = sadd.s32 %s76, 1
      %p80 = scmp.eq.s32.totalorder %s21, 1
      %p81 = scmp.ne.s32.totalorder %s76, %s78
      %p82 = scmp.eq.s32.totalorder %s21, 0
      %p83 = por %p81, %p82
      %p84 = scmp.ne.s32.totalorder %s76, %s78
      %p85 = scmp.eq.s32.totalorder %s26, 1
      %p86 = por %p84, %p85
      %p87 = scmp.ne.s32.totalorder %s78, %s79
      %p88 = scmp.eq.s32.totalorder %s26, 0
      %p89 = por %p87, %p88
      %p90 = scmp.ne.s32.totalorder %s78, %s79
      %p91 = scmp.eq.s32.totalorder %s27, 1
      %p92 = por %p90, %p91
      %p94 = scmp.ne.s32.totalorder %s79, %s93
      %p95 = scmp.eq.s32.totalorder %s27, 0
      %p96 = por %p94, %p95
      %s98 = sadd.s32 %s97, 1
      %p101 = scmp.eq.s32.totalorder %s21, 1
      %p102 = scmp.ne.s32.totalorder %s97, %s99
      %p103 = scmp.eq.s32.totalorder %s21, 0
      %p104 = por %p102, %p103
      %p105 = scmp.ne.s32.totalorder %s97, %s99
      %p106 = scmp.eq.s32.totalorder %s26, 1
      %p107 = por %p105, %p106
      %p108 = scmp.ne.s32.totalorder %s99, %s100
      %p109 = scmp.eq.s32.totalorder %s26, 0
      %p110 = por %p108, %p109
      %p111 = scmp.ne.s32.totalorder %s99, %s100
      %p112 = scmp.eq.s32.totalorder %s27, 1
      %p113 = por %p111, %p112
      %p115 = scmp.ne.s32.totalorder %s100, %s114
      %p116 = scmp.eq.s32.totalorder %s27, 0
      %p117 = por %p115, %p116
      %s119 = sadd.s32 %s118, 1
      %p122 = scmp.eq.s32.totalorder %s21, 1
      %p123 = scmp.ne.s32.totalorder %s118, %s120
      %p124 = scmp.eq.s32.totalorder %s21, 0
      %p125 = por %p123, %p124
      %p126 = scmp.ne.s32.totalorder %s118, %s120
      %p127 = scmp.eq.s32.totalorder %s26, 1
      %p128 = por %p126, %p127
      %p129 = scmp.ne.s32.totalorder %s120, %s121
      %p130 = scmp.eq.s32.totalorder %s26, 0
      %p131 = por %p129, %p130
      %p132 = scmp.ne.s32.totalorder %s120, %s121
      %p133 = scmp.eq.s32.totalorder %s27, 1
      %p134 = por %p132, %p133
      %p136 = scmp.ne.s32.totalorder %s121, %s135
      %p137 = scmp.eq.s32.totalorder %s27, 0
      %p138 = por %p136, %p137
      %s140 = sadd.s32 %s139, 1
      %p143 = scmp.eq.s32.totalorder %s21, 1
      %p144 = scmp.ne.s32.totalorder %s139, %s141
      %p145 = scmp.eq.s32.totalorder %s21, 0
      %p146 = por %p144, %p145
      %p147 = scmp.ne.s32.totalorder %s139, %s141
      %p148 = scmp.eq.s32.totalorder %s26, 1
      %p149 = por %p147, %p148
      %p150 = scmp.ne.s32.totalorder %s141, %s142
      %p151 = scmp.eq.s32.totalorder %s26, 0
      %p152 = por %p150, %p151
      %p153 = scmp.ne.s32.totalorder %s141, %s142
      %p154 = scmp.eq.s32.totalorder %s27, 1
      %p155 = por %p153, %p154
      %p157 = scmp.ne.s32.totalorder %s142, %s156
      %p158 = scmp.eq.s32.totalorder %s27, 0
      %p159 = por %p157, %p158
      %s160 = ssub.s32 %s21, %s28
      %p161 = scmp.eq.s32.totalorder %s160, 0
      %s163 = sadd.s32 %s162, 1
      %s164 = scalar_select %p161, %s162, %s163
      %p167 = pneg %p161
      %p168 = scmp.eq.s32.totalorder %s21, 1
      %p169 = por %p167, %p168
      %p170 = scmp.ne.s32.totalorder %s162, %s165
      %p171 = scmp.eq.s32.totalorder %s21, 0
      %p172 = por %p170, %p171
      %p173 = scmp.ne.s32.totalorder %s162, %s165
      %p174 = scmp.eq.s32.totalorder %s26, 1
      %p175 = por %p173, %p174
      %p176 = scmp.ne.s32.totalorder %s165, %s166
      %p177 = scmp.eq.s32.totalorder %s26, 0
      %p178 = por %p176, %p177
      %p179 = scmp.ne.s32.totalorder %s165, %s166
      %p180 = scmp.eq.s32.totalorder %s27, 1
      %p181 = por %p179, %p180
      %p183 = scmp.ne.s32.totalorder %s166, %s182
      %p184 = scmp.eq.s32.totalorder %s27, 0
      %p185 = por %p183, %p184
      %p186 = scmp.le.s32.totalorder 1, %s21
      %p187 = scmp.lt.s32.totalorder %s21, 3
      %p188 = pnand %p186, %p187
      %p189 = pneg %p188
      // Predicated region
      $region9: #{tpu_custom_call.1} parent=5 // pred_check
        _
      $region10: #{tpu_custom_call.1} parent=5 // pred_check_branch
        %191 = sbr.rel (%p188) target = $region12
      $region11: #{tpu_custom_call.1} parent=5 // pred_region
        %s192 = ssub.s32 %s21, 1
        // Predicated region
        $region13: #{tpu_custom_call.1} parent=11 // pred_check
          %p193 = pneg %p68
        $region14: #{tpu_custom_call.1} parent=11 // pred_check_branch
          %195 = sbr.rel (%p193) target = $region16
        $region15: #{tpu_custom_call.1} parent=11 // pred_region
          %s197 = ssub.s32 256, 256
          %198 = vsyncadd [#allocation7], %s197
          %s199 = sshll.u32 [#allocation6], 4
          %s200 = int_to_ptr.vmem [resolvable:$true] %s199
          %205 = dma.hbm_to_vmem [thread:$0]  %s1, 256, %s200, [#allocation7], 64, 64, 4
        $region16: #{tpu_custom_call.1} parent=11 // pred_fallthru
          _
        // Predicated region
        $region17: #{tpu_custom_call.1} parent=11 // pred_check
          %p206 = pneg %p89
        $region18: #{tpu_custom_call.1} parent=11 // pred_check_branch
          %208 = sbr.rel (%p206) target = $region20
        $region19: #{tpu_custom_call.1} parent=11 // pred_region
          %s210 = ssub.s32 1024, 1024
          %211 = vsyncadd [#allocation7], %s210
          %s212 = sshll.u32 [#allocation8], 4
          %s213 = int_to_ptr.vmem [resolvable:$true] %s212
          %218 = dma.hbm_to_vmem [thread:$0]  %s2, 1024, %s213, [#allocation7], 64, 64, 4
        $region20: #{tpu_custom_call.1} parent=11 // pred_fallthru
          _
        // Predicated region
        $region21: #{tpu_custom_call.1} parent=11 // pred_check
          %p219 = pneg %p110
        $region22: #{tpu_custom_call.1} parent=11 // pred_check_branch
          %221 = sbr.rel (%p219) target = $region24
        $region23: #{tpu_custom_call.1} parent=11 // pred_region
          %s223 = ssub.s32 16, 16
          %224 = vsyncadd [#allocation5], %s223
          %s226 = sshll.u32 %s3, 4
          %s227 = int_to_ptr.vmem [resolvable:$true] %s226
          %229 = dma.vmem_to_smem %s227, 16, [#allocation9], [#allocation5]
        $region24: #{tpu_custom_call.1} parent=11 // pred_fallthru
          _
        // Predicated region
        $region25: #{tpu_custom_call.1} parent=11 // pred_check
          %p230 = pneg %p131
        $region26: #{tpu_custom_call.1} parent=11 // pred_check_branch
          %232 = sbr.rel (%p230) target = $region28
        $region27: #{tpu_custom_call.1} parent=11 // pred_region
          %s234 = ssub.s32 256, 256
          %235 = vsyncadd [#allocation11], %s234
          %s236 = sshll.u32 [#allocation10], 4
          %s237 = int_to_ptr.vmem [resolvable:$true] %s236
          %242 = dma.hbm_to_vmem [thread:$0]  %s4, 256, %s237, [#allocation11], 64, 64, 4
        $region28: #{tpu_custom_call.1} parent=11 // pred_fallthru
          _
        // Predicated region
        $region29: #{tpu_custom_call.1} parent=11 // pred_check
          %p243 = pneg %p152
        $region30: #{tpu_custom_call.1} parent=11 // pred_check_branch
          %245 = sbr.rel (%p243) target = $region32
        $region31: #{tpu_custom_call.1} parent=11 // pred_region
          _
        $region32: #{tpu_custom_call.1} parent=11 // pred_fallthru
          _
      $region12: #{tpu_custom_call.1} parent=5 // pred_fallthru
        _
      %p246 = scmp.lt.s32.totalorder %s21, 2
      // Predicated region
      $region33: #{tpu_custom_call.1} parent=5 // pred_check
        %p247 = pneg %p246
      $region34: #{tpu_custom_call.1} parent=5 // pred_check_branch
        %249 = sbr.rel (%p247) target = $region36
      $region35: #{tpu_custom_call.1} parent=5 // pred_region
        // Predicated region
        $region37: #{tpu_custom_call.1} parent=35 // pred_check
          %p250 = pneg %p41
        $region38: #{tpu_custom_call.1} parent=35 // pred_check_branch
          %252 = sbr.rel (%p250) target = $region40
        $region39: #{tpu_custom_call.1} parent=35 // pred_region
          %s253 = sand.u32 %s31, 1
          %s254 = scalar_lea.sflag [#allocation3], %s253
          %s255 = sand.u32 %s31, 1
          %s256 = smul.addr %s255, 16
          %s257 = scalar_lea.vmem [#allocation2], %s256
          %s259 = ssub.s32 256, 256
          %260 = vsyncadd %s254, %s259
          %s261 = smul.addr %s21, 2
          %s262 = smul.addr %s261, 128
          %s263 = scalar_lea.hbm %s0, %s262
          %s264 = sshll.u32 %s257, 4
          %s265 = int_to_ptr.vmem [resolvable:$true] %s264
          %270 = dma.hbm_to_vmem [thread:$0]  %s263, 256, %s265, %s254, 128, 128, 8
        $region40: #{tpu_custom_call.1} parent=35 // pred_fallthru
          _
      $region36: #{tpu_custom_call.1} parent=5 // pred_fallthru
        _
      %p271 = scmp.le.s32.totalorder 1, %s21
      %p272 = scmp.lt.s32.totalorder %s21, 3
      %p273 = pnand %p271, %p272
      %p274 = pneg %p273
      // Predicated region
      $region41: #{tpu_custom_call.1} parent=5 // pred_check
        _
      $region42: #{tpu_custom_call.1} parent=5 // pred_check_branch
        %276 = sbr.rel (%p273) target = $region44
      $region43: #{tpu_custom_call.1} parent=5 // pred_region
        %s277 = ssub.s32 %s21, 1
        %s278 = sand.u32 %s34, 1
        %s279 = scalar_lea.sflag [#allocation3], %s278
        %s280 = sand.u32 %s34, 1
        %s281 = smul.addr %s280, 16
        %s282 = scalar_lea.vmem [#allocation2], %s281
        // Predicated region
        $region45: #{tpu_custom_call.1} parent=43 // pred_check
          %p283 = pneg %p47
        $region46: #{tpu_custom_call.1} parent=43 // pred_check_branch
          %285 = sbr.rel (%p283) target = $region48
        $region47: #{tpu_custom_call.1} parent=43 // pred_region
          %286 = dma.done %s279, 256
        $region48: #{tpu_custom_call.1} parent=43 // pred_fallthru
          _
        // Predicated region
        $region49: #{tpu_custom_call.1} parent=43 // pred_check
          %p287 = pneg %p68
        $region50: #{tpu_custom_call.1} parent=43 // pred_check_branch
          %289 = sbr.rel (%p287) target = $region52
        $region51: #{tpu_custom_call.1} parent=43 // pred_region
          %290 = dma.done [#allocation7], 256
        $region52: #{tpu_custom_call.1} parent=43 // pred_fallthru
          _
        // Predicated region
        $region53: #{tpu_custom_call.1} parent=43 // pred_check
          %p291 = pneg %p89
        $region54: #{tpu_custom_call.1} parent=43 // pred_check_branch
          %293 = sbr.rel (%p291) target = $region56
        $region55: #{tpu_custom_call.1} parent=43 // pred_region
          %294 = dma.done [#allocation7], 1024
        $region56: #{tpu_custom_call.1} parent=43 // pred_fallthru
          _
        // Predicated region
        $region57: #{tpu_custom_call.1} parent=43 // pred_check
          %p295 = pneg %p110
        $region58: #{tpu_custom_call.1} parent=43 // pred_check_branch
          %297 = sbr.rel (%p295) target = $region60
        $region59: #{tpu_custom_call.1} parent=43 // pred_region
          %298 = dma.done [#allocation5], 16
        $region60: #{tpu_custom_call.1} parent=43 // pred_fallthru
          _
        // Predicated region
        $region61: #{tpu_custom_call.1} parent=43 // pred_check
          %p299 = pneg %p131
        $region62: #{tpu_custom_call.1} parent=43 // pred_check_branch
          %301 = sbr.rel (%p299) target = $region64
        $region63: #{tpu_custom_call.1} parent=43 // pred_region
          %302 = dma.done [#allocation11], 256
        $region64: #{tpu_custom_call.1} parent=43 // pred_fallthru
          _
        %303 = sfence
        %s304 = sand.u32 %s34, 1
        %s305 = scalar_lea.sflag [#allocation3], %s304
        %s306 = sand.u32 %s34, 1
        %s307 = smul.addr %s306, 16
        %s308 = scalar_lea.vmem [#allocation2], %s307
        %p309 = pneg %p47
        %p310 = pneg %p44
        %p311 = pneg %p68
        %p312 = pneg %p65
        %p313 = pneg %p89
        %p314 = pneg %p86
        %p315 = pneg %p110
        %p316 = pneg %p107
        %p317 = pneg %p131
        %p318 = pneg %p128
        %p319 = pneg %p152
        %p320 = pneg %p149
        %p321 = pneg %p178
        %p322 = pneg %p175
        %s323 = sand.u32 %s165, 1
        %s324 = scalar_lea.sflag [#allocation4], %s323
        %s325 = sand.u32 %s165, 1
        %s326 = smul.addr %s325, 16
        %s327 = scalar_lea.vmem [#allocation12], %s326
        %v329 = vld [vmem:[%s282] sm:$0xff]
        %v330 = vld [vmem:[%s282 + $0x8] sm:$0xff]
        %v331 = vpack.c.bf16 %v330, %v329
        %v332 = vld [vmem:[#allocation6] sm:$0xf]
        %v333 = vld [vmem:[#allocation6 + $0x4] sm:$0xf]
        %v334 = vld [vmem:[#allocation6 + $0x8] sm:$0xf]
        %v335 = vld [vmem:[#allocation6 + $0xc] sm:$0xf]
        %v340 = vunpack.c.l.b16 %v332
        %v341 = vunpack.c.l.b16 %v333
        %v342 = vunpack.c.l.b16 %v334
        %v343 = vunpack.c.l.b16 %v335
        %v344 = vpack.c.b16 %v341, %v340
        %v345 = vpack.c.b16 %v343, %v342
        %vm348 = vcmask 261120
        %v350 = vsel %vm348, %v331, 0
        %352 = vmatprep.subr.bf16.mxu0 0
        %353 = vmatpush1.bf16.msra.mxu0 0
        %354 = vmatprep.subr.bf16.mxu0 0
        %355 = vmatpush1.bf16.msra.mxu0 0
        %356 = vmatprep.subr.bf16.mxu0 0
        %357 = vmatpush1.bf16.msra.mxu0 0
        %358 = vmatprep.subr.bf16.mxu0 0
        %359 = vmatpush1.bf16.msra.mxu0 0
        %360 = vmatprep.subr.bf16.mxu0 0
        %361 = vmatpush1.bf16.msra.mxu0 0
        %362 = vmatprep.subr.bf16.mxu0 0
        %363 = vmatpush1.bf16.msra.mxu0 0
        %364 = vmatprep.subr.bf16.mxu0 0
        %365 = vmatpush1.bf16.msra.mxu0 %v345
        %366 = vmatprep.subr.bf16.mxu0 0
        %367 = vmatpush1.bf16.msra.mxu0 %v344
        %368 = vmatprep.subr.bf16.mxu0 0
        %369 = vmatpush2.bf16.msra.mxu0 0
        %370 = vmatprep.subr.bf16.mxu0 0
        %371 = vmatpush2.bf16.msra.mxu0 0
        %372 = vmatprep.subr.bf16.mxu0 0
        %373 = vmatpush2.bf16.msra.mxu0 0
        %374 = vmatprep.subr.bf16.mxu0 0
        %375 = vmatpush2.bf16.msra.mxu0 0
        %376 = vmatprep.subr.bf16.mxu0 0
        %377 = vmatpush2.bf16.msra.mxu0 0
        %378 = vmatprep.subr.bf16.mxu0 0
        %379 = vmatpush2.bf16.msra.mxu0 0
        %380 = vmatprep.subr.bf16.mxu0 0
        %381 = vmatpush2.bf16.msra.mxu0 0
        %382 = vmatprep.subr.bf16.mxu0 0
        %383 = vmatpush2.bf16.msra.mxu0 0
        %384 = vmatprep.mubr.bf16.mxu0 0
        %385 = vmatmul.mubr.bf16.gmra.mxu0 %v350
        %v386 = vpop.f32.mrf.mxu0
        %v387 = vadd.f32 0.0, %v386
        %v388 = vpop.f32.mrf.mxu0
        %v389 = vpop.f32.mrf.mxu0
        %v390 = vadd.f32 0.0, %v389
        %v391 = vpop.f32.mrf.mxu0
        %392 = vdwg.mxu0
        %v393 = vpack.c.bf16 %v390, %v387
        %395 = vrot.lane.b32.xlu0 %v393, 96
        %v396 = vpop.permute.xlu0 %395
        %vm397 = vcmask 31744
        %v399 = vsel %vm397, %v393, 0
        %v402 = vsel %vm397, %v396, 0
        %404 = vmatprep.subr.bf16.mxu0 0
        %405 = vmatpush1.bf16.xpose.msra.mxu0 0
        %406 = vmatprep.subr.bf16.mxu0 0
        %407 = vmatpush1.bf16.xpose.msra.mxu0 0
        %408 = vmatprep.subr.bf16.mxu0 0
        %409 = vmatpush1.bf16.xpose.msra.mxu0 0
        %410 = vmatprep.subr.bf16.mxu0 0
        %411 = vmatpush1.bf16.xpose.msra.mxu0 0
        %412 = vmatprep.subr.bf16.mxu0 0
        %413 = vmatpush1.bf16.xpose.msra.mxu0 0
        %414 = vmatprep.subr.bf16.mxu0 0
        %415 = vmatpush1.bf16.xpose.msra.mxu0 0
        %416 = vmatprep.subr.bf16.mxu0 0
        %417 = vmatpush1.bf16.xpose.msra.mxu0 0
        %418 = vmatprep.subr.bf16.mxu0 0
        %419 = vmatpush1.bf16.xpose.msra.mxu0 %v402
        %420 = vmatprep.subr.bf16.mxu0 0
        %421 = vmatpush2.bf16.xpose.msra.mxu0 0
        %422 = vmatprep.subr.bf16.mxu0 0
        %423 = vmatpush2.bf16.xpose.msra.mxu0 0
        %424 = vmatprep.subr.bf16.mxu0 0
        %425 = vmatpush2.bf16.xpose.msra.mxu0 0
        %426 = vmatprep.subr.bf16.mxu0 0
        %427 = vmatpush2.bf16.xpose.msra.mxu0 0
        %428 = vmatprep.subr.bf16.mxu0 0
        %429 = vmatpush2.bf16.xpose.msra.mxu0 0
        %430 = vmatprep.subr.bf16.mxu0 0
        %431 = vmatpush2.bf16.xpose.msra.mxu0 0
        %432 = vmatprep.subr.bf16.mxu0 0
        %433 = vmatpush2.bf16.xpose.msra.mxu0 0
        %434 = vmatprep.subr.bf16.mxu0 0
        %435 = vmatpush2.bf16.xpose.msra.mxu0 0
        %436 = vmatprep.mubr.bf16.mxu0 0
        %437 = vmatmul.mubr.bf16.gmra.mxu0 %v399
        %v438 = vpop.f32.mrf.mxu0
        %v439 = vadd.f32 0.0, %v438
        %v440 = vpop.f32.mrf.mxu0
        %v441 = vpop.f32.mrf.mxu0
        %v442 = vadd.f32 0.0, %v441
        %v443 = vpop.f32.mrf.mxu0
        %444 = vdwg.mxu0
        %vm445 = vcmask 130048
        %v446 = vsel %vm445, %v439, -inf
        %447 = vmax.xlane.f32.xlu0 %v446
        %v448 = vpop.xlane.xlu0 %447
        %v449 = vsel %vm445, %v442, -inf
        %450 = vmax.xlane.f32.xlu0 %v449
        %v451 = vpop.xlane.xlu0 %450
        %v452 = vsub.f32 %v439, %v448
        %v453 = vsub.f32 %v442, %v451
        %v454 = vmul.f32 %v452, 1.442695
        %v455 = vpow.pop %v454
        %v456 = vmul.f32 %v453, 1.442695
        %v457 = vpow.pop %v456
        %s458 = sld [smem:[#allocation9]]
        %v459 = vsel %vm445, %v455, 0.0
        %460 = vadd.xlane.f32.xlu0 %v459
        %v461 = vpop.xlane.xlu0 %460
        %v462 = vsel %vm445, %v457, 0.0
        %463 = vadd.xlane.f32.xlu0 %v462
        %v464 = vpop.xlane.xlu0 %463
        %v465 = vrcp.pop %v461
        %v466 = vrcp.pop %v464
        %v467 = vstv %s458
        %v468 = vmul.f32 %v467, %v465
        %v469 = vmul.f32 %v467, %v466
        %v470 = vmul.f32 %v455, %v468
        %v471 = vmul.f32 %v457, %v469
        %v472 = vld [vmem:[#allocation8] sm:$0xf]
        %v473 = vld [vmem:[#allocation8 + $0x4] sm:$0xf]
        %v474 = vunpack.c.l.bf16 %v472
        %v475 = vunpack.c.l.bf16 %v473
        %v476 = vadd.f32 %v470, %v474
        %v477 = vadd.f32 %v471, %v475
        %v478 = vpack.c.bf16 %v477, %v476
        %479 = vrot.lane.b32.xlu0 %v393, 64
        %v480 = vpop.permute.xlu0 %479
        %v483 = vsel %vm445, %v478, 0
        %485 = vmatprep.subr.bf16.mxu0 0
        %486 = vmatpush1.bf16.msra.mxu0 0
        %487 = vmatprep.subr.bf16.mxu0 0
        %488 = vmatpush1.bf16.msra.mxu0 0
        %489 = vmatprep.subr.bf16.mxu0 0
        %490 = vmatpush1.bf16.msra.mxu0 0
        %491 = vmatprep.subr.bf16.mxu0 0
        %492 = vmatpush1.bf16.msra.mxu0 0
        %493 = vmatprep.subr.bf16.mxu0 0
        %494 = vmatpush1.bf16.msra.mxu0 0
        %495 = vmatprep.subr.bf16.mxu0 0
        %496 = vmatpush1.bf16.msra.mxu0 0
        %497 = vmatprep.subr.bf16.mxu0 0
        %498 = vmatpush1.bf16.msra.mxu0 0
        %499 = vmatprep.subr.bf16.mxu0 0
        %500 = vmatpush1.bf16.msra.mxu0 %v480
        %501 = vmatprep.subr.bf16.mxu0 0
        %502 = vmatpush2.bf16.msra.mxu0 0
        %503 = vmatprep.subr.bf16.mxu0 0
        %504 = vmatpush2.bf16.msra.mxu0 0
        %505 = vmatprep.subr.bf16.mxu0 0
        %506 = vmatpush2.bf16.msra.mxu0 0
        %507 = vmatprep.subr.bf16.mxu0 0
        %508 = vmatpush2.bf16.msra.mxu0 0
        %509 = vmatprep.subr.bf16.mxu0 0
        %510 = vmatpush2.bf16.msra.mxu0 0
        %511 = vmatprep.subr.bf16.mxu0 0
        %512 = vmatpush2.bf16.msra.mxu0 0
        %513 = vmatprep.subr.bf16.mxu0 0
        %514 = vmatpush2.bf16.msra.mxu0 0
        %515 = vmatprep.subr.bf16.mxu0 0
        %516 = vmatpush2.bf16.msra.mxu0 0
        %517 = vmatprep.mubr.bf16.mxu0 0
        %518 = vmatmul.mubr.bf16.gmra.mxu0 %v483
        %v519 = vpop.f32.mrf.mxu0
        %v520 = vadd.f32 0.0, %v519
        %v521 = vpop.f32.mrf.mxu0
        %v522 = vpop.f32.mrf.mxu0
        %v523 = vadd.f32 0.0, %v522
        %v524 = vpop.f32.mrf.mxu0
        %525 = vdwg.mxu0
        %v526 = vpack.c.bf16 %v523, %v520
        %v527 = vld [vmem:[#allocation10] sm:$0x3]
        %528 = vrot.lane.b32.xlu0 %v393, 124
        %v529 = vpop.permute.xlu0 %528
        %530 = vrot.lane.b32.xlu0 %v393, 92
        %v531 = vpop.permute.xlu0 %530
        %v533 = vsel %vm397, %v529, 0
        %v536 = vsel %vm397, %v531, 0
        %538 = vmatprep.subr.bf16.mxu0 0
        %539 = vmatpush1.bf16.xpose.msra.mxu0 0
        %540 = vmatprep.subr.bf16.mxu0 0
        %541 = vmatpush1.bf16.xpose.msra.mxu0 0
        %542 = vmatprep.subr.bf16.mxu0 0
        %543 = vmatpush1.bf16.xpose.msra.mxu0 0
        %544 = vmatprep.subr.bf16.mxu0 0
        %545 = vmatpush1.bf16.xpose.msra.mxu0 0
        %546 = vmatprep.subr.bf16.mxu0 0
        %547 = vmatpush1.bf16.xpose.msra.mxu0 0
        %548 = vmatprep.subr.bf16.mxu0 0
        %549 = vmatpush1.bf16.xpose.msra.mxu0 0
        %550 = vmatprep.subr.bf16.mxu0 0
        %551 = vmatpush1.bf16.xpose.msra.mxu0 0
        %552 = vmatprep.subr.bf16.mxu0 0
        %553 = vmatpush1.bf16.xpose.msra.mxu0 %v536
        %554 = vmatprep.subr.bf16.mxu0 0
        %555 = vmatpush2.bf16.xpose.msra.mxu0 0
        %556 = vmatprep.subr.bf16.mxu0 0
        %557 = vmatpush2.bf16.xpose.msra.mxu0 0
        %558 = vmatprep.subr.bf16.mxu0 0
        %559 = vmatpush2.bf16.xpose.msra.mxu0 0
        %560 = vmatprep.subr.bf16.mxu0 0
        %561 = vmatpush2.bf16.xpose.msra.mxu0 0
        %562 = vmatprep.subr.bf16.mxu0 0
        %563 = vmatpush2.bf16.xpose.msra.mxu0 0
        %564 = vmatprep.subr.bf16.mxu0 0
        %565 = vmatpush2.bf16.xpose.msra.mxu0 0
        %566 = vmatprep.subr.bf16.mxu0 0
        %567 = vmatpush2.bf16.xpose.msra.mxu0 0
        %568 = vmatprep.subr.bf16.mxu0 0
        %569 = vmatpush2.bf16.xpose.msra.mxu0 0
        %570 = vmatprep.mubr.bf16.mxu0 0
        %571 = vmatmul.mubr.bf16.gmra.mxu0 %v533
        %v572 = vpop.f32.mrf.mxu0
        %v573 = vadd.f32 0.0, %v572
        %v574 = vpop.f32.mrf.mxu0
        %v575 = vpop.f32.mrf.mxu0
        %v576 = vadd.f32 0.0, %v575
        %v577 = vpop.f32.mrf.mxu0
        %578 = vdwg.mxu0
        %v579 = vsel %vm445, %v573, -inf
        %580 = vmax.xlane.f32.xlu0 %v579
        %v581 = vpop.xlane.xlu0 %580
        %v582 = vsel %vm445, %v576, -inf
        %583 = vmax.xlane.f32.xlu0 %v582
        %v584 = vpop.xlane.xlu0 %583
        %v585 = vsub.f32 %v573, %v581
        %v586 = vsub.f32 %v576, %v584
        %v587 = vmul.f32 %v585, 1.442695
        %v588 = vpow.pop %v587
        %v589 = vmul.f32 %v586, 1.442695
        %v590 = vpow.pop %v589
        %s591 = sld [smem:[#allocation9 + $0x1]]
        %v592 = vsel %vm445, %v588, 0.0
        %593 = vadd.xlane.f32.xlu0 %v592
        %v594 = vpop.xlane.xlu0 %593
        %v595 = vsel %vm445, %v590, 0.0
        %596 = vadd.xlane.f32.xlu0 %v595
        %v597 = vpop.xlane.xlu0 %596
        %v598 = vrcp.pop %v594
        %v599 = vrcp.pop %v597
        %v600 = vstv %s591
        %v601 = vmul.f32 %v600, %v598
        %v602 = vmul.f32 %v600, %v599
        %v603 = vmul.f32 %v588, %v601
        %v604 = vmul.f32 %v590, %v602
        %s605 = scalar_lea.vmem [#allocation8], 8
        %v606 = vld [vmem:[%s605] sm:$0xf]
        %v607 = vld [vmem:[%s605 + $0x4] sm:$0xf]
        %v608 = vunpack.c.l.bf16 %v606
        %v609 = vunpack.c.l.bf16 %v607
        %v610 = vadd.f32 %v603, %v608
        %v611 = vadd.f32 %v604, %v609
        %v612 = vpack.c.bf16 %v611, %v610
        %613 = vrot.lane.b32.xlu0 %v393, 60
        %v614 = vpop.permute.xlu0 %613
        %v617 = vsel %vm445, %v612, 0
        %619 = vmatprep.subr.bf16.mxu0 0
        %620 = vmatpush1.bf16.msra.mxu0 0
        %621 = vmatprep.subr.bf16.mxu0 0
        %622 = vmatpush1.bf16.msra.mxu0 0
        %623 = vmatprep.subr.bf16.mxu0 0
        %624 = vmatpush1.bf16.msra.mxu0 0
        %625 = vmatprep.subr.bf16.mxu0 0
        %626 = vmatpush1.bf16.msra.mxu0 0
        %627 = vmatprep.subr.bf16.mxu0 0
        %628 = vmatpush1.bf16.msra.mxu0 0
        %629 = vmatprep.subr.bf16.mxu0 0
        %630 = vmatpush1.bf16.msra.mxu0 0
        %631 = vmatprep.subr.bf16.mxu0 0
        %632 = vmatpush1.bf16.msra.mxu0 0
        %633 = vmatprep.subr.bf16.mxu0 0
        %634 = vmatpush1.bf16.msra.mxu0 %v614
        %635 = vmatprep.subr.bf16.mxu0 0
        %636 = vmatpush2.bf16.msra.mxu0 0
        %637 = vmatprep.subr.bf16.mxu0 0
        %638 = vmatpush2.bf16.msra.mxu0 0
        %639 = vmatprep.subr.bf16.mxu0 0
        %640 = vmatpush2.bf16.msra.mxu0 0
        %641 = vmatprep.subr.bf16.mxu0 0
        %642 = vmatpush2.bf16.msra.mxu0 0
        %643 = vmatprep.subr.bf16.mxu0 0
        %644 = vmatpush2.bf16.msra.mxu0 0
        %645 = vmatprep.subr.bf16.mxu0 0
        %646 = vmatpush2.bf16.msra.mxu0 0
        %647 = vmatprep.subr.bf16.mxu0 0
        %648 = vmatpush2.bf16.msra.mxu0 0
        %649 = vmatprep.subr.bf16.mxu0 0
        %650 = vmatpush2.bf16.msra.mxu0 0
        %651 = vmatprep.mubr.bf16.mxu0 0
        %652 = vmatmul.mubr.bf16.gmra.mxu0 %v617
        %v653 = vpop.f32.mrf.mxu0
        %v654 = vadd.f32 0.0, %v653
        %v655 = vpop.f32.mrf.mxu0
        %v656 = vpop.f32.mrf.mxu0
        %v657 = vadd.f32 0.0, %v656
        %v658 = vpop.f32.mrf.mxu0
        %659 = vdwg.mxu0
        %v660 = vpack.c.bf16 %v657, %v654
        %v661 = vld [vmem:[#allocation10] sm:$0xc]
        %v663 = vunpack.c.l.b16 %v661
        %v664 = vpack.c.b16 %v663, %v663
        %v665 = vrot.slane %v664, 2
        %v667 = vsel %vm397, %v660, 0
        %vm669 = vcmask 1041408
        %v671 = vsel %vm669, %v665, 0
        %673 = vmatprep.subr.bf16.mxu0 0
        %674 = vmatpush1.bf16.msra.mxu0 0
        %675 = vmatprep.subr.bf16.mxu0 0
        %676 = vmatpush1.bf16.msra.mxu0 0
        %677 = vmatprep.subr.bf16.mxu0 0
        %678 = vmatpush1.bf16.msra.mxu0 0
        %679 = vmatprep.subr.bf16.mxu0 0
        %680 = vmatpush1.bf16.msra.mxu0 0
        %681 = vmatprep.subr.bf16.mxu0 0
        %682 = vmatpush1.bf16.msra.mxu0 0
        %683 = vmatprep.subr.bf16.mxu0 0
        %684 = vmatpush1.bf16.msra.mxu0 0
        %685 = vmatprep.subr.bf16.mxu0 0
        %686 = vmatpush1.bf16.msra.mxu0 0
        %687 = vmatprep.subr.bf16.mxu0 0
        %688 = vmatpush1.bf16.msra.mxu0 %v671
        %689 = vmatprep.subr.bf16.mxu0 0
        %690 = vmatpush2.bf16.msra.mxu0 0
        %691 = vmatprep.subr.bf16.mxu0 0
        %692 = vmatpush2.bf16.msra.mxu0 0
        %693 = vmatprep.subr.bf16.mxu0 0
        %694 = vmatpush2.bf16.msra.mxu0 0
        %695 = vmatprep.subr.bf16.mxu0 0
        %696 = vmatpush2.bf16.msra.mxu0 0
        %697 = vmatprep.subr.bf16.mxu0 0
        %698 = vmatpush2.bf16.msra.mxu0 0
        %699 = vmatprep.subr.bf16.mxu0 0
        %700 = vmatpush2.bf16.msra.mxu0 0
        %701 = vmatprep.subr.bf16.mxu0 0
        %702 = vmatpush2.bf16.msra.mxu0 0
        %703 = vmatprep.subr.bf16.mxu0 0
        %704 = vmatpush2.bf16.msra.mxu0 0
        %705 = vmatprep.mubr.bf16.mxu0 0
        %706 = vmatmul.mubr.bf16.gmra.mxu0 %v667
        %v707 = vpop.f32.mrf.mxu0
        %v708 = vadd.f32 0.0, %v707
        %v709 = vpop.f32.mrf.mxu0
        %v710 = vpop.f32.mrf.mxu0
        %v711 = vadd.f32 0.0, %v710
        %v712 = vpop.f32.mrf.mxu0
        %713 = vdwg.mxu0
        %v715 = vsel %vm397, %v526, 0
        %v718 = vsel %vm669, %v527, 0
        %720 = vmatprep.subr.bf16.mxu0 0
        %721 = vmatpush1.bf16.msra.mxu0 0
        %722 = vmatprep.subr.bf16.mxu0 0
        %723 = vmatpush1.bf16.msra.mxu0 0
        %724 = vmatprep.subr.bf16.mxu0 0
        %725 = vmatpush1.bf16.msra.mxu0 0
        %726 = vmatprep.subr.bf16.mxu0 0
        %727 = vmatpush1.bf16.msra.mxu0 0
        %728 = vmatprep.subr.bf16.mxu0 0
        %729 = vmatpush1.bf16.msra.mxu0 0
        %730 = vmatprep.subr.bf16.mxu0 0
        %731 = vmatpush1.bf16.msra.mxu0 0
        %732 = vmatprep.subr.bf16.mxu0 0
        %733 = vmatpush1.bf16.msra.mxu0 0
        %734 = vmatprep.subr.bf16.mxu0 0
        %735 = vmatpush1.bf16.msra.mxu0 %v718
        %736 = vmatprep.subr.bf16.mxu0 0
        %737 = vmatpush2.bf16.msra.mxu0 0
        %738 = vmatprep.subr.bf16.mxu0 0
        %739 = vmatpush2.bf16.msra.mxu0 0
        %740 = vmatprep.subr.bf16.mxu0 0
        %741 = vmatpush2.bf16.msra.mxu0 0
        %742 = vmatprep.subr.bf16.mxu0 0
        %743 = vmatpush2.bf16.msra.mxu0 0
        %744 = vmatprep.subr.bf16.mxu0 0
        %745 = vmatpush2.bf16.msra.mxu0 0
        %746 = vmatprep.subr.bf16.mxu0 0
        %747 = vmatpush2.bf16.msra.mxu0 0
        %748 = vmatprep.subr.bf16.mxu0 0
        %749 = vmatpush2.bf16.msra.mxu0 0
        %750 = vmatprep.subr.bf16.mxu0 0
        %751 = vmatpush2.bf16.msra.mxu0 0
        %752 = vmatprep.mubr.bf16.mxu0 0
        %753 = vmatmul.mubr.bf16.gmra.mxu0 %v715
        %v754 = vpop.f32.mrf.mxu0
        %v755 = vadd.f32 %v708, %v754
        %v756 = vpop.f32.mrf.mxu0
        %v757 = vpop.f32.mrf.mxu0
        %v758 = vadd.f32 %v711, %v757
        %v759 = vpop.f32.mrf.mxu0
        %760 = vdwg.mxu0
        %761 = vrot.lane.b32.xlu0 %v393, 120
        %v762 = vpop.permute.xlu0 %761
        %763 = vrot.lane.b32.xlu0 %v393, 88
        %v764 = vpop.permute.xlu0 %763
        %v766 = vsel %vm397, %v762, 0
        %v769 = vsel %vm397, %v764, 0
        %771 = vmatprep.subr.bf16.mxu0 0
        %772 = vmatpush1.bf16.xpose.msra.mxu0 0
        %773 = vmatprep.subr.bf16.mxu0 0
        %774 = vmatpush1.bf16.xpose.msra.mxu0 0
        %775 = vmatprep.subr.bf16.mxu0 0
        %776 = vmatpush1.bf16.xpose.msra.mxu0 0
        %777 = vmatprep.subr.bf16.mxu0 0
        %778 = vmatpush1.bf16.xpose.msra.mxu0 0
        %779 = vmatprep.subr.bf16.mxu0 0
        %780 = vmatpush1.bf16.xpose.msra.mxu0 0
        %781 = vmatprep.subr.bf16.mxu0 0
        %782 = vmatpush1.bf16.xpose.msra.mxu0 0
        %783 = vmatprep.subr.bf16.mxu0 0
        %784 = vmatpush1.bf16.xpose.msra.mxu0 0
        %785 = vmatprep.subr.bf16.mxu0 0
        %786 = vmatpush1.bf16.xpose.msra.mxu0 %v769
        %787 = vmatprep.subr.bf16.mxu0 0
        %788 = vmatpush2.bf16.xpose.msra.mxu0 0
        %789 = vmatprep.subr.bf16.mxu0 0
        %790 = vmatpush2.bf16.xpose.msra.mxu0 0
        %791 = vmatprep.subr.bf16.mxu0 0
        %792 = vmatpush2.bf16.xpose.msra.mxu0 0
        %793 = vmatprep.subr.bf16.mxu0 0
        %794 = vmatpush2.bf16.xpose.msra.mxu0 0
        %795 = vmatprep.subr.bf16.mxu0 0
        %796 = vmatpush2.bf16.xpose.msra.mxu0 0
        %797 = vmatprep.subr.bf16.mxu0 0
        %798 = vmatpush2.bf16.xpose.msra.mxu0 0
        %799 = vmatprep.subr.bf16.mxu0 0
        %800 = vmatpush2.bf16.xpose.msra.mxu0 0
        %801 = vmatprep.subr.bf16.mxu0 0
        %802 = vmatpush2.bf16.xpose.msra.mxu0 0
        %803 = vmatprep.mubr.bf16.mxu0 0
        %804 = vmatmul.mubr.bf16.gmra.mxu0 %v766
        %v805 = vpop.f32.mrf.mxu0
        %v806 = vadd.f32 0.0, %v805
        %v807 = vpop.f32.mrf.mxu0
        %v808 = vpop.f32.mrf.mxu0
        %v809 = vadd.f32 0.0, %v808
        %v810 = vpop.f32.mrf.mxu0
        %811 = vdwg.mxu0
        %v812 = vsel %vm445, %v806, -inf
        %813 = vmax.xlane.f32.xlu0 %v812
        %v814 = vpop.xlane.xlu0 %813
        %v815 = vsel %vm445, %v809, -inf
        %816 = vmax.xlane.f32.xlu0 %v815
        %v817 = vpop.xlane.xlu0 %816
        %v818 = vsub.f32 %v806, %v814
        %v819 = vsub.f32 %v809, %v817
        %v820 = vmul.f32 %v818, 1.442695
        %v821 = vpow.pop %v820
        %v822 = vmul.f32 %v819, 1.442695
        %v823 = vpow.pop %v822
        %s824 = sld [smem:[#allocation9 + $0x2]]
        %v825 = vsel %vm445, %v821, 0.0
        %826 = vadd.xlane.f32.xlu0 %v825
        %v827 = vpop.xlane.xlu0 %826
        %v828 = vsel %vm445, %v823, 0.0
        %829 = vadd.xlane.f32.xlu0 %v828
        %v830 = vpop.xlane.xlu0 %829
        %v831 = vrcp.pop %v827
        %v832 = vrcp.pop %v830
        %v833 = vstv %s824
        %v834 = vmul.f32 %v833, %v831
        %v835 = vmul.f32 %v833, %v832
        %v836 = vmul.f32 %v821, %v834
        %v837 = vmul.f32 %v823, %v835
        %s838 = scalar_lea.vmem [#allocation8], 16
        %v839 = vld [vmem:[%s838] sm:$0xf]
        %v840 = vld [vmem:[%s838 + $0x4] sm:$0xf]
        %v841 = vunpack.c.l.bf16 %v839
        %v842 = vunpack.c.l.bf16 %v840
        %v843 = vadd.f32 %v836, %v841
        %v844 = vadd.f32 %v837, %v842
        %v845 = vpack.c.bf16 %v844, %v843
        %846 = vrot.lane.b32.xlu0 %v393, 56
        %v847 = vpop.permute.xlu0 %846
        %v850 = vsel %vm445, %v845, 0
        %852 = vmatprep.subr.bf16.mxu0 0
        %853 = vmatpush1.bf16.msra.mxu0 0
        %854 = vmatprep.subr.bf16.mxu0 0
        %855 = vmatpush1.bf16.msra.mxu0 0
        %856 = vmatprep.subr.bf16.mxu0 0
        %857 = vmatpush1.bf16.msra.mxu0 0
        %858 = vmatprep.subr.bf16.mxu0 0
        %859 = vmatpush1.bf16.msra.mxu0 0
        %860 = vmatprep.subr.bf16.mxu0 0
        %861 = vmatpush1.bf16.msra.mxu0 0
        %862 = vmatprep.subr.bf16.mxu0 0
        %863 = vmatpush1.bf16.msra.mxu0 0
        %864 = vmatprep.subr.bf16.mxu0 0
        %865 = vmatpush1.bf16.msra.mxu0 0
        %866 = vmatprep.subr.bf16.mxu0 0
        %867 = vmatpush1.bf16.msra.mxu0 %v847
        %868 = vmatprep.subr.bf16.mxu0 0
        %869 = vmatpush2.bf16.msra.mxu0 0
        %870 = vmatprep.subr.bf16.mxu0 0
        %871 = vmatpush2.bf16.msra.mxu0 0
        %872 = vmatprep.subr.bf16.mxu0 0
        %873 = vmatpush2.bf16.msra.mxu0 0
        %874 = vmatprep.subr.bf16.mxu0 0
        %875 = vmatpush2.bf16.msra.mxu0 0
        %876 = vmatprep.subr.bf16.mxu0 0
        %877 = vmatpush2.bf16.msra.mxu0 0
        %878 = vmatprep.subr.bf16.mxu0 0
        %879 = vmatpush2.bf16.msra.mxu0 0
        %880 = vmatprep.subr.bf16.mxu0 0
        %881 = vmatpush2.bf16.msra.mxu0 0
        %882 = vmatprep.subr.bf16.mxu0 0
        %883 = vmatpush2.bf16.msra.mxu0 0
        %884 = vmatprep.mubr.bf16.mxu0 0
        %885 = vmatmul.mubr.bf16.gmra.mxu0 %v850
        %v886 = vpop.f32.mrf.mxu0
        %v887 = vadd.f32 0.0, %v886
        %v888 = vpop.f32.mrf.mxu0
        %v889 = vpop.f32.mrf.mxu0
        %v890 = vadd.f32 0.0, %v889
        %v891 = vpop.f32.mrf.mxu0
        %892 = vdwg.mxu0
        %v893 = vpack.c.bf16 %v890, %v887
        %v894 = vld [vmem:[#allocation10 + $0x4] sm:$0x3]
        %v896 = vsel %vm397, %v893, 0
        %v899 = vsel %vm669, %v894, 0
        %901 = vmatprep.subr.bf16.mxu0 0
        %902 = vmatpush1.bf16.msra.mxu0 0
        %903 = vmatprep.subr.bf16.mxu0 0
        %904 = vmatpush1.bf16.msra.mxu0 0
        %905 = vmatprep.subr.bf16.mxu0 0
        %906 = vmatpush1.bf16.msra.mxu0 0
        %907 = vmatprep.subr.bf16.mxu0 0
        %908 = vmatpush1.bf16.msra.mxu0 0
        %909 = vmatprep.subr.bf16.mxu0 0
        %910 = vmatpush1.bf16.msra.mxu0 0
        %911 = vmatprep.subr.bf16.mxu0 0
        %912 = vmatpush1.bf16.msra.mxu0 0
        %913 = vmatprep.subr.bf16.mxu0 0
        %914 = vmatpush1.bf16.msra.mxu0 0
        %915 = vmatprep.subr.bf16.mxu0 0
        %916 = vmatpush1.bf16.msra.mxu0 %v899
        %917 = vmatprep.subr.bf16.mxu0 0
        %918 = vmatpush2.bf16.msra.mxu0 0
        %919 = vmatprep.subr.bf16.mxu0 0
        %920 = vmatpush2.bf16.msra.mxu0 0
        %921 = vmatprep.subr.bf16.mxu0 0
        %922 = vmatpush2.bf16.msra.mxu0 0
        %923 = vmatprep.subr.bf16.mxu0 0
        %924 = vmatpush2.bf16.msra.mxu0 0
        %925 = vmatprep.subr.bf16.mxu0 0
        %926 = vmatpush2.bf16.msra.mxu0 0
        %927 = vmatprep.subr.bf16.mxu0 0
        %928 = vmatpush2.bf16.msra.mxu0 0
        %929 = vmatprep.subr.bf16.mxu0 0
        %930 = vmatpush2.bf16.msra.mxu0 0
        %931 = vmatprep.subr.bf16.mxu0 0
        %932 = vmatpush2.bf16.msra.mxu0 0
        %933 = vmatprep.mubr.bf16.mxu0 0
        %934 = vmatmul.mubr.bf16.gmra.mxu0 %v896
        %v935 = vpop.f32.mrf.mxu0
        %v936 = vadd.f32 0.0, %v935
        %v937 = vpop.f32.mrf.mxu0
        %v938 = vpop.f32.mrf.mxu0
        %v939 = vadd.f32 0.0, %v938
        %v940 = vpop.f32.mrf.mxu0
        %941 = vdwg.mxu0
        %v942 = vadd.f32 %v755, %v936
        %v943 = vadd.f32 %v758, %v939
        %944 = vrot.lane.b32.xlu0 %v393, 116
        %v945 = vpop.permute.xlu0 %944
        %946 = vrot.lane.b32.xlu0 %v393, 84
        %v947 = vpop.permute.xlu0 %946
        %v949 = vsel %vm397, %v945, 0
        %v952 = vsel %vm397, %v947, 0
        %954 = vmatprep.subr.bf16.mxu0 0
        %955 = vmatpush1.bf16.xpose.msra.mxu0 0
        %956 = vmatprep.subr.bf16.mxu0 0
        %957 = vmatpush1.bf16.xpose.msra.mxu0 0
        %958 = vmatprep.subr.bf16.mxu0 0
        %959 = vmatpush1.bf16.xpose.msra.mxu0 0
        %960 = vmatprep.subr.bf16.mxu0 0
        %961 = vmatpush1.bf16.xpose.msra.mxu0 0
        %962 = vmatprep.subr.bf16.mxu0 0
        %963 = vmatpush1.bf16.xpose.msra.mxu0 0
        %964 = vmatprep.subr.bf16.mxu0 0
        %965 = vmatpush1.bf16.xpose.msra.mxu0 0
        %966 = vmatprep.subr.bf16.mxu0 0
        %967 = vmatpush1.bf16.xpose.msra.mxu0 0
        %968 = vmatprep.subr.bf16.mxu0 0
        %969 = vmatpush1.bf16.xpose.msra.mxu0 %v952
        %970 = vmatprep.subr.bf16.mxu0 0
        %971 = vmatpush2.bf16.xpose.msra.mxu0 0
        %972 = vmatprep.subr.bf16.mxu0 0
        %973 = vmatpush2.bf16.xpose.msra.mxu0 0
        %974 = vmatprep.subr.bf16.mxu0 0
        %975 = vmatpush2.bf16.xpose.msra.mxu0 0
        %976 = vmatprep.subr.bf16.mxu0 0
        %977 = vmatpush2.bf16.xpose.msra.mxu0 0
        %978 = vmatprep.subr.bf16.mxu0 0
        %979 = vmatpush2.bf16.xpose.msra.mxu0 0
        %980 = vmatprep.subr.bf16.mxu0 0
        %981 = vmatpush2.bf16.xpose.msra.mxu0 0
        %982 = vmatprep.subr.bf16.mxu0 0
        %983 = vmatpush2.bf16.xpose.msra.mxu0 0
        %984 = vmatprep.subr.bf16.mxu0 0
        %985 = vmatpush2.bf16.xpose.msra.mxu0 0
        %986 = vmatprep.mubr.bf16.mxu0 0
        %987 = vmatmul.mubr.bf16.gmra.mxu0 %v949
        %v988 = vpop.f32.mrf.mxu0
        %v989 = vadd.f32 0.0, %v988
        %v990 = vpop.f32.mrf.mxu0
        %v991 = vpop.f32.mrf.mxu0
        %v992 = vadd.f32 0.0, %v991
        %v993 = vpop.f32.mrf.mxu0
        %994 = vdwg.mxu0
        %v995 = vsel %vm445, %v989, -inf
        %996 = vmax.xlane.f32.xlu0 %v995
        %v997 = vpop.xlane.xlu0 %996
        %v998 = vsel %vm445, %v992, -inf
        %999 = vmax.xlane.f32.xlu0 %v998
        %v1000 = vpop.xlane.xlu0 %999
        %v1001 = vsub.f32 %v989, %v997
        %v1002 = vsub.f32 %v992, %v1000
        %v1003 = vmul.f32 %v1001, 1.442695
        %v1004 = vpow.pop %v1003
        %v1005 = vmul.f32 %v1002, 1.442695
        %v1006 = vpow.pop %v1005
        %s1007 = sld [smem:[#allocation9 + $0x3]]
        %v1008 = vsel %vm445, %v1004, 0.0
        %1009 = vadd.xlane.f32.xlu0 %v1008
        %v1010 = vpop.xlane.xlu0 %1009
        %v1011 = vsel %vm445, %v1006, 0.0
        %1012 = vadd.xlane.f32.xlu0 %v1011
        %v1013 = vpop.xlane.xlu0 %1012
        %v1014 = vrcp.pop %v1010
        %v1015 = vrcp.pop %v1013
        %v1016 = vstv %s1007
        %v1017 = vmul.f32 %v1016, %v1014
        %v1018 = vmul.f32 %v1016, %v1015
        %v1019 = vmul.f32 %v1004, %v1017
        %v1020 = vmul.f32 %v1006, %v1018
        %s1021 = scalar_lea.vmem [#allocation8], 24
        %v1022 = vld [vmem:[%s1021] sm:$0xf]
        %v1023 = vld [vmem:[%s1021 + $0x4] sm:$0xf]
        %v1024 = vunpack.c.l.bf16 %v1022
        %v1025 = vunpack.c.l.bf16 %v1023
        %v1026 = vadd.f32 %v1019, %v1024
        %v1027 = vadd.f32 %v1020, %v1025
        %v1028 = vpack.c.bf16 %v1027, %v1026
        %1029 = vrot.lane.b32.xlu0 %v393, 52
        %v1030 = vpop.permute.xlu0 %1029
        %v1033 = vsel %vm445, %v1028, 0
        %1035 = vmatprep.subr.bf16.mxu0 0
        %1036 = vmatpush1.bf16.msra.mxu0 0
        %1037 = vmatprep.subr.bf16.mxu0 0
        %1038 = vmatpush1.bf16.msra.mxu0 0
        %1039 = vmatprep.subr.bf16.mxu0 0
        %1040 = vmatpush1.bf16.msra.mxu0 0
        %1041 = vmatprep.subr.bf16.mxu0 0
        %1042 = vmatpush1.bf16.msra.mxu0 0
        %1043 = vmatprep.subr.bf16.mxu0 0
        %1044 = vmatpush1.bf16.msra.mxu0 0
        %1045 = vmatprep.subr.bf16.mxu0 0
        %1046 = vmatpush1.bf16.msra.mxu0 0
        %1047 = vmatprep.subr.bf16.mxu0 0
        %1048 = vmatpush1.bf16.msra.mxu0 0
        %1049 = vmatprep.subr.bf16.mxu0 0
        %1050 = vmatpush1.bf16.msra.mxu0 %v1030
        %1051 = vmatprep.subr.bf16.mxu0 0
        %1052 = vmatpush2.bf16.msra.mxu0 0
        %1053 = vmatprep.subr.bf16.mxu0 0
        %1054 = vmatpush2.bf16.msra.mxu0 0
        %1055 = vmatprep.subr.bf16.mxu0 0
        %1056 = vmatpush2.bf16.msra.mxu0 0
        %1057 = vmatprep.subr.bf16.mxu0 0
        %1058 = vmatpush2.bf16.msra.mxu0 0
        %1059 = vmatprep.subr.bf16.mxu0 0
        %1060 = vmatpush2.bf16.msra.mxu0 0
        %1061 = vmatprep.subr.bf16.mxu0 0
        %1062 = vmatpush2.bf16.msra.mxu0 0
        %1063 = vmatprep.subr.bf16.mxu0 0
        %1064 = vmatpush2.bf16.msra.mxu0 0
        %1065 = vmatprep.subr.bf16.mxu0 0
        %1066 = vmatpush2.bf16.msra.mxu0 0
        %1067 = vmatprep.mubr.bf16.mxu0 0
        %1068 = vmatmul.mubr.bf16.gmra.mxu0 %v1033
        %v1069 = vpop.f32.mrf.mxu0
        %v1070 = vadd.f32 0.0, %v1069
        %v1071 = vpop.f32.mrf.mxu0
        %v1072 = vpop.f32.mrf.mxu0
        %v1073 = vadd.f32 0.0, %v1072
        %v1074 = vpop.f32.mrf.mxu0
        %1075 = vdwg.mxu0
        %v1076 = vpack.c.bf16 %v1073, %v1070
        %v1077 = vld [vmem:[#allocation10 + $0x4] sm:$0xc]
        %v1079 = vunpack.c.l.b16 %v1077
        %v1080 = vpack.c.b16 %v1079, %v1079
        %v1081 = vrot.slane %v1080, 2
        %v1083 = vsel %vm397, %v1076, 0
        %v1086 = vsel %vm669, %v1081, 0
        %1088 = vmatprep.subr.bf16.mxu0 0
        %1089 = vmatpush1.bf16.msra.mxu0 0
        %1090 = vmatprep.subr.bf16.mxu0 0
        %1091 = vmatpush1.bf16.msra.mxu0 0
        %1092 = vmatprep.subr.bf16.mxu0 0
        %1093 = vmatpush1.bf16.msra.mxu0 0
        %1094 = vmatprep.subr.bf16.mxu0 0
        %1095 = vmatpush1.bf16.msra.mxu0 0
        %1096 = vmatprep.subr.bf16.mxu0 0
        %1097 = vmatpush1.bf16.msra.mxu0 0
        %1098 = vmatprep.subr.bf16.mxu0 0
        %1099 = vmatpush1.bf16.msra.mxu0 0
        %1100 = vmatprep.subr.bf16.mxu0 0
        %1101 = vmatpush1.bf16.msra.mxu0 0
        %1102 = vmatprep.subr.bf16.mxu0 0
        %1103 = vmatpush1.bf16.msra.mxu0 %v1086
        %1104 = vmatprep.subr.bf16.mxu0 0
        %1105 = vmatpush2.bf16.msra.mxu0 0
        %1106 = vmatprep.subr.bf16.mxu0 0
        %1107 = vmatpush2.bf16.msra.mxu0 0
        %1108 = vmatprep.subr.bf16.mxu0 0
        %1109 = vmatpush2.bf16.msra.mxu0 0
        %1110 = vmatprep.subr.bf16.mxu0 0
        %1111 = vmatpush2.bf16.msra.mxu0 0
        %1112 = vmatprep.subr.bf16.mxu0 0
        %1113 = vmatpush2.bf16.msra.mxu0 0
        %1114 = vmatprep.subr.bf16.mxu0 0
        %1115 = vmatpush2.bf16.msra.mxu0 0
        %1116 = vmatprep.subr.bf16.mxu0 0
        %1117 = vmatpush2.bf16.msra.mxu0 0
        %1118 = vmatprep.subr.bf16.mxu0 0
        %1119 = vmatpush2.bf16.msra.mxu0 0
        %1120 = vmatprep.mubr.bf16.mxu0 0
        %1121 = vmatmul.mubr.bf16.gmra.mxu0 %v1083
        %v1122 = vpop.f32.mrf.mxu0
        %v1123 = vadd.f32 0.0, %v1122
        %v1124 = vpop.f32.mrf.mxu0
        %v1125 = vpop.f32.mrf.mxu0
        %v1126 = vadd.f32 0.0, %v1125
        %v1127 = vpop.f32.mrf.mxu0
        %1128 = vdwg.mxu0
        %v1129 = vadd.f32 %v942, %v1123
        %v1130 = vadd.f32 %v943, %v1126
        %1131 = vrot.lane.b32.xlu0 %v393, 112
        %v1132 = vpop.permute.xlu0 %1131
        %1133 = vrot.lane.b32.xlu0 %v393, 80
        %v1134 = vpop.permute.xlu0 %1133
        %v1136 = vsel %vm397, %v1132, 0
        %v1139 = vsel %vm397, %v1134, 0
        %1141 = vmatprep.subr.bf16.mxu0 0
        %1142 = vmatpush1.bf16.xpose.msra.mxu0 0
        %1143 = vmatprep.subr.bf16.mxu0 0
        %1144 = vmatpush1.bf16.xpose.msra.mxu0 0
        %1145 = vmatprep.subr.bf16.mxu0 0
        %1146 = vmatpush1.bf16.xpose.msra.mxu0 0
        %1147 = vmatprep.subr.bf16.mxu0 0
        %1148 = vmatpush1.bf16.xpose.msra.mxu0 0
        %1149 = vmatprep.subr.bf16.mxu0 0
        %1150 = vmatpush1.bf16.xpose.msra.mxu0 0
        %1151 = vmatprep.subr.bf16.mxu0 0
        %1152 = vmatpush1.bf16.xpose.msra.mxu0 0
        %1153 = vmatprep.subr.bf16.mxu0 0
        %1154 = vmatpush1.bf16.xpose.msra.mxu0 0
        %1155 = vmatprep.subr.bf16.mxu0 0
        %1156 = vmatpush1.bf16.xpose.msra.mxu0 %v1139
        %1157 = vmatprep.subr.bf16.mxu0 0
        %1158 = vmatpush2.bf16.xpose.msra.mxu0 0
        %1159 = vmatprep.subr.bf16.mxu0 0
        %1160 = vmatpush2.bf16.xpose.msra.mxu0 0
        %1161 = vmatprep.subr.bf16.mxu0 0
        %1162 = vmatpush2.bf16.xpose.msra.mxu0 0
        %1163 = vmatprep.subr.bf16.mxu0 0
        %1164 = vmatpush2.bf16.xpose.msra.mxu0 0
        %1165 = vmatprep.subr.bf16.mxu0 0
        %1166 = vmatpush2.bf16.xpose.msra.mxu0 0
        %1167 = vmatprep.subr.bf16.mxu0 0
        %1168 = vmatpush2.bf16.xpose.msra.mxu0 0
        %1169 = vmatprep.subr.bf16.mxu0 0
        %1170 = vmatpush2.bf16.xpose.msra.mxu0 0
        %1171 = vmatprep.subr.bf16.mxu0 0
        %1172 = vmatpush2.bf16.xpose.msra.mxu0 0
        %1173 = vmatprep.mubr.bf16.mxu0 0
        %1174 = vmatmul.mubr.bf16.gmra.mxu0 %v1136
        %v1175 = vpop.f32.mrf.mxu0
        %v1176 = vadd.f32 0.0, %v1175
        %v1177 = vpop.f32.mrf.mxu0
        %v1178 = vpop.f32.mrf.mxu0
        %v1179 = vadd.f32 0.0, %v1178
        %v1180 = vpop.f32.mrf.mxu0
        %1181 = vdwg.mxu0
        %v1182 = vsel %vm445, %v1176, -inf
        %1183 = vmax.xlane.f32.xlu0 %v1182
        %v1184 = vpop.xlane.xlu0 %1183
        %v1185 = vsel %vm445, %v1179, -inf
        %1186 = vmax.xlane.f32.xlu0 %v1185
        %v1187 = vpop.xlane.xlu0 %1186
        %v1188 = vsub.f32 %v1176, %v1184
        %v1189 = vsub.f32 %v1179, %v1187
        %v1190 = vmul.f32 %v1188, 1.442695
        %v1191 = vpow.pop %v1190
        %v1192 = vmul.f32 %v1189, 1.442695
        %v1193 = vpow.pop %v1192
        %s1194 = sld [smem:[#allocation9 + $0x4]]
        %v1195 = vsel %vm445, %v1191, 0.0
        %1196 = vadd.xlane.f32.xlu0 %v1195
        %v1197 = vpop.xlane.xlu0 %1196
        %v1198 = vsel %vm445, %v1193, 0.0
        %1199 = vadd.xlane.f32.xlu0 %v1198
        %v1200 = vpop.xlane.xlu0 %1199
        %v1201 = vrcp.pop %v1197
        %v1202 = vrcp.pop %v1200
        %v1203 = vstv %s1194
        %v1204 = vmul.f32 %v1203, %v1201
        %v1205 = vmul.f32 %v1203, %v1202
        %v1206 = vmul.f32 %v1191, %v1204
        %v1207 = vmul.f32 %v1193, %v1205
        %s1208 = scalar_lea.vmem [#allocation8], 32
        %v1209 = vld [vmem:[%s1208] sm:$0xf]
        %v1210 = vld [vmem:[%s1208 + $0x4] sm:$0xf]
        %v1211 = vunpack.c.l.bf16 %v1209
        %v1212 = vunpack.c.l.bf16 %v1210
        %v1213 = vadd.f32 %v1206, %v1211
        %v1214 = vadd.f32 %v1207, %v1212
        %v1215 = vpack.c.bf16 %v1214, %v1213
        %1216 = vrot.lane.b32.xlu0 %v393, 48
        %v1217 = vpop.permute.xlu0 %1216
        %v1220 = vsel %vm445, %v1215, 0
        %1222 = vmatprep.subr.bf16.mxu0 0
        %1223 = vmatpush1.bf16.msra.mxu0 0
        %1224 = vmatprep.subr.bf16.mxu0 0
        %1225 = vmatpush1.bf16.msra.mxu0 0
        %1226 = vmatprep.subr.bf16.mxu0 0
        %1227 = vmatpush1.bf16.msra.mxu0 0
        %1228 = vmatprep.subr.bf16.mxu0 0
        %1229 = vmatpush1.bf16.msra.mxu0 0
        %1230 = vmatprep.subr.bf16.mxu0 0
        %1231 = vmatpush1.bf16.msra.mxu0 0
        %1232 = vmatprep.subr.bf16.mxu0 0
        %1233 = vmatpush1.bf16.msra.mxu0 0
        %1234 = vmatprep.subr.bf16.mxu0 0
        %1235 = vmatpush1.bf16.msra.mxu0 0
        %1236 = vmatprep.subr.bf16.mxu0 0
        %1237 = vmatpush1.bf16.msra.mxu0 %v1217
        %1238 = vmatprep.subr.bf16.mxu0 0
        %1239 = vmatpush2.bf16.msra.mxu0 0
        %1240 = vmatprep.subr.bf16.mxu0 0
        %1241 = vmatpush2.bf16.msra.mxu0 0
        %1242 = vmatprep.subr.bf16.mxu0 0
        %1243 = vmatpush2.bf16.msra.mxu0 0
        %1244 = vmatprep.subr.bf16.mxu0 0
        %1245 = vmatpush2.bf16.msra.mxu0 0
        %1246 = vmatprep.subr.bf16.mxu0 0
        %1247 = vmatpush2.bf16.msra.mxu0 0
        %1248 = vmatprep.subr.bf16.mxu0 0
        %1249 = vmatpush2.bf16.msra.mxu0 0
        %1250 = vmatprep.subr.bf16.mxu0 0
        %1251 = vmatpush2.bf16.msra.mxu0 0
        %1252 = vmatprep.subr.bf16.mxu0 0
        %1253 = vmatpush2.bf16.msra.mxu0 0
        %1254 = vmatprep.mubr.bf16.mxu0 0
        %1255 = vmatmul.mubr.bf16.gmra.mxu0 %v1220
        %v1256 = vpop.f32.mrf.mxu0
        %v1257 = vadd.f32 0.0, %v1256
        %v1258 = vpop.f32.mrf.mxu0
        %v1259 = vpop.f32.mrf.mxu0
        %v1260 = vadd.f32 0.0, %v1259
        %v1261 = vpop.f32.mrf.mxu0
        %1262 = vdwg.mxu0
        %v1263 = vpack.c.bf16 %v1260, %v1257
        %v1264 = vld [vmem:[#allocation10 + $0x8] sm:$0x3]
        %v1266 = vsel %vm397, %v1263, 0
        %v1269 = vsel %vm669, %v1264, 0
        %1271 = vmatprep.subr.bf16.mxu0 0
        %1272 = vmatpush1.bf16.msra.mxu0 0
        %1273 = vmatprep.subr.bf16.mxu0 0
        %1274 = vmatpush1.bf16.msra.mxu0 0
        %1275 = vmatprep.subr.bf16.mxu0 0
        %1276 = vmatpush1.bf16.msra.mxu0 0
        %1277 = vmatprep.subr.bf16.mxu0 0
        %1278 = vmatpush1.bf16.msra.mxu0 0
        %1279 = vmatprep.subr.bf16.mxu0 0
        %1280 = vmatpush1.bf16.msra.mxu0 0
        %1281 = vmatprep.subr.bf16.mxu0 0
        %1282 = vmatpush1.bf16.msra.mxu0 0
        %1283 = vmatprep.subr.bf16.mxu0 0
        %1284 = vmatpush1.bf16.msra.mxu0 0
        %1285 = vmatprep.subr.bf16.mxu0 0
        %1286 = vmatpush1.bf16.msra.mxu0 %v1269
        %1287 = vmatprep.subr.bf16.mxu0 0
        %1288 = vmatpush2.bf16.msra.mxu0 0
        %1289 = vmatprep.subr.bf16.mxu0 0
        %1290 = vmatpush2.bf16.msra.mxu0 0
        %1291 = vmatprep.subr.bf16.mxu0 0
        %1292 = vmatpush2.bf16.msra.mxu0 0
        %1293 = vmatprep.subr.bf16.mxu0 0
        %1294 = vmatpush2.bf16.msra.mxu0 0
        %1295 = vmatprep.subr.bf16.mxu0 0
        %1296 = vmatpush2.bf16.msra.mxu0 0
        %1297 = vmatprep.subr.bf16.mxu0 0
        %1298 = vmatpush2.bf16.msra.mxu0 0
        %1299 = vmatprep.subr.bf16.mxu0 0
        %1300 = vmatpush2.bf16.msra.mxu0 0
        %1301 = vmatprep.subr.bf16.mxu0 0
        %1302 = vmatpush2.bf16.msra.mxu0 0
        %1303 = vmatprep.mubr.bf16.mxu0 0
        %1304 = vmatmul.mubr.bf16.gmra.mxu0 %v1266
        %v1305 = vpop.f32.mrf.mxu0
        %v1306 = vadd.f32 0.0, %v1305
        %v1307 = vpop.f32.mrf.mxu0
        %v1308 = vpop.f32.mrf.mxu0
        %v1309 = vadd.f32 0.0, %v1308
        %v1310 = vpop.f32.mrf.mxu0
        %1311 = vdwg.mxu0
        %v1312 = vadd.f32 %v1129, %v1306
        %v1313 = vadd.f32 %v1130, %v1309
        %1314 = vrot.lane.b32.xlu0 %v393, 108
        %v1315 = vpop.permute.xlu0 %1314
        %1316 = vrot.lane.b32.xlu0 %v393, 76
        %v1317 = vpop.permute.xlu0 %1316
        %v1319 = vsel %vm397, %v1315, 0
        %v1322 = vsel %vm397, %v1317, 0
        %1324 = vmatprep.subr.bf16.mxu0 0
        %1325 = vmatpush1.bf16.xpose.msra.mxu0 0
        %1326 = vmatprep.subr.bf16.mxu0 0
        %1327 = vmatpush1.bf16.xpose.msra.mxu0 0
        %1328 = vmatprep.subr.bf16.mxu0 0
        %1329 = vmatpush1.bf16.xpose.msra.mxu0 0
        %1330 = vmatprep.subr.bf16.mxu0 0
        %1331 = vmatpush1.bf16.xpose.msra.mxu0 0
        %1332 = vmatprep.subr.bf16.mxu0 0
        %1333 = vmatpush1.bf16.xpose.msra.mxu0 0
        %1334 = vmatprep.subr.bf16.mxu0 0
        %1335 = vmatpush1.bf16.xpose.msra.mxu0 0
        %1336 = vmatprep.subr.bf16.mxu0 0
        %1337 = vmatpush1.bf16.xpose.msra.mxu0 0
        %1338 = vmatprep.subr.bf16.mxu0 0
        %1339 = vmatpush1.bf16.xpose.msra.mxu0 %v1322
        %1340 = vmatprep.subr.bf16.mxu0 0
        %1341 = vmatpush2.bf16.xpose.msra.mxu0 0
        %1342 = vmatprep.subr.bf16.mxu0 0
        %1343 = vmatpush2.bf16.xpose.msra.mxu0 0
        %1344 = vmatprep.subr.bf16.mxu0 0
        %1345 = vmatpush2.bf16.xpose.msra.mxu0 0
        %1346 = vmatprep.subr.bf16.mxu0 0
        %1347 = vmatpush2.bf16.xpose.msra.mxu0 0
        %1348 = vmatprep.subr.bf16.mxu0 0
        %1349 = vmatpush2.bf16.xpose.msra.mxu0 0
        %1350 = vmatprep.subr.bf16.mxu0 0
        %1351 = vmatpush2.bf16.xpose.msra.mxu0 0
        %1352 = vmatprep.subr.bf16.mxu0 0
        %1353 = vmatpush2.bf16.xpose.msra.mxu0 0
        %1354 = vmatprep.subr.bf16.mxu0 0
        %1355 = vmatpush2.bf16.xpose.msra.mxu0 0
        %1356 = vmatprep.mubr.bf16.mxu0 0
        %1357 = vmatmul.mubr.bf16.gmra.mxu0 %v1319
        %v1358 = vpop.f32.mrf.mxu0
        %v1359 = vadd.f32 0.0, %v1358
        %v1360 = vpop.f32.mrf.mxu0
        %v1361 = vpop.f32.mrf.mxu0
        %v1362 = vadd.f32 0.0, %v1361
        %v1363 = vpop.f32.mrf.mxu0
        %1364 = vdwg.mxu0
        %v1365 = vsel %vm445, %v1359, -inf
        %1366 = vmax.xlane.f32.xlu0 %v1365
        %v1367 = vpop.xlane.xlu0 %1366
        %v1368 = vsel %vm445, %v1362, -inf
        %1369 = vmax.xlane.f32.xlu0 %v1368
        %v1370 = vpop.xlane.xlu0 %1369
        %v1371 = vsub.f32 %v1359, %v1367
        %v1372 = vsub.f32 %v1362, %v1370
        %v1373 = vmul.f32 %v1371, 1.442695
        %v1374 = vpow.pop %v1373
        %v1375 = vmul.f32 %v1372, 1.442695
        %v1376 = vpow.pop %v1375
        %s1377 = sld [smem:[#allocation9 + $0x5]]
        %v1378 = vsel %vm445, %v1374, 0.0
        %1379 = vadd.xlane.f32.xlu0 %v1378
        %v1380 = vpop.xlane.xlu0 %1379
        %v1381 = vsel %vm445, %v1376, 0.0
        %1382 = vadd.xlane.f32.xlu0 %v1381
        %v1383 = vpop.xlane.xlu0 %1382
        %v1384 = vrcp.pop %v1380
        %v1385 = vrcp.pop %v1383
        %v1386 = vstv %s1377
        %v1387 = vmul.f32 %v1386, %v1384
        %v1388 = vmul.f32 %v1386, %v1385
        %v1389 = vmul.f32 %v1374, %v1387
        %v1390 = vmul.f32 %v1376, %v1388
        %s1391 = scalar_lea.vmem [#allocation8], 40
        %v1392 = vld [vmem:[%s1391] sm:$0xf]
        %v1393 = vld [vmem:[%s1391 + $0x4] sm:$0xf]
        %v1394 = vunpack.c.l.bf16 %v1392
        %v1395 = vunpack.c.l.bf16 %v1393
        %v1396 = vadd.f32 %v1389, %v1394
        %v1397 = vadd.f32 %v1390, %v1395
        %v1398 = vpack.c.bf16 %v1397, %v1396
        %1399 = vrot.lane.b32.xlu0 %v393, 44
        %v1400 = vpop.permute.xlu0 %1399
        %v1403 = vsel %vm445, %v1398, 0
        %1405 = vmatprep.subr.bf16.mxu0 0
        %1406 = vmatpush1.bf16.msra.mxu0 0
        %1407 = vmatprep.subr.bf16.mxu0 0
        %1408 = vmatpush1.bf16.msra.mxu0 0
        %1409 = vmatprep.subr.bf16.mxu0 0
        %1410 = vmatpush1.bf16.msra.mxu0 0
        %1411 = vmatprep.subr.bf16.mxu0 0
        %1412 = vmatpush1.bf16.msra.mxu0 0
        %1413 = vmatprep.subr.bf16.mxu0 0
        %1414 = vmatpush1.bf16.msra.mxu0 0
        %1415 = vmatprep.subr.bf16.mxu0 0
        %1416 = vmatpush1.bf16.msra.mxu0 0
        %1417 = vmatprep.subr.bf16.mxu0 0
        %1418 = vmatpush1.bf16.msra.mxu0 0
        %1419 = vmatprep.subr.bf16.mxu0 0
        %1420 = vmatpush1.bf16.msra.mxu0 %v1400
        %1421 = vmatprep.subr.bf16.mxu0 0
        %1422 = vmatpush2.bf16.msra.mxu0 0
        %1423 = vmatprep.subr.bf16.mxu0 0
        %1424 = vmatpush2.bf16.msra.mxu0 0
        %1425 = vmatprep.subr.bf16.mxu0 0
        %1426 = vmatpush2.bf16.msra.mxu0 0
        %1427 = vmatprep.subr.bf16.mxu0 0
        %1428 = vmatpush2.bf16.msra.mxu0 0
        %1429 = vmatprep.subr.bf16.mxu0 0
        %1430 = vmatpush2.bf16.msra.mxu0 0
        %1431 = vmatprep.subr.bf16.mxu0 0
        %1432 = vmatpush2.bf16.msra.mxu0 0
        %1433 = vmatprep.subr.bf16.mxu0 0
        %1434 = vmatpush2.bf16.msra.mxu0 0
        %1435 = vmatprep.subr.bf16.mxu0 0
        %1436 = vmatpush2.bf16.msra.mxu0 0
        %1437 = vmatprep.mubr.bf16.mxu0 0
        %1438 = vmatmul.mubr.bf16.gmra.mxu0 %v1403
        %v1439 = vpop.f32.mrf.mxu0
        %v1440 = vadd.f32 0.0, %v1439
        %v1441 = vpop.f32.mrf.mxu0
        %v1442 = vpop.f32.mrf.mxu0
        %v1443 = vadd.f32 0.0, %v1442
        %v1444 = vpop.f32.mrf.mxu0
        %1445 = vdwg.mxu0
        %v1446 = vpack.c.bf16 %v1443, %v1440
        %v1447 = vld [vmem:[#allocation10 + $0x8] sm:$0xc]
        %v1449 = vunpack.c.l.b16 %v1447
        %v1450 = vpack.c.b16 %v1449, %v1449
        %v1451 = vrot.slane %v1450, 2
        %v1453 = vsel %vm397, %v1446, 0
        %v1456 = vsel %vm669, %v1451, 0
        %1458 = vmatprep.subr.bf16.mxu0 0
        %1459 = vmatpush1.bf16.msra.mxu0 0
        %1460 = vmatprep.subr.bf16.mxu0 0
        %1461 = vmatpush1.bf16.msra.mxu0 0
        %1462 = vmatprep.subr.bf16.mxu0 0
        %1463 = vmatpush1.bf16.msra.mxu0 0
        %1464 = vmatprep.subr.bf16.mxu0 0
        %1465 = vmatpush1.bf16.msra.mxu0 0
        %1466 = vmatprep.subr.bf16.mxu0 0
        %1467 = vmatpush1.bf16.msra.mxu0 0
        %1468 = vmatprep.subr.bf16.mxu0 0
        %1469 = vmatpush1.bf16.msra.mxu0 0
        %1470 = vmatprep.subr.bf16.mxu0 0
        %1471 = vmatpush1.bf16.msra.mxu0 0
        %1472 = vmatprep.subr.bf16.mxu0 0
        %1473 = vmatpush1.bf16.msra.mxu0 %v1456
        %1474 = vmatprep.subr.bf16.mxu0 0
        %1475 = vmatpush2.bf16.msra.mxu0 0
        %1476 = vmatprep.subr.bf16.mxu0 0
        %1477 = vmatpush2.bf16.msra.mxu0 0
        %1478 = vmatprep.subr.bf16.mxu0 0
        %1479 = vmatpush2.bf16.msra.mxu0 0
        %1480 = vmatprep.subr.bf16.mxu0 0
        %1481 = vmatpush2.bf16.msra.mxu0 0
        %1482 = vmatprep.subr.bf16.mxu0 0
        %1483 = vmatpush2.bf16.msra.mxu0 0
        %1484 = vmatprep.subr.bf16.mxu0 0
        %1485 = vmatpush2.bf16.msra.mxu0 0
        %1486 = vmatprep.subr.bf16.mxu0 0
        %1487 = vmatpush2.bf16.msra.mxu0 0
        %1488 = vmatprep.subr.bf16.mxu0 0
        %1489 = vmatpush2.bf16.msra.mxu0 0
        %1490 = vmatprep.mubr.bf16.mxu0 0
        %1491 = vmatmul.mubr.bf16.gmra.mxu0 %v1453
        %v1492 = vpop.f32.mrf.mxu0
        %v1493 = vadd.f32 0.0, %v1492
        %v1494 = vpop.f32.mrf.mxu0
        %v1495 = vpop.f32.mrf.mxu0
        %v1496 = vadd.f32 0.0, %v1495
        %v1497 = vpop.f32.mrf.mxu0
        %1498 = vdwg.mxu0
        %v1499 = vadd.f32 %v1312, %v1493
        %v1500 = vadd.f32 %v1313, %v1496
        %1501 = vrot.lane.b32.xlu0 %v393, 104
        %v1502 = vpop.permute.xlu0 %1501
        %1503 = vrot.lane.b32.xlu0 %v393, 72
        %v1504 = vpop.permute.xlu0 %1503
        %v1506 = vsel %vm397, %v1502, 0
        %v1509 = vsel %vm397, %v1504, 0
        %1511 = vmatprep.subr.bf16.mxu0 0
        %1512 = vmatpush1.bf16.xpose.msra.mxu0 0
        %1513 = vmatprep.subr.bf16.mxu0 0
        %1514 = vmatpush1.bf16.xpose.msra.mxu0 0
        %1515 = vmatprep.subr.bf16.mxu0 0
        %1516 = vmatpush1.bf16.xpose.msra.mxu0 0
        %1517 = vmatprep.subr.bf16.mxu0 0
        %1518 = vmatpush1.bf16.xpose.msra.mxu0 0
        %1519 = vmatprep.subr.bf16.mxu0 0
        %1520 = vmatpush1.bf16.xpose.msra.mxu0 0
        %1521 = vmatprep.subr.bf16.mxu0 0
        %1522 = vmatpush1.bf16.xpose.msra.mxu0 0
        %1523 = vmatprep.subr.bf16.mxu0 0
        %1524 = vmatpush1.bf16.xpose.msra.mxu0 0
        %1525 = vmatprep.subr.bf16.mxu0 0
        %1526 = vmatpush1.bf16.xpose.msra.mxu0 %v1509
        %1527 = vmatprep.subr.bf16.mxu0 0
        %1528 = vmatpush2.bf16.xpose.msra.mxu0 0
        %1529 = vmatprep.subr.bf16.mxu0 0
        %1530 = vmatpush2.bf16.xpose.msra.mxu0 0
        %1531 = vmatprep.subr.bf16.mxu0 0
        %1532 = vmatpush2.bf16.xpose.msra.mxu0 0
        %1533 = vmatprep.subr.bf16.mxu0 0
        %1534 = vmatpush2.bf16.xpose.msra.mxu0 0
        %1535 = vmatprep.subr.bf16.mxu0 0
        %1536 = vmatpush2.bf16.xpose.msra.mxu0 0
        %1537 = vmatprep.subr.bf16.mxu0 0
        %1538 = vmatpush2.bf16.xpose.msra.mxu0 0
        %1539 = vmatprep.subr.bf16.mxu0 0
        %1540 = vmatpush2.bf16.xpose.msra.mxu0 0
        %1541 = vmatprep.subr.bf16.mxu0 0
        %1542 = vmatpush2.bf16.xpose.msra.mxu0 0
        %1543 = vmatprep.mubr.bf16.mxu0 0
        %1544 = vmatmul.mubr.bf16.gmra.mxu0 %v1506
        %v1545 = vpop.f32.mrf.mxu0
        %v1546 = vadd.f32 0.0, %v1545
        %v1547 = vpop.f32.mrf.mxu0
        %v1548 = vpop.f32.mrf.mxu0
        %v1549 = vadd.f32 0.0, %v1548
        %v1550 = vpop.f32.mrf.mxu0
        %1551 = vdwg.mxu0
        %v1552 = vsel %vm445, %v1546, -inf
        %1553 = vmax.xlane.f32.xlu0 %v1552
        %v1554 = vpop.xlane.xlu0 %1553
        %v1555 = vsel %vm445, %v1549, -inf
        %1556 = vmax.xlane.f32.xlu0 %v1555
        %v1557 = vpop.xlane.xlu0 %1556
        %v1558 = vsub.f32 %v1546, %v1554
        %v1559 = vsub.f32 %v1549, %v1557
        %v1560 = vmul.f32 %v1558, 1.442695
        %v1561 = vpow.pop %v1560
        %v1562 = vmul.f32 %v1559, 1.442695
        %v1563 = vpow.pop %v1562
        %s1564 = sld [smem:[#allocation9 + $0x6]]
        %v1565 = vsel %vm445, %v1561, 0.0
        %1566 = vadd.xlane.f32.xlu0 %v1565
        %v1567 = vpop.xlane.xlu0 %1566
        %v1568 = vsel %vm445, %v1563, 0.0
        %1569 = vadd.xlane.f32.xlu0 %v1568
        %v1570 = vpop.xlane.xlu0 %1569
        %v1571 = vrcp.pop %v1567
        %v1572 = vrcp.pop %v1570
        %v1573 = vstv %s1564
        %v1574 = vmul.f32 %v1573, %v1571
        %v1575 = vmul.f32 %v1573, %v1572
        %v1576 = vmul.f32 %v1561, %v1574
        %v1577 = vmul.f32 %v1563, %v1575
        %s1578 = scalar_lea.vmem [#allocation8], 48
        %v1579 = vld [vmem:[%s1578] sm:$0xf]
        %v1580 = vld [vmem:[%s1578 + $0x4] sm:$0xf]
        %v1581 = vunpack.c.l.bf16 %v1579
        %v1582 = vunpack.c.l.bf16 %v1580
        %v1583 = vadd.f32 %v1576, %v1581
        %v1584 = vadd.f32 %v1577, %v1582
        %v1585 = vpack.c.bf16 %v1584, %v1583
        %1586 = vrot.lane.b32.xlu0 %v393, 40
        %v1587 = vpop.permute.xlu0 %1586
        %v1590 = vsel %vm445, %v1585, 0
        %1592 = vmatprep.subr.bf16.mxu0 0
        %1593 = vmatpush1.bf16.msra.mxu0 0
        %1594 = vmatprep.subr.bf16.mxu0 0
        %1595 = vmatpush1.bf16.msra.mxu0 0
        %1596 = vmatprep.subr.bf16.mxu0 0
        %1597 = vmatpush1.bf16.msra.mxu0 0
        %1598 = vmatprep.subr.bf16.mxu0 0
        %1599 = vmatpush1.bf16.msra.mxu0 0
        %1600 = vmatprep.subr.bf16.mxu0 0
        %1601 = vmatpush1.bf16.msra.mxu0 0
        %1602 = vmatprep.subr.bf16.mxu0 0
        %1603 = vmatpush1.bf16.msra.mxu0 0
        %1604 = vmatprep.subr.bf16.mxu0 0
        %1605 = vmatpush1.bf16.msra.mxu0 0
        %1606 = vmatprep.subr.bf16.mxu0 0
        %1607 = vmatpush1.bf16.msra.mxu0 %v1587
        %1608 = vmatprep.subr.bf16.mxu0 0
        %1609 = vmatpush2.bf16.msra.mxu0 0
        %1610 = vmatprep.subr.bf16.mxu0 0
        %1611 = vmatpush2.bf16.msra.mxu0 0
        %1612 = vmatprep.subr.bf16.mxu0 0
        %1613 = vmatpush2.bf16.msra.mxu0 0
        %1614 = vmatprep.subr.bf16.mxu0 0
        %1615 = vmatpush2.bf16.msra.mxu0 0
        %1616 = vmatprep.subr.bf16.mxu0 0
        %1617 = vmatpush2.bf16.msra.mxu0 0
        %1618 = vmatprep.subr.bf16.mxu0 0
        %1619 = vmatpush2.bf16.msra.mxu0 0
        %1620 = vmatprep.subr.bf16.mxu0 0
        %1621 = vmatpush2.bf16.msra.mxu0 0
        %1622 = vmatprep.subr.bf16.mxu0 0
        %1623 = vmatpush2.bf16.msra.mxu0 0
        %1624 = vmatprep.mubr.bf16.mxu0 0
        %1625 = vmatmul.mubr.bf16.gmra.mxu0 %v1590
        %v1626 = vpop.f32.mrf.mxu0
        %v1627 = vadd.f32 0.0, %v1626
        %v1628 = vpop.f32.mrf.mxu0
        %v1629 = vpop.f32.mrf.mxu0
        %v1630 = vadd.f32 0.0, %v1629
        %v1631 = vpop.f32.mrf.mxu0
        %1632 = vdwg.mxu0
        %v1633 = vpack.c.bf16 %v1630, %v1627
        %v1634 = vld [vmem:[#allocation10 + $0xc] sm:$0x3]
        %v1636 = vsel %vm397, %v1633, 0
        %v1639 = vsel %vm669, %v1634, 0
        %1641 = vmatprep.subr.bf16.mxu0 0
        %1642 = vmatpush1.bf16.msra.mxu0 0
        %1643 = vmatprep.subr.bf16.mxu0 0
        %1644 = vmatpush1.bf16.msra.mxu0 0
        %1645 = vmatprep.subr.bf16.mxu0 0
        %1646 = vmatpush1.bf16.msra.mxu0 0
        %1647 = vmatprep.subr.bf16.mxu0 0
        %1648 = vmatpush1.bf16.msra.mxu0 0
        %1649 = vmatprep.subr.bf16.mxu0 0
        %1650 = vmatpush1.bf16.msra.mxu0 0
        %1651 = vmatprep.subr.bf16.mxu0 0
        %1652 = vmatpush1.bf16.msra.mxu0 0
        %1653 = vmatprep.subr.bf16.mxu0 0
        %1654 = vmatpush1.bf16.msra.mxu0 0
        %1655 = vmatprep.subr.bf16.mxu0 0
        %1656 = vmatpush1.bf16.msra.mxu0 %v1639
        %1657 = vmatprep.subr.bf16.mxu0 0
        %1658 = vmatpush2.bf16.msra.mxu0 0
        %1659 = vmatprep.subr.bf16.mxu0 0
        %1660 = vmatpush2.bf16.msra.mxu0 0
        %1661 = vmatprep.subr.bf16.mxu0 0
        %1662 = vmatpush2.bf16.msra.mxu0 0
        %1663 = vmatprep.subr.bf16.mxu0 0
        %1664 = vmatpush2.bf16.msra.mxu0 0
        %1665 = vmatprep.subr.bf16.mxu0 0
        %1666 = vmatpush2.bf16.msra.mxu0 0
        %1667 = vmatprep.subr.bf16.mxu0 0
        %1668 = vmatpush2.bf16.msra.mxu0 0
        %1669 = vmatprep.subr.bf16.mxu0 0
        %1670 = vmatpush2.bf16.msra.mxu0 0
        %1671 = vmatprep.subr.bf16.mxu0 0
        %1672 = vmatpush2.bf16.msra.mxu0 0
        %1673 = vmatprep.mubr.bf16.mxu0 0
        %1674 = vmatmul.mubr.bf16.gmra.mxu0 %v1636
        %v1675 = vpop.f32.mrf.mxu0
        %v1676 = vadd.f32 0.0, %v1675
        %v1677 = vpop.f32.mrf.mxu0
        %v1678 = vpop.f32.mrf.mxu0
        %v1679 = vadd.f32 0.0, %v1678
        %v1680 = vpop.f32.mrf.mxu0
        %1681 = vdwg.mxu0
        %v1682 = vadd.f32 %v1499, %v1676
        %v1683 = vadd.f32 %v1500, %v1679
        %1684 = vrot.lane.b32.xlu0 %v393, 100
        %v1685 = vpop.permute.xlu0 %1684
        %1686 = vrot.lane.b32.xlu0 %v393, 68
        %v1687 = vpop.permute.xlu0 %1686
        %v1689 = vsel %vm397, %v1685, 0
        %v1692 = vsel %vm397, %v1687, 0
        %1694 = vmatprep.subr.bf16.mxu0 0
        %1695 = vmatpush1.bf16.xpose.msra.mxu0 0
        %1696 = vmatprep.subr.bf16.mxu0 0
        %1697 = vmatpush1.bf16.xpose.msra.mxu0 0
        %1698 = vmatprep.subr.bf16.mxu0 0
        %1699 = vmatpush1.bf16.xpose.msra.mxu0 0
        %1700 = vmatprep.subr.bf16.mxu0 0
        %1701 = vmatpush1.bf16.xpose.msra.mxu0 0
        %1702 = vmatprep.subr.bf16.mxu0 0
        %1703 = vmatpush1.bf16.xpose.msra.mxu0 0
        %1704 = vmatprep.subr.bf16.mxu0 0
        %1705 = vmatpush1.bf16.xpose.msra.mxu0 0
        %1706 = vmatprep.subr.bf16.mxu0 0
        %1707 = vmatpush1.bf16.xpose.msra.mxu0 0
        %1708 = vmatprep.subr.bf16.mxu0 0
        %1709 = vmatpush1.bf16.xpose.msra.mxu0 %v1692
        %1710 = vmatprep.subr.bf16.mxu0 0
        %1711 = vmatpush2.bf16.xpose.msra.mxu0 0
        %1712 = vmatprep.subr.bf16.mxu0 0
        %1713 = vmatpush2.bf16.xpose.msra.mxu0 0
        %1714 = vmatprep.subr.bf16.mxu0 0
        %1715 = vmatpush2.bf16.xpose.msra.mxu0 0
        %1716 = vmatprep.subr.bf16.mxu0 0
        %1717 = vmatpush2.bf16.xpose.msra.mxu0 0
        %1718 = vmatprep.subr.bf16.mxu0 0
        %1719 = vmatpush2.bf16.xpose.msra.mxu0 0
        %1720 = vmatprep.subr.bf16.mxu0 0
        %1721 = vmatpush2.bf16.xpose.msra.mxu0 0
        %1722 = vmatprep.subr.bf16.mxu0 0
        %1723 = vmatpush2.bf16.xpose.msra.mxu0 0
        %1724 = vmatprep.subr.bf16.mxu0 0
        %1725 = vmatpush2.bf16.xpose.msra.mxu0 0
        %1726 = vmatprep.mubr.bf16.mxu0 0
        %1727 = vmatmul.mubr.bf16.gmra.mxu0 %v1689
        %v1728 = vpop.f32.mrf.mxu0
        %v1729 = vadd.f32 0.0, %v1728
        %v1730 = vpop.f32.mrf.mxu0
        %v1731 = vpop.f32.mrf.mxu0
        %v1732 = vadd.f32 0.0, %v1731
        %v1733 = vpop.f32.mrf.mxu0
        %1734 = vdwg.mxu0
        %v1735 = vsel %vm445, %v1729, -inf
        %1736 = vmax.xlane.f32.xlu0 %v1735
        %v1737 = vpop.xlane.xlu0 %1736
        %v1738 = vsel %vm445, %v1732, -inf
        %1739 = vmax.xlane.f32.xlu0 %v1738
        %v1740 = vpop.xlane.xlu0 %1739
        %v1741 = vsub.f32 %v1729, %v1737
        %v1742 = vsub.f32 %v1732, %v1740
        %v1743 = vmul.f32 %v1741, 1.442695
        %v1744 = vpow.pop %v1743
        %v1745 = vmul.f32 %v1742, 1.442695
        %v1746 = vpow.pop %v1745
        %s1747 = sld [smem:[#allocation9 + $0x7]]
        %v1748 = vsel %vm445, %v1744, 0.0
        %1749 = vadd.xlane.f32.xlu0 %v1748
        %v1750 = vpop.xlane.xlu0 %1749
        %v1751 = vsel %vm445, %v1746, 0.0
        %1752 = vadd.xlane.f32.xlu0 %v1751
        %v1753 = vpop.xlane.xlu0 %1752
        %v1754 = vrcp.pop %v1750
        %v1755 = vrcp.pop %v1753
        %v1756 = vstv %s1747
        %v1757 = vmul.f32 %v1756, %v1754
        %v1758 = vmul.f32 %v1756, %v1755
        %v1759 = vmul.f32 %v1744, %v1757
        %v1760 = vmul.f32 %v1746, %v1758
        %s1761 = scalar_lea.vmem [#allocation8], 56
        %v1762 = vld [vmem:[%s1761] sm:$0xf]
        %v1763 = vld [vmem:[%s1761 + $0x4] sm:$0xf]
        %v1764 = vunpack.c.l.bf16 %v1762
        %v1765 = vunpack.c.l.bf16 %v1763
        %v1766 = vadd.f32 %v1759, %v1764
        %v1767 = vadd.f32 %v1760, %v1765
        %v1768 = vpack.c.bf16 %v1767, %v1766
        %1769 = vrot.lane.b32.xlu0 %v393, 36
        %v1770 = vpop.permute.xlu0 %1769
        %v1773 = vsel %vm445, %v1768, 0
        %1775 = vmatprep.subr.bf16.mxu0 0
        %1776 = vmatpush1.bf16.msra.mxu0 0
        %1777 = vmatprep.subr.bf16.mxu0 0
        %1778 = vmatpush1.bf16.msra.mxu0 0
        %1779 = vmatprep.subr.bf16.mxu0 0
        %1780 = vmatpush1.bf16.msra.mxu0 0
        %1781 = vmatprep.subr.bf16.mxu0 0
        %1782 = vmatpush1.bf16.msra.mxu0 0
        %1783 = vmatprep.subr.bf16.mxu0 0
        %1784 = vmatpush1.bf16.msra.mxu0 0
        %1785 = vmatprep.subr.bf16.mxu0 0
        %1786 = vmatpush1.bf16.msra.mxu0 0
        %1787 = vmatprep.subr.bf16.mxu0 0
        %1788 = vmatpush1.bf16.msra.mxu0 0
        %1789 = vmatprep.subr.bf16.mxu0 0
        %1790 = vmatpush1.bf16.msra.mxu0 %v1770
        %1791 = vmatprep.subr.bf16.mxu0 0
        %1792 = vmatpush2.bf16.msra.mxu0 0
        %1793 = vmatprep.subr.bf16.mxu0 0
        %1794 = vmatpush2.bf16.msra.mxu0 0
        %1795 = vmatprep.subr.bf16.mxu0 0
        %1796 = vmatpush2.bf16.msra.mxu0 0
        %1797 = vmatprep.subr.bf16.mxu0 0
        %1798 = vmatpush2.bf16.msra.mxu0 0
        %1799 = vmatprep.subr.bf16.mxu0 0
        %1800 = vmatpush2.bf16.msra.mxu0 0
        %1801 = vmatprep.subr.bf16.mxu0 0
        %1802 = vmatpush2.bf16.msra.mxu0 0
        %1803 = vmatprep.subr.bf16.mxu0 0
        %1804 = vmatpush2.bf16.msra.mxu0 0
        %1805 = vmatprep.subr.bf16.mxu0 0
        %1806 = vmatpush2.bf16.msra.mxu0 0
        %1807 = vmatprep.mubr.bf16.mxu0 0
        %1808 = vmatmul.mubr.bf16.gmra.mxu0 %v1773
        %v1809 = vpop.f32.mrf.mxu0
        %v1810 = vadd.f32 0.0, %v1809
        %v1811 = vpop.f32.mrf.mxu0
        %v1812 = vpop.f32.mrf.mxu0
        %v1813 = vadd.f32 0.0, %v1812
        %v1814 = vpop.f32.mrf.mxu0
        %1815 = vdwg.mxu0
        %v1816 = vpack.c.bf16 %v1813, %v1810
        %v1817 = vld [vmem:[#allocation10 + $0xc] sm:$0xc]
        %v1819 = vunpack.c.l.b16 %v1817
        %v1820 = vpack.c.b16 %v1819, %v1819
        %v1821 = vrot.slane %v1820, 2
        %v1823 = vsel %vm397, %v1816, 0
        %v1826 = vsel %vm669, %v1821, 0
        %1828 = vmatprep.subr.bf16.mxu0 0
        %1829 = vmatpush1.bf16.msra.mxu0 0
        %1830 = vmatprep.subr.bf16.mxu0 0
        %1831 = vmatpush1.bf16.msra.mxu0 0
        %1832 = vmatprep.subr.bf16.mxu0 0
        %1833 = vmatpush1.bf16.msra.mxu0 0
        %1834 = vmatprep.subr.bf16.mxu0 0
        %1835 = vmatpush1.bf16.msra.mxu0 0
        %1836 = vmatprep.subr.bf16.mxu0 0
        %1837 = vmatpush1.bf16.msra.mxu0 0
        %1838 = vmatprep.subr.bf16.mxu0 0
        %1839 = vmatpush1.bf16.msra.mxu0 0
        %1840 = vmatprep.subr.bf16.mxu0 0
        %1841 = vmatpush1.bf16.msra.mxu0 0
        %1842 = vmatprep.subr.bf16.mxu0 0
        %1843 = vmatpush1.bf16.msra.mxu0 %v1826
        %1844 = vmatprep.subr.bf16.mxu0 0
        %1845 = vmatpush2.bf16.msra.mxu0 0
        %1846 = vmatprep.subr.bf16.mxu0 0
        %1847 = vmatpush2.bf16.msra.mxu0 0
        %1848 = vmatprep.subr.bf16.mxu0 0
        %1849 = vmatpush2.bf16.msra.mxu0 0
        %1850 = vmatprep.subr.bf16.mxu0 0
        %1851 = vmatpush2.bf16.msra.mxu0 0
        %1852 = vmatprep.subr.bf16.mxu0 0
        %1853 = vmatpush2.bf16.msra.mxu0 0
        %1854 = vmatprep.subr.bf16.mxu0 0
        %1855 = vmatpush2.bf16.msra.mxu0 0
        %1856 = vmatprep.subr.bf16.mxu0 0
        %1857 = vmatpush2.bf16.msra.mxu0 0
        %1858 = vmatprep.subr.bf16.mxu0 0
        %1859 = vmatpush2.bf16.msra.mxu0 0
        %1860 = vmatprep.mubr.bf16.mxu0 0
        %1861 = vmatmul.mubr.bf16.gmra.mxu0 %v1823
        %v1862 = vpop.f32.mrf.mxu0
        %v1863 = vadd.f32 0.0, %v1862
        %v1864 = vpop.f32.mrf.mxu0
        %v1865 = vpop.f32.mrf.mxu0
        %v1866 = vadd.f32 0.0, %v1865
        %v1867 = vpop.f32.mrf.mxu0
        %1868 = vdwg.mxu0
        %v1869 = vadd.f32 %v1682, %v1863
        %v1870 = vadd.f32 %v1683, %v1866
        %v1871 = vld [vmem:[%s5] sm:$0x1]
        %v1873 = vlaneseq
        %v1874 = vshrl.u32 %v1873, 7
        %v1875 = vsub.s32 0, %v1874
        %v1876 = vrot.slane %v1871, %v1875
        %v1878 = vadd.f32 %v1869, %v1876
        %v1879 = vadd.f32 %v1870, %v1876
        %1880 = vst.msk [vmem:[%s327] sm:$0xff] %vm348, %v1878
        %1881 = vst.msk [vmem:[%s327 + $0x8] sm:$0xff] %vm348, %v1879
        %s1882 = sand.u32 %s165, 1
        %s1883 = scalar_lea.sflag [#allocation4], %s1882
        %s1884 = sand.u32 %s165, 1
        %s1885 = smul.addr %s1884, 16
        %s1886 = scalar_lea.vmem [#allocation12], %s1885
        // Predicated region
        $region65: #{tpu_custom_call.1} parent=43 // pred_check
          %p1887 = pneg %p175
        $region66: #{tpu_custom_call.1} parent=43 // pred_check_branch
          %1889 = sbr.rel (%p1887) target = $region68
        $region67: #{tpu_custom_call.1} parent=43 // pred_region
          %s1891 = ssub.s32 256, 256
          %1892 = vsyncadd %s1883, %s1891
          %s1893 = smul.addr %s26, 2
          %s1894 = smul.addr %s1893, 128
          %s1895 = scalar_lea.hbm %s6, %s1894
          %s1896 = sshll.u32 %s1886, 4
          %s1897 = int_to_ptr.vmem [resolvable:$true] %s1896
          %1902 = dma.vmem_to_hbm [thread:$0]  %s1897, 256, %s1895, %s1883, 128, 128, 8
        $region68: #{tpu_custom_call.1} parent=43 // pred_fallthru
          _
      $region44: #{tpu_custom_call.1} parent=5 // pred_fallthru
        _
      %p1903 = scmp.le.s32.totalorder 2, %s21
      // Predicated region
      $region69: #{tpu_custom_call.1} parent=5 // pred_check
        %p1904 = pneg %p1903
      $region70: #{tpu_custom_call.1} parent=5 // pred_check_branch
        %1906 = sbr.rel (%p1904) target = $region72
      $region71: #{tpu_custom_call.1} parent=5 // pred_region
        %s1907 = ssub.s32 %s21, 2
        // Predicated region
        $region73: #{tpu_custom_call.1} parent=71 // pred_check
          %p1908 = pneg %p181
        $region74: #{tpu_custom_call.1} parent=71 // pred_check_branch
          %1910 = sbr.rel (%p1908) target = $region76
        $region75: #{tpu_custom_call.1} parent=71 // pred_region
          %s1911 = sand.u32 %s166, 1
          %s1912 = scalar_lea.sflag [#allocation4], %s1911
          %s1913 = sand.u32 %s166, 1
          %s1914 = smul.addr %s1913, 16
          %s1915 = scalar_lea.vmem [#allocation12], %s1914
          %1916 = dma.done %s1912, 256
        $region76: #{tpu_custom_call.1} parent=71 // pred_fallthru
          _
      $region72: #{tpu_custom_call.1} parent=5 // pred_fallthru
        _
    $region6: #{tpu_custom_call.1} parent=1 // loop_footer
      %s25 = sadd.s32 1, %s21
    $region7: #{tpu_custom_call.1} parent=1 // loop_footer_branch
      %20 = sbr.rel target = $region3
    $region8: #{tpu_custom_call.1} parent=1 // loop_exit
      _
    %1917 = vsyncpa [#allocation3], 1
    %s1918 = scalar_lea.sflag [#allocation3], 1
    %1919 = vsyncpa %s1918, 1
    %1920 = vsyncpa [#allocation7], 1
    %1921 = vsyncpa [#allocation11], 1
    %1922 = vsyncpa [#allocation4], 1
    %s1923 = scalar_lea.sflag [#allocation4], 1
    %1924 = vsyncpa %s1923, 1
    %1925 = vsyncpa [#allocation5], 1
    %s1926 = scalar_lea.sflag [#allocation5], 1
    %1927 = vsyncpa %s1926, 1

</llo_original>
